<compile_context>
chip_gen: v7x
topology: tpu7x:2x2x1
jax: 0.10.0
libtpu: 0.0.40
codegen_flags: <defaults>
</compile_context>

<pallas_src>
import jax
import jax.numpy as jnp
from jax.experimental import pallas as pl
from jax.experimental.pallas import tpu as pltpu

INPUT_SIZE = 784
HIDDEN_SIZE = 500
NUM_CLASSES = 10

HIDDEN_PAD = 512      # 4 * 128 -> lane-dense hidden dim (zero padded)
OUT_PAD = 128         # lane-dense output slab; real logits are [:, :NUM_CLASSES]
TILE_B = 512          # batch tile; keep n_tiles >= 2 for big batches on v7x


def mlp_kernel(x_ref, w1_ref, b1_ref, w2_ref, b2_ref, o_ref):
    # x arrives f32 from HBM; cast to bf16 in-kernel so both dot operands are
    # bf16 and the matmuls run at the native bf16 MXU rate (f32 accumulation).
    x = x_ref[...].astype(jnp.bfloat16)                        # (TILE_B, 784)
    h = jnp.dot(x, w1_ref[...], preferred_element_type=jnp.float32)
    h = jnp.maximum(h + b1_ref[...], 0.0)                      # f32 bias + ReLU (VPU)
    out = jnp.dot(h.astype(jnp.bfloat16), w2_ref[...],
                  preferred_element_type=jnp.float32)
    o_ref[...] = (out + b2_ref[...]).astype(o_ref.dtype)       # bf16 lane-dense store


def prepare_params(w1, b1, w2, b2):
    """One-time glue (hoisted out of the per-call path): transpose PyTorch
    (out,in) weights to (in,out), zero-pad to lane-dense shapes, cast weights
    to bf16. Biases stay f32."""
    w1_t = jnp.zeros((INPUT_SIZE, HIDDEN_PAD), jnp.bfloat16)
    w1_t = w1_t.at[:, :HIDDEN_SIZE].set(w1.T.astype(jnp.bfloat16))
    b1_p = jnp.zeros((1, HIDDEN_PAD), jnp.float32).at[0, :HIDDEN_SIZE].set(b1)
    w2_t = jnp.zeros((HIDDEN_PAD, OUT_PAD), jnp.bfloat16)
    w2_t = w2_t.at[:HIDDEN_SIZE, :NUM_CLASSES].set(w2.T.astype(jnp.bfloat16))
    b2_p = jnp.zeros((1, OUT_PAD), jnp.float32).at[0, :NUM_CLASSES].set(b2)
    return w1_t, b1_p, w2_t, b2_p


def neural_net_forward(x, params, tile_b=TILE_B):
    """x: [B, INPUT_SIZE] f32; params from prepare_params(). Returns [B, NUM_CLASSES] f32."""
    w1_t, b1_p, w2_t, b2_p = params
    B = x.shape[0]
    n_tiles = -(-B // tile_b)
    Bp = n_tiles * tile_b
    x_p = jnp.pad(x, ((0, Bp - B), (0, 0))) if Bp != B else x

    cost = pl.CostEstimate(
        flops=2 * Bp * INPUT_SIZE * HIDDEN_PAD + 2 * Bp * HIDDEN_PAD * OUT_PAD,
        transcendentals=0,
        bytes_accessed=(x_p.size * 4 + w1_t.size * 2 + w2_t.size * 2
                        + b1_p.size * 4 + b2_p.size * 4 + Bp * OUT_PAD * 2),
    )

    out = pl.pallas_call(
        mlp_kernel,
        out_shape=jax.ShapeDtypeStruct((Bp, OUT_PAD), jnp.bfloat16),
        grid_spec=pltpu.PrefetchScalarGridSpec(
            num_scalar_prefetch=0,
            grid=(n_tiles,),
            in_specs=[
                pl.BlockSpec((tile_b, INPUT_SIZE), lambda i: (i, 0)),      # x tile (pipelined)
                pl.BlockSpec((INPUT_SIZE, HIDDEN_PAD), lambda i: (0, 0)),  # w1 bf16 (VMEM-resident)
                pl.BlockSpec((1, HIDDEN_PAD), lambda i: (0, 0)),           # b1 f32
                pl.BlockSpec((HIDDEN_PAD, OUT_PAD), lambda i: (0, 0)),     # w2 bf16 (VMEM-resident)
                pl.BlockSpec((1, OUT_PAD), lambda i: (0, 0)),              # b2 f32
            ],
            out_specs=pl.BlockSpec((tile_b, OUT_PAD), lambda i: (i, 0)),   # bf16 lane-dense slab
        ),
        compiler_params=pltpu.CompilerParams(
            dimension_semantics=("parallel",),        # shard batch tiles across TCs (v7x)
            vmem_limit_bytes=32 * 1024 * 1024,
        ),
        cost_estimate=cost,
    )(x_p, w1_t, b1_p, w2_t, b2_p)

    return out[:B, :NUM_CLASSES].astype(jnp.float32)


if __name__ == "__main__":
    key = jax.random.PRNGKey(0)
    kx, k1, k2, k3, k4 = jax.random.split(key, 5)

    B = 8  # small batch (padded to one TILE_B tile inside the wrapper)
    x = jax.random.normal(kx, (B, INPUT_SIZE), dtype=jnp.float32)

    # PyTorch nn.Linear convention: weight (out_features, in_features), bias (out_features,)
    bound1 = 1.0 / jnp.sqrt(INPUT_SIZE)
    w1 = jax.random.uniform(k1, (HIDDEN_SIZE, INPUT_SIZE), jnp.float32, -bound1, bound1)
    b1 = jax.random.uniform(k2, (HIDDEN_SIZE,), jnp.float32, -bound1, bound1)
    bound2 = 1.0 / jnp.sqrt(HIDDEN_SIZE)
    w2 = jax.random.uniform(k3, (NUM_CLASSES, HIDDEN_SIZE), jnp.float32, -bound2, bound2)
    b2 = jax.random.uniform(k4, (NUM_CLASSES,), jnp.float32, -bound2, bound2)

    params = prepare_params(w1, b1, w2, b2)          # one-time transpose + pad + bf16 cast
    params = jax.block_until_ready(params)

    out = neural_net_forward(x, params)
    out = jax.block_until_ready(out)
    assert out.shape == (B, NUM_CLASSES)

    # Reference with the same bf16 quantization points as the kernel
    # (x, w1, h, w2 in bf16; f32 accumulation) -> checks the kernel math itself.
    hp = jax.lax.Precision.HIGHEST
    w1d = params[0].astype(jnp.float32)[:, :HIDDEN_SIZE]
    w2d = params[2].astype(jnp.float32)[:HIDDEN_SIZE, :NUM_CLASSES]
    xq = x.astype(jnp.bfloat16).astype(jnp.float32)
    h_ref = jnp.maximum(jnp.dot(xq, w1d, precision=hp) + b1, 0.0)
    hq = h_ref.astype(jnp.bfloat16).astype(jnp.float32)
    ref_bf = jnp.dot(hq, w2d, precision=hp) + b2
    assert jnp.allclose(out, ref_bf, atol=2e-2, rtol=2e-2)

    # Looser sanity check against the pure-f32 PyTorch-equivalent forward.
    h32 = jnp.maximum(jnp.dot(x, w1.T, precision=hp) + b1, 0.0)
    ref32 = jnp.dot(h32, w2.T, precision=hp) + b2
    assert jnp.allclose(out, ref32, atol=8e-2, rtol=8e-2)

    print("KERNEL_OK")
</pallas_src>

<mosaic_0001>
module attributes {stable_mosaic.version = 11 : i64} {
  func.func @mlp_kernel(%arg0: i32, %arg1: memref<512x784xf32, #tpu.memory_space<vmem>>, %arg2: memref<784x512xbf16, #tpu.memory_space<vmem>>, %arg3: memref<1x512xf32, #tpu.memory_space<vmem>>, %arg4: memref<512x128xbf16, #tpu.memory_space<vmem>>, %arg5: memref<1x128xf32, #tpu.memory_space<vmem>>, %arg6: memref<512x128xbf16, #tpu.memory_space<vmem>>) attributes {dimension_semantics = [#tpu.dimension_semantics<parallel>], iteration_bounds = array<i64: 1>, scalar_prefetch = 0 : i64, scratch_operands = 0 : i64, tpu.core_type = #tpu.core_type<tc>, window_params = [{transform_indices = @transform_0, window_bounds = array<i64: 512, 784>}, {pipeline_mode = #tpu.pipeline_mode<synchronous>, transform_indices = @transform_1, window_bounds = array<i64: 784, 512>}, {pipeline_mode = #tpu.pipeline_mode<synchronous>, transform_indices = @transform_2, window_bounds = array<i64: 1, 512>}, {pipeline_mode = #tpu.pipeline_mode<synchronous>, transform_indices = @transform_3, window_bounds = array<i64: 512, 128>}, {pipeline_mode = #tpu.pipeline_mode<synchronous>, transform_indices = @transform_4, window_bounds = array<i64: 1, 128>}, {transform_indices = @transform_5, window_bounds = array<i64: 512, 128>}]} {
    %c0 = arith.constant 0 : index
    %c0_0 = arith.constant 0 : index
    %0 = vector.load %arg1[%c0, %c0_0] : memref<512x784xf32, #tpu.memory_space<vmem>>, vector<512x784xf32>
    %1 = arith.truncf %0 : vector<512x784xf32> to vector<512x784xbf16>
    %c0_1 = arith.constant 0 : index
    %c0_2 = arith.constant 0 : index
    %2 = vector.load %arg2[%c0_1, %c0_2] : memref<784x512xbf16, #tpu.memory_space<vmem>>, vector<784x512xbf16>
    %cst = arith.constant dense<0.000000e+00> : vector<512x512xf32>
    %3 = tpu.matmul %1, %2, %cst {dimension_numbers = #tpu.dot_dimension_numbers<[1], [0], [0], [1], [0, 0, 1, 1], [], []>} : vector<512x784xbf16>, vector<784x512xbf16>, vector<512x512xf32> -> vector<512x512xf32>
    %c0_3 = arith.constant 0 : index
    %c0_4 = arith.constant 0 : index
    %4 = vector.load %arg3[%c0_3, %c0_4] : memref<1x512xf32, #tpu.memory_space<vmem>>, vector<1x512xf32>
    %5 = vector.broadcast %4 : vector<1x512xf32> to vector<512x512xf32>
    %6 = arith.addf %3, %5 : vector<512x512xf32>
    %cst_5 = arith.constant 0.000000e+00 : f32
    %7 = vector.broadcast %cst_5 : f32 to vector<512x512xf32>
    %8 = arith.maximumf %6, %7 : vector<512x512xf32>
    %9 = arith.truncf %8 : vector<512x512xf32> to vector<512x512xbf16>
    %c0_6 = arith.constant 0 : index
    %c0_7 = arith.constant 0 : index
    %10 = vector.load %arg4[%c0_6, %c0_7] : memref<512x128xbf16, #tpu.memory_space<vmem>>, vector<512x128xbf16>
    %cst_8 = arith.constant dense<0.000000e+00> : vector<512x128xf32>
    %11 = tpu.matmul %9, %10, %cst_8 {dimension_numbers = #tpu.dot_dimension_numbers<[1], [0], [0], [1], [0, 0, 1, 1], [], []>} : vector<512x512xbf16>, vector<512x128xbf16>, vector<512x128xf32> -> vector<512x128xf32>
    %c0_9 = arith.constant 0 : index
    %c0_10 = arith.constant 0 : index
    %12 = vector.load %arg5[%c0_9, %c0_10] : memref<1x128xf32, #tpu.memory_space<vmem>>, vector<1x128xf32>
    %13 = vector.broadcast %12 : vector<1x128xf32> to vector<512x128xf32>
    %14 = arith.addf %11, %13 : vector<512x128xf32>
    %15 = arith.truncf %14 : vector<512x128xf32> to vector<512x128xbf16>
    %c0_11 = arith.constant 0 : index
    %c0_12 = arith.constant 0 : index
    %16 = vector.load %arg6[%c0_11, %c0_12] : memref<512x128xbf16, #tpu.memory_space<vmem>>, vector<512x128xbf16>
    tpu.vector_store %arg6[%c0_11, %c0_12], %15 {strides = array<i32>} : memref<512x128xbf16, #tpu.memory_space<vmem>>, vector<512x128xbf16>,
    return
  }
  func.func @transform_0(%arg0: i32) -> (i32, i32) {
    %c0_i32 = arith.constant 0 : i32
    %c0_i32_0 = arith.constant 0 : i32
    return %arg0, %c0_i32 : i32, i32
  }
  func.func @transform_1(%arg0: i32) -> (i32, i32) {
    %c0_i32 = arith.constant 0 : i32
    %c0_i32_0 = arith.constant 0 : i32
    %c0_i32_1 = arith.constant 0 : i32
    return %c0_i32, %c0_i32_0 : i32, i32
  }
  func.func @transform_2(%arg0: i32) -> (i32, i32) {
    %c0_i32 = arith.constant 0 : i32
    %c0_i32_0 = arith.constant 0 : i32
    %c0_i32_1 = arith.constant 0 : i32
    return %c0_i32, %c0_i32_0 : i32, i32
  }
  func.func @transform_3(%arg0: i32) -> (i32, i32) {
    %c0_i32 = arith.constant 0 : i32
    %c0_i32_0 = arith.constant 0 : i32
    %c0_i32_1 = arith.constant 0 : i32
    return %c0_i32, %c0_i32_0 : i32, i32
  }
  func.func @transform_4(%arg0: i32) -> (i32, i32) {
    %c0_i32 = arith.constant 0 : i32
    %c0_i32_0 = arith.constant 0 : i32
    %c0_i32_1 = arith.constant 0 : i32
    return %c0_i32, %c0_i32_0 : i32, i32
  }
  func.func @transform_5(%arg0: i32) -> (i32, i32) {
    %c0_i32 = arith.constant 0 : i32
    %c0_i32_0 = arith.constant 0 : i32
    return %arg0, %c0_i32 : i32, i32
  }
}

</mosaic_0001>

<llo_original>
// kernel: tpu_custom_call.1
$region0: #{tpu_custom_call.1}
  #allocation0 [shape = 'u32[]', space=smem, size = 0x4, offset = 0x4, fixed_abs, tag = 'smem constant byte address 0x4 - core index']
  #allocation1 [shape = 'u32[144,128]{1,0:T(1,128)}', space=vmem, size = 0x12000, scoped, tag = 'internal scratch']
  %s0 = inlined_call_operand.vmem [shape: f32[512,784], index: 0, kind: input, shape index: {}]
  %s1 = inlined_call_operand.vmem [shape: bf16[784,512], index: 1, kind: input, shape index: {}]
  %s2 = inlined_call_operand.vmem [shape: f32[1,512], index: 2, kind: input, shape index: {}]
  %s3 = inlined_call_operand.vmem [shape: bf16[512,128], index: 3, kind: input, shape index: {}]
  %s4 = inlined_call_operand.vmem [shape: f32[1,128], index: 4, kind: input, shape index: {}]
  %s5 = inlined_call_operand.hbm [shape: bf16[512,128], index: 5, kind: output, shape index: {}]
  %s6 = sld [smem:[#allocation0]]
  $region30: #{tpu_custom_call.1} parent=0
    _
  %s8 = ssub.s32 1, %s6
  %s9 = scalar_select 0, %s8, %s6
  $region1: #{tpu_custom_call.1} parent=0
    #allocation2 [shape = 'u8[131072]{0}', space=vmem, size = 0x20000, scoped, tag = 'output window, operand 0, single buffered']
    #allocation3 [shape = 's32[1]{0}', space=sflag, size = 0x4, scoped, tag = 'scoped memory for tpu_custom_call.1']
    %10 = vsyncpa [#allocation3], 0
    // Predicated region
    $region2: #{tpu_custom_call.1} parent=1 // pred_check
      _
    $region3: #{tpu_custom_call.1} parent=1 // pred_check_branch
      %12 = sbr.rel (0) target = $region5
    $region4: #{tpu_custom_call.1} parent=1 // pred_region
      _
    $region5: #{tpu_custom_call.1} parent=1 // pred_fallthru
      _
    // Predicated region
    $region6: #{tpu_custom_call.1} parent=1 // pred_check
      _
    $region7: #{tpu_custom_call.1} parent=1 // pred_check_branch
      %14 = sbr.rel (0) target = $region9
    $region8: #{tpu_custom_call.1} parent=1 // pred_region
      _
    $region9: #{tpu_custom_call.1} parent=1 // pred_fallthru
      _
    // Predicated region
    $region10: #{tpu_custom_call.1} parent=1 // pred_check
      _
    $region11: #{tpu_custom_call.1} parent=1 // pred_check_branch
      %16 = sbr.rel (0) target = $region13
    $region12: #{tpu_custom_call.1} parent=1 // pred_region
      _
    $region13: #{tpu_custom_call.1} parent=1 // pred_fallthru
      _
    // Predicated region
    $region14: #{tpu_custom_call.1} parent=1 // pred_check
      _
    $region15: #{tpu_custom_call.1} parent=1 // pred_check_branch
      %18 = sbr.rel (0) target = $region17
    $region16: #{tpu_custom_call.1} parent=1 // pred_region
      _
    $region17: #{tpu_custom_call.1} parent=1 // pred_fallthru
      _
    // Predicated region
    $region18: #{tpu_custom_call.1} parent=1 // pred_check
      _
    $region19: #{tpu_custom_call.1} parent=1 // pred_check_branch
      %20 = sbr.rel (0) target = $region21
    $region20: #{tpu_custom_call.1} parent=1 // pred_region
      _
    $region21: #{tpu_custom_call.1} parent=1 // pred_fallthru
      _
    %v22 = vld [vmem:[%s0] sm:$0xff]
    %v23 = vld [vmem:[%s0 + $0x8] sm:$0xff]
    %v24 = vld [vmem:[%s0 + $0x10] sm:$0xff]
    %v25 = vld [vmem:[%s0 + $0x18] sm:$0xff]
    %v26 = vld [vmem:[%s0 + $0x20] sm:$0xff]
    %v27 = vld [vmem:[%s0 + $0x28] sm:$0xff]
    %v28 = vld [vmem:[%s0 + $0x30] sm:$0xff]
    %v29 = vld [vmem:[%s0 + $0x38] sm:$0xff]
    %v30 = vld [vmem:[%s0 + $0x40] sm:$0xff]
    %v31 = vld [vmem:[%s0 + $0x48] sm:$0xff]
    %v32 = vld [vmem:[%s0 + $0x50] sm:$0xff]
    %v33 = vld [vmem:[%s0 + $0x58] sm:$0xff]
    %v34 = vld [vmem:[%s0 + $0x60] sm:$0xff]
    %v35 = vld [vmem:[%s0 + $0x68] sm:$0xff]
    %v36 = vld [vmem:[%s0 + $0x70] sm:$0xff]
    %v37 = vld [vmem:[%s0 + $0x78] sm:$0xff]
    %v38 = vld [vmem:[%s0 + $0x80] sm:$0xff]
    %v39 = vld [vmem:[%s0 + $0x88] sm:$0xff]
    %v40 = vld [vmem:[%s0 + $0x90] sm:$0xff]
    %v41 = vld [vmem:[%s0 + $0x98] sm:$0xff]
    %v42 = vld [vmem:[%s0 + $0xa0] sm:$0xff]
    %v43 = vld [vmem:[%s0 + $0xa8] sm:$0xff]
    %v44 = vld [vmem:[%s0 + $0xb0] sm:$0xff]
    %v45 = vld [vmem:[%s0 + $0xb8] sm:$0xff]
    %v46 = vld [vmem:[%s0 + $0xc0] sm:$0xff]
    %v47 = vld [vmem:[%s0 + $0xc8] sm:$0xff]
    %v48 = vld [vmem:[%s0 + $0xd0] sm:$0xff]
    %v49 = vld [vmem:[%s0 + $0xd8] sm:$0xff]
    %v50 = vld [vmem:[%s0 + $0xe0] sm:$0xff]
    %v51 = vld [vmem:[%s0 + $0xe8] sm:$0xff]
    %v52 = vld [vmem:[%s0 + $0xf0] sm:$0xff]
    %v53 = vld [vmem:[%s0 + $0xf8] sm:$0xff]
    %v54 = vld [vmem:[%s0 + $0x100] sm:$0xff]
    %v55 = vld [vmem:[%s0 + $0x108] sm:$0xff]
    %v56 = vld [vmem:[%s0 + $0x110] sm:$0xff]
    %v57 = vld [vmem:[%s0 + $0x118] sm:$0xff]
    %v58 = vld [vmem:[%s0 + $0x120] sm:$0xff]
    %v59 = vld [vmem:[%s0 + $0x128] sm:$0xff]
    %v60 = vld [vmem:[%s0 + $0x130] sm:$0xff]
    %v61 = vld [vmem:[%s0 + $0x138] sm:$0xff]
    %v62 = vld [vmem:[%s0 + $0x140] sm:$0xff]
    %v63 = vld [vmem:[%s0 + $0x148] sm:$0xff]
    %v64 = vld [vmem:[%s0 + $0x150] sm:$0xff]
    %v65 = vld [vmem:[%s0 + $0x158] sm:$0xff]
    %v66 = vld [vmem:[%s0 + $0x160] sm:$0xff]
    %v67 = vld [vmem:[%s0 + $0x168] sm:$0xff]
    %v68 = vld [vmem:[%s0 + $0x170] sm:$0xff]
    %v69 = vld [vmem:[%s0 + $0x178] sm:$0xff]
    %v70 = vld [vmem:[%s0 + $0x180] sm:$0xff]
    %v71 = vld [vmem:[%s0 + $0x188] sm:$0xff]
    %v72 = vld [vmem:[%s0 + $0x190] sm:$0xff]
    %v73 = vld [vmem:[%s0 + $0x198] sm:$0xff]
    %v74 = vld [vmem:[%s0 + $0x1a0] sm:$0xff]
    %v75 = vld [vmem:[%s0 + $0x1a8] sm:$0xff]
    %v76 = vld [vmem:[%s0 + $0x1b0] sm:$0xff]
    %v77 = vld [vmem:[%s0 + $0x1b8] sm:$0xff]
    %v78 = vld [vmem:[%s0 + $0x1c0] sm:$0xff]
    %v79 = vld [vmem:[%s0 + $0x1c8] sm:$0xff]
    %v80 = vld [vmem:[%s0 + $0x1d0] sm:$0xff]
    %v81 = vld [vmem:[%s0 + $0x1d8] sm:$0xff]
    %v82 = vld [vmem:[%s0 + $0x1e0] sm:$0xff]
    %v83 = vld [vmem:[%s0 + $0x1e8] sm:$0xff]
    %v84 = vld [vmem:[%s0 + $0x1f0] sm:$0xff]
    %v85 = vld [vmem:[%s0 + $0x1f8] sm:$0xff]
    %v86 = vld [vmem:[%s0 + $0x200] sm:$0xff]
    %v87 = vld [vmem:[%s0 + $0x208] sm:$0xff]
    %v88 = vld [vmem:[%s0 + $0x210] sm:$0xff]
    %v89 = vld [vmem:[%s0 + $0x218] sm:$0xff]
    %v90 = vld [vmem:[%s0 + $0x220] sm:$0xff]
    %v91 = vld [vmem:[%s0 + $0x228] sm:$0xff]
    %v92 = vld [vmem:[%s0 + $0x230] sm:$0xff]
    %v93 = vld [vmem:[%s0 + $0x238] sm:$0xff]
    %v94 = vld [vmem:[%s0 + $0x240] sm:$0xff]
    %v95 = vld [vmem:[%s0 + $0x248] sm:$0xff]
    %v96 = vld [vmem:[%s0 + $0x250] sm:$0xff]
    %v97 = vld [vmem:[%s0 + $0x258] sm:$0xff]
    %v98 = vld [vmem:[%s0 + $0x260] sm:$0xff]
    %v99 = vld [vmem:[%s0 + $0x268] sm:$0xff]
    %v100 = vld [vmem:[%s0 + $0x270] sm:$0xff]
    %v101 = vld [vmem:[%s0 + $0x278] sm:$0xff]
    %v102 = vld [vmem:[%s0 + $0x280] sm:$0xff]
    %v103 = vld [vmem:[%s0 + $0x288] sm:$0xff]
    %v104 = vld [vmem:[%s0 + $0x290] sm:$0xff]
    %v105 = vld [vmem:[%s0 + $0x298] sm:$0xff]
    %v106 = vld [vmem:[%s0 + $0x2a0] sm:$0xff]
    %v107 = vld [vmem:[%s0 + $0x2a8] sm:$0xff]
    %v108 = vld [vmem:[%s0 + $0x2b0] sm:$0xff]
    %v109 = vld [vmem:[%s0 + $0x2b8] sm:$0xff]
    %v110 = vld [vmem:[%s0 + $0x2c0] sm:$0xff]
    %v111 = vld [vmem:[%s0 + $0x2c8] sm:$0xff]
    %v112 = vld [vmem:[%s0 + $0x2d0] sm:$0xff]
    %v113 = vld [vmem:[%s0 + $0x2d8] sm:$0xff]
    %v114 = vld [vmem:[%s0 + $0x2e0] sm:$0xff]
    %v115 = vld [vmem:[%s0 + $0x2e8] sm:$0xff]
    %v116 = vld [vmem:[%s0 + $0x2f0] sm:$0xff]
    %v117 = vld [vmem:[%s0 + $0x2f8] sm:$0xff]
    %v118 = vld [vmem:[%s0 + $0x300] sm:$0xff]
    %v119 = vld [vmem:[%s0 + $0x308] sm:$0xff]
    %v120 = vld [vmem:[%s0 + $0x310] sm:$0xff]
    %v121 = vld [vmem:[%s0 + $0x318] sm:$0xff]
    %v122 = vld [vmem:[%s0 + $0x320] sm:$0xff]
    %v123 = vld [vmem:[%s0 + $0x328] sm:$0xff]
    %v124 = vld [vmem:[%s0 + $0x330] sm:$0xff]
    %v125 = vld [vmem:[%s0 + $0x338] sm:$0xff]
    %v126 = vld [vmem:[%s0 + $0x340] sm:$0xff]
    %v127 = vld [vmem:[%s0 + $0x348] sm:$0xff]
    %v128 = vld [vmem:[%s0 + $0x350] sm:$0xff]
    %v129 = vld [vmem:[%s0 + $0x358] sm:$0xff]
    %v130 = vld [vmem:[%s0 + $0x360] sm:$0xff]
    %v131 = vld [vmem:[%s0 + $0x368] sm:$0xff]
    %v132 = vld [vmem:[%s0 + $0x370] sm:$0xff]
    %v133 = vld [vmem:[%s0 + $0x378] sm:$0xff]
    %v134 = vld [vmem:[%s0 + $0x380] sm:$0xff]
    %v135 = vld [vmem:[%s0 + $0x388] sm:$0xff]
    %v136 = vld [vmem:[%s0 + $0x390] sm:$0xff]
    %v137 = vld [vmem:[%s0 + $0x398] sm:$0xff]
    %v138 = vld [vmem:[%s0 + $0x3a0] sm:$0xff]
    %v139 = vld [vmem:[%s0 + $0x3a8] sm:$0xff]
    %v140 = vld [vmem:[%s0 + $0x3b0] sm:$0xff]
    %v141 = vld [vmem:[%s0 + $0x3b8] sm:$0xff]
    %v142 = vld [vmem:[%s0 + $0x3c0] sm:$0xff]
    %v143 = vld [vmem:[%s0 + $0x3c8] sm:$0xff]
    %v144 = vld [vmem:[%s0 + $0x3d0] sm:$0xff]
    %v145 = vld [vmem:[%s0 + $0x3d8] sm:$0xff]
    %v146 = vld [vmem:[%s0 + $0x3e0] sm:$0xff]
    %v147 = vld [vmem:[%s0 + $0x3e8] sm:$0xff]
    %v148 = vld [vmem:[%s0 + $0x3f0] sm:$0xff]
    %v149 = vld [vmem:[%s0 + $0x3f8] sm:$0xff]
    %v150 = vld [vmem:[%s0 + $0x400] sm:$0xff]
    %v151 = vld [vmem:[%s0 + $0x408] sm:$0xff]
    %v152 = vld [vmem:[%s0 + $0x410] sm:$0xff]
    %v153 = vld [vmem:[%s0 + $0x418] sm:$0xff]
    %v154 = vld [vmem:[%s0 + $0x420] sm:$0xff]
    %v155 = vld [vmem:[%s0 + $0x428] sm:$0xff]
    %v156 = vld [vmem:[%s0 + $0x430] sm:$0xff]
    %v157 = vld [vmem:[%s0 + $0x438] sm:$0xff]
    %v158 = vld [vmem:[%s0 + $0x440] sm:$0xff]
    %v159 = vld [vmem:[%s0 + $0x448] sm:$0xff]
    %v160 = vld [vmem:[%s0 + $0x450] sm:$0xff]
    %v161 = vld [vmem:[%s0 + $0x458] sm:$0xff]
    %v162 = vld [vmem:[%s0 + $0x460] sm:$0xff]
    %v163 = vld [vmem:[%s0 + $0x468] sm:$0xff]
    %v164 = vld [vmem:[%s0 + $0x470] sm:$0xff]
    %v165 = vld [vmem:[%s0 + $0x478] sm:$0xff]
    %v166 = vld [vmem:[%s0 + $0x480] sm:$0xff]
    %v167 = vld [vmem:[%s0 + $0x488] sm:$0xff]
    %v168 = vld [vmem:[%s0 + $0x490] sm:$0xff]
    %v169 = vld [vmem:[%s0 + $0x498] sm:$0xff]
    %v170 = vld [vmem:[%s0 + $0x4a0] sm:$0xff]
    %v171 = vld [vmem:[%s0 + $0x4a8] sm:$0xff]
    %v172 = vld [vmem:[%s0 + $0x4b0] sm:$0xff]
    %v173 = vld [vmem:[%s0 + $0x4b8] sm:$0xff]
    %v174 = vld [vmem:[%s0 + $0x4c0] sm:$0xff]
    %v175 = vld [vmem:[%s0 + $0x4c8] sm:$0xff]
    %v176 = vld [vmem:[%s0 + $0x4d0] sm:$0xff]
    %v177 = vld [vmem:[%s0 + $0x4d8] sm:$0xff]
    %v178 = vld [vmem:[%s0 + $0x4e0] sm:$0xff]
    %v179 = vld [vmem:[%s0 + $0x4e8] sm:$0xff]
    %v180 = vld [vmem:[%s0 + $0x4f0] sm:$0xff]
    %v181 = vld [vmem:[%s0 + $0x4f8] sm:$0xff]
    %v182 = vld [vmem:[%s0 + $0x500] sm:$0xff]
    %v183 = vld [vmem:[%s0 + $0x508] sm:$0xff]
    %v184 = vld [vmem:[%s0 + $0x510] sm:$0xff]
    %v185 = vld [vmem:[%s0 + $0x518] sm:$0xff]
    %v186 = vld [vmem:[%s0 + $0x520] sm:$0xff]
    %v187 = vld [vmem:[%s0 + $0x528] sm:$0xff]
    %v188 = vld [vmem:[%s0 + $0x530] sm:$0xff]
    %v189 = vld [vmem:[%s0 + $0x538] sm:$0xff]
    %v190 = vld [vmem:[%s0 + $0x540] sm:$0xff]
    %v191 = vld [vmem:[%s0 + $0x548] sm:$0xff]
    %v192 = vld [vmem:[%s0 + $0x550] sm:$0xff]
    %v193 = vld [vmem:[%s0 + $0x558] sm:$0xff]
    %v194 = vld [vmem:[%s0 + $0x560] sm:$0xff]
    %v195 = vld [vmem:[%s0 + $0x568] sm:$0xff]
    %v196 = vld [vmem:[%s0 + $0x570] sm:$0xff]
    %v197 = vld [vmem:[%s0 + $0x578] sm:$0xff]
    %v198 = vld [vmem:[%s0 + $0x580] sm:$0xff]
    %v199 = vld [vmem:[%s0 + $0x588] sm:$0xff]
    %v200 = vld [vmem:[%s0 + $0x590] sm:$0xff]
    %v201 = vld [vmem:[%s0 + $0x598] sm:$0xff]
    %v202 = vld [vmem:[%s0 + $0x5a0] sm:$0xff]
    %v203 = vld [vmem:[%s0 + $0x5a8] sm:$0xff]
    %v204 = vld [vmem:[%s0 + $0x5b0] sm:$0xff]
    %v205 = vld [vmem:[%s0 + $0x5b8] sm:$0xff]
    %v206 = vld [vmem:[%s0 + $0x5c0] sm:$0xff]
    %v207 = vld [vmem:[%s0 + $0x5c8] sm:$0xff]
    %v208 = vld [vmem:[%s0 + $0x5d0] sm:$0xff]
    %v209 = vld [vmem:[%s0 + $0x5d8] sm:$0xff]
    %v210 = vld [vmem:[%s0 + $0x5e0] sm:$0xff]
    %v211 = vld [vmem:[%s0 + $0x5e8] sm:$0xff]
    %v212 = vld [vmem:[%s0 + $0x5f0] sm:$0xff]
    %v213 = vld [vmem:[%s0 + $0x5f8] sm:$0xff]
    %v214 = vld [vmem:[%s0 + $0x600] sm:$0xff]
    %v215 = vld [vmem:[%s0 + $0x608] sm:$0xff]
    %v216 = vld [vmem:[%s0 + $0x610] sm:$0xff]
    %v217 = vld [vmem:[%s0 + $0x618] sm:$0xff]
    %v218 = vld [vmem:[%s0 + $0x620] sm:$0xff]
    %v219 = vld [vmem:[%s0 + $0x628] sm:$0xff]
    %v220 = vld [vmem:[%s0 + $0x630] sm:$0xff]
    %v221 = vld [vmem:[%s0 + $0x638] sm:$0xff]
    %v222 = vld [vmem:[%s0 + $0x640] sm:$0xff]
    %v223 = vld [vmem:[%s0 + $0x648] sm:$0xff]
    %v224 = vld [vmem:[%s0 + $0x650] sm:$0xff]
    %v225 = vld [vmem:[%s0 + $0x658] sm:$0xff]
    %v226 = vld [vmem:[%s0 + $0x660] sm:$0xff]
    %v227 = vld [vmem:[%s0 + $0x668] sm:$0xff]
    %v228 = vld [vmem:[%s0 + $0x670] sm:$0xff]
    %v229 = vld [vmem:[%s0 + $0x678] sm:$0xff]
    %v230 = vld [vmem:[%s0 + $0x680] sm:$0xff]
    %v231 = vld [vmem:[%s0 + $0x688] sm:$0xff]
    %v232 = vld [vmem:[%s0 + $0x690] sm:$0xff]
    %v233 = vld [vmem:[%s0 + $0x698] sm:$0xff]
    %v234 = vld [vmem:[%s0 + $0x6a0] sm:$0xff]
    %v235 = vld [vmem:[%s0 + $0x6a8] sm:$0xff]
    %v236 = vld [vmem:[%s0 + $0x6b0] sm:$0xff]
    %v237 = vld [vmem:[%s0 + $0x6b8] sm:$0xff]
    %v238 = vld [vmem:[%s0 + $0x6c0] sm:$0xff]
    %v239 = vld [vmem:[%s0 + $0x6c8] sm:$0xff]
    %v240 = vld [vmem:[%s0 + $0x6d0] sm:$0xff]
    %v241 = vld [vmem:[%s0 + $0x6d8] sm:$0xff]
    %v242 = vld [vmem:[%s0 + $0x6e0] sm:$0xff]
    %v243 = vld [vmem:[%s0 + $0x6e8] sm:$0xff]
    %v244 = vld [vmem:[%s0 + $0x6f0] sm:$0xff]
    %v245 = vld [vmem:[%s0 + $0x6f8] sm:$0xff]
    %v246 = vld [vmem:[%s0 + $0x700] sm:$0xff]
    %v247 = vld [vmem:[%s0 + $0x708] sm:$0xff]
    %v248 = vld [vmem:[%s0 + $0x710] sm:$0xff]
    %v249 = vld [vmem:[%s0 + $0x718] sm:$0xff]
    %v250 = vld [vmem:[%s0 + $0x720] sm:$0xff]
    %v251 = vld [vmem:[%s0 + $0x728] sm:$0xff]
    %v252 = vld [vmem:[%s0 + $0x730] sm:$0xff]
    %v253 = vld [vmem:[%s0 + $0x738] sm:$0xff]
    %v254 = vld [vmem:[%s0 + $0x740] sm:$0xff]
    %v255 = vld [vmem:[%s0 + $0x748] sm:$0xff]
    %v256 = vld [vmem:[%s0 + $0x750] sm:$0xff]
    %v257 = vld [vmem:[%s0 + $0x758] sm:$0xff]
    %v258 = vld [vmem:[%s0 + $0x760] sm:$0xff]
    %v259 = vld [vmem:[%s0 + $0x768] sm:$0xff]
    %v260 = vld [vmem:[%s0 + $0x770] sm:$0xff]
    %v261 = vld [vmem:[%s0 + $0x778] sm:$0xff]
    %v262 = vld [vmem:[%s0 + $0x780] sm:$0xff]
    %v263 = vld [vmem:[%s0 + $0x788] sm:$0xff]
    %v264 = vld [vmem:[%s0 + $0x790] sm:$0xff]
    %v265 = vld [vmem:[%s0 + $0x798] sm:$0xff]
    %v266 = vld [vmem:[%s0 + $0x7a0] sm:$0xff]
    %v267 = vld [vmem:[%s0 + $0x7a8] sm:$0xff]
    %v268 = vld [vmem:[%s0 + $0x7b0] sm:$0xff]
    %v269 = vld [vmem:[%s0 + $0x7b8] sm:$0xff]
    %v270 = vld [vmem:[%s0 + $0x7c0] sm:$0xff]
    %v271 = vld [vmem:[%s0 + $0x7c8] sm:$0xff]
    %v272 = vld [vmem:[%s0 + $0x7d0] sm:$0xff]
    %v273 = vld [vmem:[%s0 + $0x7d8] sm:$0xff]
    %v274 = vld [vmem:[%s0 + $0x7e0] sm:$0xff]
    %v275 = vld [vmem:[%s0 + $0x7e8] sm:$0xff]
    %v276 = vld [vmem:[%s0 + $0x7f0] sm:$0xff]
    %v277 = vld [vmem:[%s0 + $0x7f8] sm:$0xff]
    %v278 = vld [vmem:[%s0 + $0x800] sm:$0xff]
    %v279 = vld [vmem:[%s0 + $0x808] sm:$0xff]
    %v280 = vld [vmem:[%s0 + $0x810] sm:$0xff]
    %v281 = vld [vmem:[%s0 + $0x818] sm:$0xff]
    %v282 = vld [vmem:[%s0 + $0x820] sm:$0xff]
    %v283 = vld [vmem:[%s0 + $0x828] sm:$0xff]
    %v284 = vld [vmem:[%s0 + $0x830] sm:$0xff]
    %v285 = vld [vmem:[%s0 + $0x838] sm:$0xff]
    %v286 = vld [vmem:[%s0 + $0x840] sm:$0xff]
    %v287 = vld [vmem:[%s0 + $0x848] sm:$0xff]
    %v288 = vld [vmem:[%s0 + $0x850] sm:$0xff]
    %v289 = vld [vmem:[%s0 + $0x858] sm:$0xff]
    %v290 = vld [vmem:[%s0 + $0x860] sm:$0xff]
    %v291 = vld [vmem:[%s0 + $0x868] sm:$0xff]
    %v292 = vld [vmem:[%s0 + $0x870] sm:$0xff]
    %v293 = vld [vmem:[%s0 + $0x878] sm:$0xff]
    %v294 = vld [vmem:[%s0 + $0x880] sm:$0xff]
    %v295 = vld [vmem:[%s0 + $0x888] sm:$0xff]
    %v296 = vld [vmem:[%s0 + $0x890] sm:$0xff]
    %v297 = vld [vmem:[%s0 + $0x898] sm:$0xff]
    %v298 = vld [vmem:[%s0 + $0x8a0] sm:$0xff]
    %v299 = vld [vmem:[%s0 + $0x8a8] sm:$0xff]
    %v300 = vld [vmem:[%s0 + $0x8b0] sm:$0xff]
    %v301 = vld [vmem:[%s0 + $0x8b8] sm:$0xff]
    %v302 = vld [vmem:[%s0 + $0x8c0] sm:$0xff]
    %v303 = vld [vmem:[%s0 + $0x8c8] sm:$0xff]
    %v304 = vld [vmem:[%s0 + $0x8d0] sm:$0xff]
    %v305 = vld [vmem:[%s0 + $0x8d8] sm:$0xff]
    %v306 = vld [vmem:[%s0 + $0x8e0] sm:$0xff]
    %v307 = vld [vmem:[%s0 + $0x8e8] sm:$0xff]
    %v308 = vld [vmem:[%s0 + $0x8f0] sm:$0xff]
    %v309 = vld [vmem:[%s0 + $0x8f8] sm:$0xff]
    %v310 = vld [vmem:[%s0 + $0x900] sm:$0xff]
    %v311 = vld [vmem:[%s0 + $0x908] sm:$0xff]
    %v312 = vld [vmem:[%s0 + $0x910] sm:$0xff]
    %v313 = vld [vmem:[%s0 + $0x918] sm:$0xff]
    %v314 = vld [vmem:[%s0 + $0x920] sm:$0xff]
    %v315 = vld [vmem:[%s0 + $0x928] sm:$0xff]
    %v316 = vld [vmem:[%s0 + $0x930] sm:$0xff]
    %v317 = vld [vmem:[%s0 + $0x938] sm:$0xff]
    %v318 = vld [vmem:[%s0 + $0x940] sm:$0xff]
    %v319 = vld [vmem:[%s0 + $0x948] sm:$0xff]
    %v320 = vld [vmem:[%s0 + $0x950] sm:$0xff]
    %v321 = vld [vmem:[%s0 + $0x958] sm:$0xff]
    %v322 = vld [vmem:[%s0 + $0x960] sm:$0xff]
    %v323 = vld [vmem:[%s0 + $0x968] sm:$0xff]
    %v324 = vld [vmem:[%s0 + $0x970] sm:$0xff]
    %v325 = vld [vmem:[%s0 + $0x978] sm:$0xff]
    %v326 = vld [vmem:[%s0 + $0x980] sm:$0xff]
    %v327 = vld [vmem:[%s0 + $0x988] sm:$0xff]
    %v328 = vld [vmem:[%s0 + $0x990] sm:$0xff]
    %v329 = vld [vmem:[%s0 + $0x998] sm:$0xff]
    %v330 = vld [vmem:[%s0 + $0x9a0] sm:$0xff]
    %v331 = vld [vmem:[%s0 + $0x9a8] sm:$0xff]
    %v332 = vld [vmem:[%s0 + $0x9b0] sm:$0xff]
    %v333 = vld [vmem:[%s0 + $0x9b8] sm:$0xff]
    %v334 = vld [vmem:[%s0 + $0x9c0] sm:$0xff]
    %v335 = vld [vmem:[%s0 + $0x9c8] sm:$0xff]
    %v336 = vld [vmem:[%s0 + $0x9d0] sm:$0xff]
    %v337 = vld [vmem:[%s0 + $0x9d8] sm:$0xff]
    %v338 = vld [vmem:[%s0 + $0x9e0] sm:$0xff]
    %v339 = vld [vmem:[%s0 + $0x9e8] sm:$0xff]
    %v340 = vld [vmem:[%s0 + $0x9f0] sm:$0xff]
    %v341 = vld [vmem:[%s0 + $0x9f8] sm:$0xff]
    %v342 = vld [vmem:[%s0 + $0xa00] sm:$0xff]
    %v343 = vld [vmem:[%s0 + $0xa08] sm:$0xff]
    %v344 = vld [vmem:[%s0 + $0xa10] sm:$0xff]
    %v345 = vld [vmem:[%s0 + $0xa18] sm:$0xff]
    %v346 = vld [vmem:[%s0 + $0xa20] sm:$0xff]
    %v347 = vld [vmem:[%s0 + $0xa28] sm:$0xff]
    %v348 = vld [vmem:[%s0 + $0xa30] sm:$0xff]
    %v349 = vld [vmem:[%s0 + $0xa38] sm:$0xff]
    %v350 = vld [vmem:[%s0 + $0xa40] sm:$0xff]
    %v351 = vld [vmem:[%s0 + $0xa48] sm:$0xff]
    %v352 = vld [vmem:[%s0 + $0xa50] sm:$0xff]
    %v353 = vld [vmem:[%s0 + $0xa58] sm:$0xff]
    %v354 = vld [vmem:[%s0 + $0xa60] sm:$0xff]
    %v355 = vld [vmem:[%s0 + $0xa68] sm:$0xff]
    %v356 = vld [vmem:[%s0 + $0xa70] sm:$0xff]
    %v357 = vld [vmem:[%s0 + $0xa78] sm:$0xff]
    %v358 = vld [vmem:[%s0 + $0xa80] sm:$0xff]
    %v359 = vld [vmem:[%s0 + $0xa88] sm:$0xff]
    %v360 = vld [vmem:[%s0 + $0xa90] sm:$0xff]
    %v361 = vld [vmem:[%s0 + $0xa98] sm:$0xff]
    %v362 = vld [vmem:[%s0 + $0xaa0] sm:$0xff]
    %v363 = vld [vmem:[%s0 + $0xaa8] sm:$0xff]
    %v364 = vld [vmem:[%s0 + $0xab0] sm:$0xff]
    %v365 = vld [vmem:[%s0 + $0xab8] sm:$0xff]
    %v366 = vld [vmem:[%s0 + $0xac0] sm:$0xff]
    %v367 = vld [vmem:[%s0 + $0xac8] sm:$0xff]
    %v368 = vld [vmem:[%s0 + $0xad0] sm:$0xff]
    %v369 = vld [vmem:[%s0 + $0xad8] sm:$0xff]
    %v370 = vld [vmem:[%s0 + $0xae0] sm:$0xff]
    %v371 = vld [vmem:[%s0 + $0xae8] sm:$0xff]
    %v372 = vld [vmem:[%s0 + $0xaf0] sm:$0xff]
    %v373 = vld [vmem:[%s0 + $0xaf8] sm:$0xff]
    %v374 = vld [vmem:[%s0 + $0xb00] sm:$0xff]
    %v375 = vld [vmem:[%s0 + $0xb08] sm:$0xff]
    %v376 = vld [vmem:[%s0 + $0xb10] sm:$0xff]
    %v377 = vld [vmem:[%s0 + $0xb18] sm:$0xff]
    %v378 = vld [vmem:[%s0 + $0xb20] sm:$0xff]
    %v379 = vld [vmem:[%s0 + $0xb28] sm:$0xff]
    %v380 = vld [vmem:[%s0 + $0xb30] sm:$0xff]
    %v381 = vld [vmem:[%s0 + $0xb38] sm:$0xff]
    %v382 = vld [vmem:[%s0 + $0xb40] sm:$0xff]
    %v383 = vld [vmem:[%s0 + $0xb48] sm:$0xff]
    %v384 = vld [vmem:[%s0 + $0xb50] sm:$0xff]
    %v385 = vld [vmem:[%s0 + $0xb58] sm:$0xff]
    %v386 = vld [vmem:[%s0 + $0xb60] sm:$0xff]
    %v387 = vld [vmem:[%s0 + $0xb68] sm:$0xff]
    %v388 = vld [vmem:[%s0 + $0xb70] sm:$0xff]
    %v389 = vld [vmem:[%s0 + $0xb78] sm:$0xff]
    %v390 = vld [vmem:[%s0 + $0xb80] sm:$0xff]
    %v391 = vld [vmem:[%s0 + $0xb88] sm:$0xff]
    %v392 = vld [vmem:[%s0 + $0xb90] sm:$0xff]
    %v393 = vld [vmem:[%s0 + $0xb98] sm:$0xff]
    %v394 = vld [vmem:[%s0 + $0xba0] sm:$0xff]
    %v395 = vld [vmem:[%s0 + $0xba8] sm:$0xff]
    %v396 = vld [vmem:[%s0 + $0xbb0] sm:$0xff]
    %v397 = vld [vmem:[%s0 + $0xbb8] sm:$0xff]
    %v398 = vld [vmem:[%s0 + $0xbc0] sm:$0xff]
    %v399 = vld [vmem:[%s0 + $0xbc8] sm:$0xff]
    %v400 = vld [vmem:[%s0 + $0xbd0] sm:$0xff]
    %v401 = vld [vmem:[%s0 + $0xbd8] sm:$0xff]
    %v402 = vld [vmem:[%s0 + $0xbe0] sm:$0xff]
    %v403 = vld [vmem:[%s0 + $0xbe8] sm:$0xff]
    %v404 = vld [vmem:[%s0 + $0xbf0] sm:$0xff]
    %v405 = vld [vmem:[%s0 + $0xbf8] sm:$0xff]
    %v406 = vld [vmem:[%s0 + $0xc00] sm:$0xff]
    %v407 = vld [vmem:[%s0 + $0xc08] sm:$0xff]
    %v408 = vld [vmem:[%s0 + $0xc10] sm:$0xff]
    %v409 = vld [vmem:[%s0 + $0xc18] sm:$0xff]
    %v410 = vld [vmem:[%s0 + $0xc20] sm:$0xff]
    %v411 = vld [vmem:[%s0 + $0xc28] sm:$0xff]
    %v412 = vld [vmem:[%s0 + $0xc30] sm:$0xff]
    %v413 = vld [vmem:[%s0 + $0xc38] sm:$0xff]
    %v414 = vld [vmem:[%s0 + $0xc40] sm:$0xff]
    %v415 = vld [vmem:[%s0 + $0xc48] sm:$0xff]
    %v416 = vld [vmem:[%s0 + $0xc50] sm:$0xff]
    %v417 = vld [vmem:[%s0 + $0xc58] sm:$0xff]
    %v418 = vld [vmem:[%s0 + $0xc60] sm:$0xff]
    %v419 = vld [vmem:[%s0 + $0xc68] sm:$0xff]
    %v420 = vld [vmem:[%s0 + $0xc70] sm:$0xff]
    %v421 = vld [vmem:[%s0 + $0xc78] sm:$0xff]
    %v422 = vld [vmem:[%s0 + $0xc80] sm:$0xff]
    %v423 = vld [vmem:[%s0 + $0xc88] sm:$0xff]
    %v424 = vld [vmem:[%s0 + $0xc90] sm:$0xff]
    %v425 = vld [vmem:[%s0 + $0xc98] sm:$0xff]
    %v426 = vld [vmem:[%s0 + $0xca0] sm:$0xff]
    %v427 = vld [vmem:[%s0 + $0xca8] sm:$0xff]
    %v428 = vld [vmem:[%s0 + $0xcb0] sm:$0xff]
    %v429 = vld [vmem:[%s0 + $0xcb8] sm:$0xff]
    %v430 = vld [vmem:[%s0 + $0xcc0] sm:$0xff]
    %v431 = vld [vmem:[%s0 + $0xcc8] sm:$0xff]
    %v432 = vld [vmem:[%s0 + $0xcd0] sm:$0xff]
    %v433 = vld [vmem:[%s0 + $0xcd8] sm:$0xff]
    %v434 = vld [vmem:[%s0 + $0xce0] sm:$0xff]
    %v435 = vld [vmem:[%s0 + $0xce8] sm:$0xff]
    %v436 = vld [vmem:[%s0 + $0xcf0] sm:$0xff]
    %v437 = vld [vmem:[%s0 + $0xcf8] sm:$0xff]
    %v438 = vld [vmem:[%s0 + $0xd00] sm:$0xff]
    %v439 = vld [vmem:[%s0 + $0xd08] sm:$0xff]
    %v440 = vld [vmem:[%s0 + $0xd10] sm:$0xff]
    %v441 = vld [vmem:[%s0 + $0xd18] sm:$0xff]
    %v442 = vld [vmem:[%s0 + $0xd20] sm:$0xff]
    %v443 = vld [vmem:[%s0 + $0xd28] sm:$0xff]
    %v444 = vld [vmem:[%s0 + $0xd30] sm:$0xff]
    %v445 = vld [vmem:[%s0 + $0xd38] sm:$0xff]
    %v446 = vld [vmem:[%s0 + $0xd40] sm:$0xff]
    %v447 = vld [vmem:[%s0 + $0xd48] sm:$0xff]
    %v448 = vld [vmem:[%s0 + $0xd50] sm:$0xff]
    %v449 = vld [vmem:[%s0 + $0xd58] sm:$0xff]
    %v450 = vld [vmem:[%s0 + $0xd60] sm:$0xff]
    %v451 = vld [vmem:[%s0 + $0xd68] sm:$0xff]
    %v452 = vld [vmem:[%s0 + $0xd70] sm:$0xff]
    %v453 = vld [vmem:[%s0 + $0xd78] sm:$0xff]
    %v454 = vld [vmem:[%s0 + $0xd80] sm:$0xff]
    %v455 = vld [vmem:[%s0 + $0xd88] sm:$0xff]
    %v456 = vld [vmem:[%s0 + $0xd90] sm:$0xff]
    %v457 = vld [vmem:[%s0 + $0xd98] sm:$0xff]
    %v458 = vld [vmem:[%s0 + $0xda0] sm:$0xff]
    %v459 = vld [vmem:[%s0 + $0xda8] sm:$0xff]
    %v460 = vld [vmem:[%s0 + $0xdb0] sm:$0xff]
    %v461 = vld [vmem:[%s0 + $0xdb8] sm:$0xff]
    %v462 = vld [vmem:[%s0 + $0xdc0] sm:$0xff]
    %v463 = vld [vmem:[%s0 + $0xdc8] sm:$0xff]
    %v464 = vld [vmem:[%s0 + $0xdd0] sm:$0xff]
    %v465 = vld [vmem:[%s0 + $0xdd8] sm:$0xff]
    %v466 = vld [vmem:[%s0 + $0xde0] sm:$0xff]
    %v467 = vld [vmem:[%s0 + $0xde8] sm:$0xff]
    %v468 = vld [vmem:[%s0 + $0xdf0] sm:$0xff]
    %v469 = vld [vmem:[%s0 + $0xdf8] sm:$0xff]
    %v470 = vpack.c.bf16 %v29, %v22
    %v471 = vpack.c.bf16 %v30, %v23
    %v472 = vpack.c.bf16 %v31, %v24
    %v473 = vpack.c.bf16 %v32, %v25
    %v474 = vpack.c.bf16 %v33, %v26
    %v475 = vpack.c.bf16 %v34, %v27
    %v476 = vpack.c.bf16 %v35, %v28
    %v477 = vpack.c.bf16 %v43, %v36
    %v478 = vpack.c.bf16 %v44, %v37
    %v479 = vpack.c.bf16 %v45, %v38
    %v480 = vpack.c.bf16 %v46, %v39
    %v481 = vpack.c.bf16 %v47, %v40
    %v482 = vpack.c.bf16 %v48, %v41
    %v483 = vpack.c.bf16 %v49, %v42
    %v484 = vpack.c.bf16 %v57, %v50
    %v485 = vpack.c.bf16 %v58, %v51
    %v486 = vpack.c.bf16 %v59, %v52
    %v487 = vpack.c.bf16 %v60, %v53
    %v488 = vpack.c.bf16 %v61, %v54
    %v489 = vpack.c.bf16 %v62, %v55
    %v490 = vpack.c.bf16 %v63, %v56
    %v491 = vpack.c.bf16 %v71, %v64
    %v492 = vpack.c.bf16 %v72, %v65
    %v493 = vpack.c.bf16 %v73, %v66
    %v494 = vpack.c.bf16 %v74, %v67
    %v495 = vpack.c.bf16 %v75, %v68
    %v496 = vpack.c.bf16 %v76, %v69
    %v497 = vpack.c.bf16 %v77, %v70
    %v498 = vpack.c.bf16 %v85, %v78
    %v499 = vpack.c.bf16 %v86, %v79
    %v500 = vpack.c.bf16 %v87, %v80
    %v501 = vpack.c.bf16 %v88, %v81
    %v502 = vpack.c.bf16 %v89, %v82
    %v503 = vpack.c.bf16 %v90, %v83
    %v504 = vpack.c.bf16 %v91, %v84
    %v505 = vpack.c.bf16 %v99, %v92
    %v506 = vpack.c.bf16 %v100, %v93
    %v507 = vpack.c.bf16 %v101, %v94
    %v508 = vpack.c.bf16 %v102, %v95
    %v509 = vpack.c.bf16 %v103, %v96
    %v510 = vpack.c.bf16 %v104, %v97
    %v511 = vpack.c.bf16 %v105, %v98
    %v512 = vpack.c.bf16 %v113, %v106
    %v513 = vpack.c.bf16 %v114, %v107
    %v514 = vpack.c.bf16 %v115, %v108
    %v515 = vpack.c.bf16 %v116, %v109
    %v516 = vpack.c.bf16 %v117, %v110
    %v517 = vpack.c.bf16 %v118, %v111
    %v518 = vpack.c.bf16 %v119, %v112
    %v519 = vpack.c.bf16 %v127, %v120
    %v520 = vpack.c.bf16 %v128, %v121
    %v521 = vpack.c.bf16 %v129, %v122
    %v522 = vpack.c.bf16 %v130, %v123
    %v523 = vpack.c.bf16 %v131, %v124
    %v524 = vpack.c.bf16 %v132, %v125
    %v525 = vpack.c.bf16 %v133, %v126
    %v526 = vpack.c.bf16 %v141, %v134
    %v527 = vpack.c.bf16 %v142, %v135
    %v528 = vpack.c.bf16 %v143, %v136
    %v529 = vpack.c.bf16 %v144, %v137
    %v530 = vpack.c.bf16 %v145, %v138
    %v531 = vpack.c.bf16 %v146, %v139
    %v532 = vpack.c.bf16 %v147, %v140
    %v533 = vpack.c.bf16 %v155, %v148
    %v534 = vpack.c.bf16 %v156, %v149
    %v535 = vpack.c.bf16 %v157, %v150
    %v536 = vpack.c.bf16 %v158, %v151
    %v537 = vpack.c.bf16 %v159, %v152
    %v538 = vpack.c.bf16 %v160, %v153
    %v539 = vpack.c.bf16 %v161, %v154
    %v540 = vpack.c.bf16 %v169, %v162
    %v541 = vpack.c.bf16 %v170, %v163
    %v542 = vpack.c.bf16 %v171, %v164
    %v543 = vpack.c.bf16 %v172, %v165
    %v544 = vpack.c.bf16 %v173, %v166
    %v545 = vpack.c.bf16 %v174, %v167
    %v546 = vpack.c.bf16 %v175, %v168
    %v547 = vpack.c.bf16 %v183, %v176
    %v548 = vpack.c.bf16 %v184, %v177
    %v549 = vpack.c.bf16 %v185, %v178
    %v550 = vpack.c.bf16 %v186, %v179
    %v551 = vpack.c.bf16 %v187, %v180
    %v552 = vpack.c.bf16 %v188, %v181
    %v553 = vpack.c.bf16 %v189, %v182
    %v554 = vpack.c.bf16 %v197, %v190
    %v555 = vpack.c.bf16 %v198, %v191
    %v556 = vpack.c.bf16 %v199, %v192
    %v557 = vpack.c.bf16 %v200, %v193
    %v558 = vpack.c.bf16 %v201, %v194
    %v559 = vpack.c.bf16 %v202, %v195
    %v560 = vpack.c.bf16 %v203, %v196
    %v561 = vpack.c.bf16 %v211, %v204
    %v562 = vpack.c.bf16 %v212, %v205
    %v563 = vpack.c.bf16 %v213, %v206
    %v564 = vpack.c.bf16 %v214, %v207
    %v565 = vpack.c.bf16 %v215, %v208
    %v566 = vpack.c.bf16 %v216, %v209
    %v567 = vpack.c.bf16 %v217, %v210
    %v568 = vpack.c.bf16 %v225, %v218
    %v569 = vpack.c.bf16 %v226, %v219
    %v570 = vpack.c.bf16 %v227, %v220
    %v571 = vpack.c.bf16 %v228, %v221
    %v572 = vpack.c.bf16 %v229, %v222
    %v573 = vpack.c.bf16 %v230, %v223
    %v574 = vpack.c.bf16 %v231, %v224
    %v575 = vpack.c.bf16 %v239, %v232
    %v576 = vpack.c.bf16 %v240, %v233
    %v577 = vpack.c.bf16 %v241, %v234
    %v578 = vpack.c.bf16 %v242, %v235
    %v579 = vpack.c.bf16 %v243, %v236
    %v580 = vpack.c.bf16 %v244, %v237
    %v581 = vpack.c.bf16 %v245, %v238
    %v582 = vpack.c.bf16 %v253, %v246
    %v583 = vpack.c.bf16 %v254, %v247
    %v584 = vpack.c.bf16 %v255, %v248
    %v585 = vpack.c.bf16 %v256, %v249
    %v586 = vpack.c.bf16 %v257, %v250
    %v587 = vpack.c.bf16 %v258, %v251
    %v588 = vpack.c.bf16 %v259, %v252
    %v589 = vpack.c.bf16 %v267, %v260
    %v590 = vpack.c.bf16 %v268, %v261
    %v591 = vpack.c.bf16 %v269, %v262
    %v592 = vpack.c.bf16 %v270, %v263
    %v593 = vpack.c.bf16 %v271, %v264
    %v594 = vpack.c.bf16 %v272, %v265
    %v595 = vpack.c.bf16 %v273, %v266
    %v596 = vpack.c.bf16 %v281, %v274
    %v597 = vpack.c.bf16 %v282, %v275
    %v598 = vpack.c.bf16 %v283, %v276
    %v599 = vpack.c.bf16 %v284, %v277
    %v600 = vpack.c.bf16 %v285, %v278
    %v601 = vpack.c.bf16 %v286, %v279
    %v602 = vpack.c.bf16 %v287, %v280
    %v603 = vpack.c.bf16 %v295, %v288
    %v604 = vpack.c.bf16 %v296, %v289
    %v605 = vpack.c.bf16 %v297, %v290
    %v606 = vpack.c.bf16 %v298, %v291
    %v607 = vpack.c.bf16 %v299, %v292
    %v608 = vpack.c.bf16 %v300, %v293
    %v609 = vpack.c.bf16 %v301, %v294
    %v610 = vpack.c.bf16 %v309, %v302
    %v611 = vpack.c.bf16 %v310, %v303
    %v612 = vpack.c.bf16 %v311, %v304
    %v613 = vpack.c.bf16 %v312, %v305
    %v614 = vpack.c.bf16 %v313, %v306
    %v615 = vpack.c.bf16 %v314, %v307
    %v616 = vpack.c.bf16 %v315, %v308
    %v617 = vpack.c.bf16 %v323, %v316
    %v618 = vpack.c.bf16 %v324, %v317
    %v619 = vpack.c.bf16 %v325, %v318
    %v620 = vpack.c.bf16 %v326, %v319
    %v621 = vpack.c.bf16 %v327, %v320
    %v622 = vpack.c.bf16 %v328, %v321
    %v623 = vpack.c.bf16 %v329, %v322
    %v624 = vpack.c.bf16 %v337, %v330
    %v625 = vpack.c.bf16 %v338, %v331
    %v626 = vpack.c.bf16 %v339, %v332
    %v627 = vpack.c.bf16 %v340, %v333
    %v628 = vpack.c.bf16 %v341, %v334
    %v629 = vpack.c.bf16 %v342, %v335
    %v630 = vpack.c.bf16 %v343, %v336
    %v631 = vpack.c.bf16 %v351, %v344
    %v632 = vpack.c.bf16 %v352, %v345
    %v633 = vpack.c.bf16 %v353, %v346
    %v634 = vpack.c.bf16 %v354, %v347
    %v635 = vpack.c.bf16 %v355, %v348
    %v636 = vpack.c.bf16 %v356, %v349
    %v637 = vpack.c.bf16 %v357, %v350
    %v638 = vpack.c.bf16 %v365, %v358
    %v639 = vpack.c.bf16 %v366, %v359
    %v640 = vpack.c.bf16 %v367, %v360
    %v641 = vpack.c.bf16 %v368, %v361
    %v642 = vpack.c.bf16 %v369, %v362
    %v643 = vpack.c.bf16 %v370, %v363
    %v644 = vpack.c.bf16 %v371, %v364
    %v645 = vpack.c.bf16 %v379, %v372
    %v646 = vpack.c.bf16 %v380, %v373
    %v647 = vpack.c.bf16 %v381, %v374
    %v648 = vpack.c.bf16 %v382, %v375
    %v649 = vpack.c.bf16 %v383, %v376
    %v650 = vpack.c.bf16 %v384, %v377
    %v651 = vpack.c.bf16 %v385, %v378
    %v652 = vpack.c.bf16 %v393, %v386
    %v653 = vpack.c.bf16 %v394, %v387
    %v654 = vpack.c.bf16 %v395, %v388
    %v655 = vpack.c.bf16 %v396, %v389
    %v656 = vpack.c.bf16 %v397, %v390
    %v657 = vpack.c.bf16 %v398, %v391
    %v658 = vpack.c.bf16 %v399, %v392
    %v659 = vpack.c.bf16 %v407, %v400
    %v660 = vpack.c.bf16 %v408, %v401
    %v661 = vpack.c.bf16 %v409, %v402
    %v662 = vpack.c.bf16 %v410, %v403
    %v663 = vpack.c.bf16 %v411, %v404
    %v664 = vpack.c.bf16 %v412, %v405
    %v665 = vpack.c.bf16 %v413, %v406
    %v666 = vpack.c.bf16 %v421, %v414
    %v667 = vpack.c.bf16 %v422, %v415
    %v668 = vpack.c.bf16 %v423, %v416
    %v669 = vpack.c.bf16 %v424, %v417
    %v670 = vpack.c.bf16 %v425, %v418
    %v671 = vpack.c.bf16 %v426, %v419
    %v672 = vpack.c.bf16 %v427, %v420
    %v673 = vpack.c.bf16 %v435, %v428
    %v674 = vpack.c.bf16 %v436, %v429
    %v675 = vpack.c.bf16 %v437, %v430
    %v676 = vpack.c.bf16 %v438, %v431
    %v677 = vpack.c.bf16 %v439, %v432
    %v678 = vpack.c.bf16 %v440, %v433
    %v679 = vpack.c.bf16 %v441, %v434
    %v680 = vpack.c.bf16 %v449, %v442
    %v681 = vpack.c.bf16 %v450, %v443
    %v682 = vpack.c.bf16 %v451, %v444
    %v683 = vpack.c.bf16 %v452, %v445
    %v684 = vpack.c.bf16 %v453, %v446
    %v685 = vpack.c.bf16 %v454, %v447
    %v686 = vpack.c.bf16 %v455, %v448
    %v687 = vpack.c.bf16 %v463, %v456
    %v688 = vpack.c.bf16 %v464, %v457
    %v689 = vpack.c.bf16 %v465, %v458
    %v690 = vpack.c.bf16 %v466, %v459
    %v691 = vpack.c.bf16 %v467, %v460
    %v692 = vpack.c.bf16 %v468, %v461
    %v693 = vpack.c.bf16 %v469, %v462
    %v694 = vld [vmem:[%s1] sm:$0xff]
    %v695 = vld [vmem:[%s1 + $0x8] sm:$0xff]
    %v696 = vld [vmem:[%s1 + $0x10] sm:$0xff]
    %v697 = vld [vmem:[%s1 + $0x18] sm:$0xff]
    %v698 = vld [vmem:[%s1 + $0x20] sm:$0xff]
    %v699 = vld [vmem:[%s1 + $0x28] sm:$0xff]
    %v700 = vld [vmem:[%s1 + $0x30] sm:$0xff]
    %v701 = vld [vmem:[%s1 + $0x38] sm:$0xff]
    %v702 = vld [vmem:[%s1 + $0x40] sm:$0xff]
    %v703 = vld [vmem:[%s1 + $0x48] sm:$0xff]
    %v704 = vld [vmem:[%s1 + $0x50] sm:$0xff]
    %v705 = vld [vmem:[%s1 + $0x58] sm:$0xff]
    %v706 = vld [vmem:[%s1 + $0x60] sm:$0xff]
    %v707 = vld [vmem:[%s1 + $0x68] sm:$0xff]
    %v708 = vld [vmem:[%s1 + $0x70] sm:$0xff]
    %v709 = vld [vmem:[%s1 + $0x78] sm:$0xff]
    %v710 = vld [vmem:[%s1 + $0x80] sm:$0xff]
    %v711 = vld [vmem:[%s1 + $0x88] sm:$0xff]
    %v712 = vld [vmem:[%s1 + $0x90] sm:$0xff]
    %v713 = vld [vmem:[%s1 + $0x98] sm:$0xff]
    %v714 = vld [vmem:[%s1 + $0xa0] sm:$0xff]
    %v715 = vld [vmem:[%s1 + $0xa8] sm:$0xff]
    %v716 = vld [vmem:[%s1 + $0xb0] sm:$0xff]
    %v717 = vld [vmem:[%s1 + $0xb8] sm:$0xff]
    %v718 = vld [vmem:[%s1 + $0xc0] sm:$0xff]
    %v719 = vld [vmem:[%s1 + $0xc8] sm:$0xff]
    %v720 = vld [vmem:[%s1 + $0xd0] sm:$0xff]
    %v721 = vld [vmem:[%s1 + $0xd8] sm:$0xff]
    %v722 = vld [vmem:[%s1 + $0xe0] sm:$0xff]
    %v723 = vld [vmem:[%s1 + $0xe8] sm:$0xff]
    %v724 = vld [vmem:[%s1 + $0xf0] sm:$0xff]
    %v725 = vld [vmem:[%s1 + $0xf8] sm:$0xff]
    %v726 = vld [vmem:[%s1 + $0x100] sm:$0xff]
    %v727 = vld [vmem:[%s1 + $0x108] sm:$0xff]
    %v728 = vld [vmem:[%s1 + $0x110] sm:$0xff]
    %v729 = vld [vmem:[%s1 + $0x118] sm:$0xff]
    %v730 = vld [vmem:[%s1 + $0x120] sm:$0xff]
    %v731 = vld [vmem:[%s1 + $0x128] sm:$0xff]
    %v732 = vld [vmem:[%s1 + $0x130] sm:$0xff]
    %v733 = vld [vmem:[%s1 + $0x138] sm:$0xff]
    %v734 = vld [vmem:[%s1 + $0x140] sm:$0xff]
    %v735 = vld [vmem:[%s1 + $0x148] sm:$0xff]
    %v736 = vld [vmem:[%s1 + $0x150] sm:$0xff]
    %v737 = vld [vmem:[%s1 + $0x158] sm:$0xff]
    %v738 = vld [vmem:[%s1 + $0x160] sm:$0xff]
    %v739 = vld [vmem:[%s1 + $0x168] sm:$0xff]
    %v740 = vld [vmem:[%s1 + $0x170] sm:$0xff]
    %v741 = vld [vmem:[%s1 + $0x178] sm:$0xff]
    %v742 = vld [vmem:[%s1 + $0x180] sm:$0xff]
    %v743 = vld [vmem:[%s1 + $0x188] sm:$0xff]
    %v744 = vld [vmem:[%s1 + $0x190] sm:$0xff]
    %v745 = vld [vmem:[%s1 + $0x198] sm:$0xff]
    %v746 = vld [vmem:[%s1 + $0x1a0] sm:$0xff]
    %v747 = vld [vmem:[%s1 + $0x1a8] sm:$0xff]
    %v748 = vld [vmem:[%s1 + $0x1b0] sm:$0xff]
    %v749 = vld [vmem:[%s1 + $0x1b8] sm:$0xff]
    %v750 = vld [vmem:[%s1 + $0x1c0] sm:$0xff]
    %v751 = vld [vmem:[%s1 + $0x1c8] sm:$0xff]
    %v752 = vld [vmem:[%s1 + $0x1d0] sm:$0xff]
    %v753 = vld [vmem:[%s1 + $0x1d8] sm:$0xff]
    %v754 = vld [vmem:[%s1 + $0x1e0] sm:$0xff]
    %v755 = vld [vmem:[%s1 + $0x1e8] sm:$0xff]
    %v756 = vld [vmem:[%s1 + $0x1f0] sm:$0xff]
    %v757 = vld [vmem:[%s1 + $0x1f8] sm:$0xff]
    %v758 = vld [vmem:[%s1 + $0x200] sm:$0xff]
    %v759 = vld [vmem:[%s1 + $0x208] sm:$0xff]
    %v760 = vld [vmem:[%s1 + $0x210] sm:$0xff]
    %v761 = vld [vmem:[%s1 + $0x218] sm:$0xff]
    %v762 = vld [vmem:[%s1 + $0x220] sm:$0xff]
    %v763 = vld [vmem:[%s1 + $0x228] sm:$0xff]
    %v764 = vld [vmem:[%s1 + $0x230] sm:$0xff]
    %v765 = vld [vmem:[%s1 + $0x238] sm:$0xff]
    %v766 = vld [vmem:[%s1 + $0x240] sm:$0xff]
    %v767 = vld [vmem:[%s1 + $0x248] sm:$0xff]
    %v768 = vld [vmem:[%s1 + $0x250] sm:$0xff]
    %v769 = vld [vmem:[%s1 + $0x258] sm:$0xff]
    %v770 = vld [vmem:[%s1 + $0x260] sm:$0xff]
    %v771 = vld [vmem:[%s1 + $0x268] sm:$0xff]
    %v772 = vld [vmem:[%s1 + $0x270] sm:$0xff]
    %v773 = vld [vmem:[%s1 + $0x278] sm:$0xff]
    %v774 = vld [vmem:[%s1 + $0x280] sm:$0xff]
    %v775 = vld [vmem:[%s1 + $0x288] sm:$0xff]
    %v776 = vld [vmem:[%s1 + $0x290] sm:$0xff]
    %v777 = vld [vmem:[%s1 + $0x298] sm:$0xff]
    %v778 = vld [vmem:[%s1 + $0x2a0] sm:$0xff]
    %v779 = vld [vmem:[%s1 + $0x2a8] sm:$0xff]
    %v780 = vld [vmem:[%s1 + $0x2b0] sm:$0xff]
    %v781 = vld [vmem:[%s1 + $0x2b8] sm:$0xff]
    %v782 = vld [vmem:[%s1 + $0x2c0] sm:$0xff]
    %v783 = vld [vmem:[%s1 + $0x2c8] sm:$0xff]
    %v784 = vld [vmem:[%s1 + $0x2d0] sm:$0xff]
    %v785 = vld [vmem:[%s1 + $0x2d8] sm:$0xff]
    %v786 = vld [vmem:[%s1 + $0x2e0] sm:$0xff]
    %v787 = vld [vmem:[%s1 + $0x2e8] sm:$0xff]
    %v788 = vld [vmem:[%s1 + $0x2f0] sm:$0xff]
    %v789 = vld [vmem:[%s1 + $0x2f8] sm:$0xff]
    %v790 = vld [vmem:[%s1 + $0x300] sm:$0xff]
    %v791 = vld [vmem:[%s1 + $0x308] sm:$0xff]
    %v792 = vld [vmem:[%s1 + $0x310] sm:$0xff]
    %v793 = vld [vmem:[%s1 + $0x318] sm:$0xff]
    %v794 = vld [vmem:[%s1 + $0x320] sm:$0xff]
    %v795 = vld [vmem:[%s1 + $0x328] sm:$0xff]
    %v796 = vld [vmem:[%s1 + $0x330] sm:$0xff]
    %v797 = vld [vmem:[%s1 + $0x338] sm:$0xff]
    %v798 = vld [vmem:[%s1 + $0x340] sm:$0xff]
    %v799 = vld [vmem:[%s1 + $0x348] sm:$0xff]
    %v800 = vld [vmem:[%s1 + $0x350] sm:$0xff]
    %v801 = vld [vmem:[%s1 + $0x358] sm:$0xff]
    %v802 = vld [vmem:[%s1 + $0x360] sm:$0xff]
    %v803 = vld [vmem:[%s1 + $0x368] sm:$0xff]
    %v804 = vld [vmem:[%s1 + $0x370] sm:$0xff]
    %v805 = vld [vmem:[%s1 + $0x378] sm:$0xff]
    %v806 = vld [vmem:[%s1 + $0x380] sm:$0xff]
    %v807 = vld [vmem:[%s1 + $0x388] sm:$0xff]
    %v808 = vld [vmem:[%s1 + $0x390] sm:$0xff]
    %v809 = vld [vmem:[%s1 + $0x398] sm:$0xff]
    %v810 = vld [vmem:[%s1 + $0x3a0] sm:$0xff]
    %v811 = vld [vmem:[%s1 + $0x3a8] sm:$0xff]
    %v812 = vld [vmem:[%s1 + $0x3b0] sm:$0xff]
    %v813 = vld [vmem:[%s1 + $0x3b8] sm:$0xff]
    %v814 = vld [vmem:[%s1 + $0x3c0] sm:$0xff]
    %v815 = vld [vmem:[%s1 + $0x3c8] sm:$0xff]
    %v816 = vld [vmem:[%s1 + $0x3d0] sm:$0xff]
    %v817 = vld [vmem:[%s1 + $0x3d8] sm:$0xff]
    %v818 = vld [vmem:[%s1 + $0x3e0] sm:$0xff]
    %v819 = vld [vmem:[%s1 + $0x3e8] sm:$0xff]
    %v820 = vld [vmem:[%s1 + $0x3f0] sm:$0xff]
    %v821 = vld [vmem:[%s1 + $0x3f8] sm:$0xff]
    %v822 = vld [vmem:[%s1 + $0x400] sm:$0xff]
    %v823 = vld [vmem:[%s1 + $0x408] sm:$0xff]
    %v824 = vld [vmem:[%s1 + $0x410] sm:$0xff]
    %v825 = vld [vmem:[%s1 + $0x418] sm:$0xff]
    %v826 = vld [vmem:[%s1 + $0x420] sm:$0xff]
    %v827 = vld [vmem:[%s1 + $0x428] sm:$0xff]
    %v828 = vld [vmem:[%s1 + $0x430] sm:$0xff]
    %v829 = vld [vmem:[%s1 + $0x438] sm:$0xff]
    %v830 = vld [vmem:[%s1 + $0x440] sm:$0xff]
    %v831 = vld [vmem:[%s1 + $0x448] sm:$0xff]
    %v832 = vld [vmem:[%s1 + $0x450] sm:$0xff]
    %v833 = vld [vmem:[%s1 + $0x458] sm:$0xff]
    %v834 = vld [vmem:[%s1 + $0x460] sm:$0xff]
    %v835 = vld [vmem:[%s1 + $0x468] sm:$0xff]
    %v836 = vld [vmem:[%s1 + $0x470] sm:$0xff]
    %v837 = vld [vmem:[%s1 + $0x478] sm:$0xff]
    %v838 = vld [vmem:[%s1 + $0x480] sm:$0xff]
    %v839 = vld [vmem:[%s1 + $0x488] sm:$0xff]
    %v840 = vld [vmem:[%s1 + $0x490] sm:$0xff]
    %v841 = vld [vmem:[%s1 + $0x498] sm:$0xff]
    %v842 = vld [vmem:[%s1 + $0x4a0] sm:$0xff]
    %v843 = vld [vmem:[%s1 + $0x4a8] sm:$0xff]
    %v844 = vld [vmem:[%s1 + $0x4b0] sm:$0xff]
    %v845 = vld [vmem:[%s1 + $0x4b8] sm:$0xff]
    %v846 = vld [vmem:[%s1 + $0x4c0] sm:$0xff]
    %v847 = vld [vmem:[%s1 + $0x4c8] sm:$0xff]
    %v848 = vld [vmem:[%s1 + $0x4d0] sm:$0xff]
    %v849 = vld [vmem:[%s1 + $0x4d8] sm:$0xff]
    %v850 = vld [vmem:[%s1 + $0x4e0] sm:$0xff]
    %v851 = vld [vmem:[%s1 + $0x4e8] sm:$0xff]
    %v852 = vld [vmem:[%s1 + $0x4f0] sm:$0xff]
    %v853 = vld [vmem:[%s1 + $0x4f8] sm:$0xff]
    %v854 = vld [vmem:[%s1 + $0x500] sm:$0xff]
    %v855 = vld [vmem:[%s1 + $0x508] sm:$0xff]
    %v856 = vld [vmem:[%s1 + $0x510] sm:$0xff]
    %v857 = vld [vmem:[%s1 + $0x518] sm:$0xff]
    %v858 = vld [vmem:[%s1 + $0x520] sm:$0xff]
    %v859 = vld [vmem:[%s1 + $0x528] sm:$0xff]
    %v860 = vld [vmem:[%s1 + $0x530] sm:$0xff]
    %v861 = vld [vmem:[%s1 + $0x538] sm:$0xff]
    %v862 = vld [vmem:[%s1 + $0x540] sm:$0xff]
    %v863 = vld [vmem:[%s1 + $0x548] sm:$0xff]
    %v864 = vld [vmem:[%s1 + $0x550] sm:$0xff]
    %v865 = vld [vmem:[%s1 + $0x558] sm:$0xff]
    %v866 = vld [vmem:[%s1 + $0x560] sm:$0xff]
    %v867 = vld [vmem:[%s1 + $0x568] sm:$0xff]
    %v868 = vld [vmem:[%s1 + $0x570] sm:$0xff]
    %v869 = vld [vmem:[%s1 + $0x578] sm:$0xff]
    %v870 = vld [vmem:[%s1 + $0x580] sm:$0xff]
    %v871 = vld [vmem:[%s1 + $0x588] sm:$0xff]
    %v872 = vld [vmem:[%s1 + $0x590] sm:$0xff]
    %v873 = vld [vmem:[%s1 + $0x598] sm:$0xff]
    %v874 = vld [vmem:[%s1 + $0x5a0] sm:$0xff]
    %v875 = vld [vmem:[%s1 + $0x5a8] sm:$0xff]
    %v876 = vld [vmem:[%s1 + $0x5b0] sm:$0xff]
    %v877 = vld [vmem:[%s1 + $0x5b8] sm:$0xff]
    %v878 = vld [vmem:[%s1 + $0x5c0] sm:$0xff]
    %v879 = vld [vmem:[%s1 + $0x5c8] sm:$0xff]
    %v880 = vld [vmem:[%s1 + $0x5d0] sm:$0xff]
    %v881 = vld [vmem:[%s1 + $0x5d8] sm:$0xff]
    %v882 = vld [vmem:[%s1 + $0x5e0] sm:$0xff]
    %v883 = vld [vmem:[%s1 + $0x5e8] sm:$0xff]
    %v884 = vld [vmem:[%s1 + $0x5f0] sm:$0xff]
    %v885 = vld [vmem:[%s1 + $0x5f8] sm:$0xff]
    %v886 = vld [vmem:[%s1 + $0x600] sm:$0xff]
    %v887 = vld [vmem:[%s1 + $0x608] sm:$0xff]
    %v888 = vld [vmem:[%s1 + $0x610] sm:$0xff]
    %v889 = vld [vmem:[%s1 + $0x618] sm:$0xff]
    %v890 = vld [vmem:[%s2] sm:$0xf]
    %v892 = vlaneseq
    %v893 = vshrl.u32 %v892, 7
    %v894 = vsub.s32 0, %v893
    %v895 = vrot.slane %v890, %v894
    %v896 = vlaneseq
    %v897 = vshrl.u32 %v896, 7
    %v898 = vsub.s32 1, %v897
    %v899 = vrot.slane %v890, %v898
    %v900 = vlaneseq
    %v901 = vshrl.u32 %v900, 7
    %v902 = vsub.s32 2, %v901
    %v903 = vrot.slane %v890, %v902
    %v904 = vlaneseq
    %v905 = vshrl.u32 %v904, 7
    %v906 = vsub.s32 3, %v905
    %v907 = vrot.slane %v890, %v906
    %v1108 = vunpack.c.l.b16 %v694
    %v1109 = vunpack.c.h.b16 %v694
    %v1110 = vunpack.c.l.b16 %v695
    %v1111 = vunpack.c.h.b16 %v695
    %v1112 = vunpack.c.l.b16 %v696
    %v1113 = vunpack.c.h.b16 %v696
    %v1114 = vunpack.c.l.b16 %v697
    %v1115 = vunpack.c.h.b16 %v697
    %v1116 = vunpack.c.l.b16 %v698
    %v1117 = vunpack.c.h.b16 %v698
    %v1118 = vunpack.c.l.b16 %v699
    %v1119 = vunpack.c.h.b16 %v699
    %v1120 = vunpack.c.l.b16 %v700
    %v1121 = vunpack.c.h.b16 %v700
    %v1122 = vunpack.c.l.b16 %v701
    %v1123 = vunpack.c.h.b16 %v701
    %v1124 = vunpack.c.l.b16 %v702
    %v1125 = vunpack.c.h.b16 %v702
    %v1126 = vunpack.c.l.b16 %v703
    %v1127 = vunpack.c.h.b16 %v703
    %v1128 = vunpack.c.l.b16 %v704
    %v1129 = vunpack.c.h.b16 %v704
    %v1130 = vunpack.c.l.b16 %v705
    %v1131 = vunpack.c.h.b16 %v705
    %v1132 = vunpack.c.l.b16 %v706
    %v1133 = vunpack.c.h.b16 %v706
    %v1134 = vunpack.c.l.b16 %v707
    %v1135 = vunpack.c.h.b16 %v707
    %v1136 = vunpack.c.l.b16 %v708
    %v1137 = vunpack.c.h.b16 %v708
    %v1138 = vunpack.c.l.b16 %v709
    %v1139 = vunpack.c.h.b16 %v709
    %v1140 = vunpack.c.l.b16 %v710
    %v1141 = vunpack.c.h.b16 %v710
    %v1142 = vunpack.c.l.b16 %v711
    %v1143 = vunpack.c.h.b16 %v711
    %v1144 = vunpack.c.l.b16 %v712
    %v1145 = vunpack.c.h.b16 %v712
    %v1146 = vunpack.c.l.b16 %v713
    %v1147 = vunpack.c.h.b16 %v713
    %v1148 = vunpack.c.l.b16 %v714
    %v1149 = vunpack.c.h.b16 %v714
    %v1150 = vunpack.c.l.b16 %v715
    %v1151 = vunpack.c.h.b16 %v715
    %v1152 = vunpack.c.l.b16 %v716
    %v1153 = vunpack.c.h.b16 %v716
    %v1154 = vunpack.c.l.b16 %v717
    %v1155 = vunpack.c.h.b16 %v717
    %v1156 = vunpack.c.l.b16 %v718
    %v1157 = vunpack.c.h.b16 %v718
    %v1158 = vunpack.c.l.b16 %v719
    %v1159 = vunpack.c.h.b16 %v719
    %v1160 = vunpack.c.l.b16 %v720
    %v1161 = vunpack.c.h.b16 %v720
    %v1162 = vunpack.c.l.b16 %v721
    %v1163 = vunpack.c.h.b16 %v721
    %v1164 = vunpack.c.l.b16 %v722
    %v1165 = vunpack.c.h.b16 %v722
    %v1166 = vunpack.c.l.b16 %v723
    %v1167 = vunpack.c.h.b16 %v723
    %v1168 = vunpack.c.l.b16 %v724
    %v1169 = vunpack.c.h.b16 %v724
    %v1170 = vunpack.c.l.b16 %v725
    %v1171 = vunpack.c.h.b16 %v725
    %v1172 = vunpack.c.l.b16 %v726
    %v1173 = vunpack.c.h.b16 %v726
    %v1174 = vunpack.c.l.b16 %v727
    %v1175 = vunpack.c.h.b16 %v727
    %v1176 = vunpack.c.l.b16 %v728
    %v1177 = vunpack.c.h.b16 %v728
    %v1178 = vunpack.c.l.b16 %v729
    %v1179 = vunpack.c.h.b16 %v729
    %v1180 = vunpack.c.l.b16 %v730
    %v1181 = vunpack.c.h.b16 %v730
    %v1182 = vunpack.c.l.b16 %v731
    %v1183 = vunpack.c.h.b16 %v731
    %v1184 = vunpack.c.l.b16 %v732
    %v1185 = vunpack.c.h.b16 %v732
    %v1186 = vunpack.c.l.b16 %v733
    %v1187 = vunpack.c.h.b16 %v733
    %v1188 = vunpack.c.l.b16 %v734
    %v1189 = vunpack.c.h.b16 %v734
    %v1190 = vunpack.c.l.b16 %v735
    %v1191 = vunpack.c.h.b16 %v735
    %v1192 = vunpack.c.l.b16 %v736
    %v1193 = vunpack.c.h.b16 %v736
    %v1194 = vunpack.c.l.b16 %v737
    %v1195 = vunpack.c.h.b16 %v737
    %v1196 = vunpack.c.l.b16 %v738
    %v1197 = vunpack.c.h.b16 %v738
    %v1198 = vunpack.c.l.b16 %v739
    %v1199 = vunpack.c.h.b16 %v739
    %v1200 = vunpack.c.l.b16 %v740
    %v1201 = vunpack.c.h.b16 %v740
    %v1202 = vunpack.c.l.b16 %v741
    %v1203 = vunpack.c.h.b16 %v741
    %v1204 = vunpack.c.l.b16 %v742
    %v1205 = vunpack.c.h.b16 %v742
    %v1206 = vunpack.c.l.b16 %v743
    %v1207 = vunpack.c.h.b16 %v743
    %v1208 = vunpack.c.l.b16 %v744
    %v1209 = vunpack.c.h.b16 %v744
    %v1210 = vunpack.c.l.b16 %v745
    %v1211 = vunpack.c.h.b16 %v745
    %v1212 = vunpack.c.l.b16 %v746
    %v1213 = vunpack.c.h.b16 %v746
    %v1214 = vunpack.c.l.b16 %v747
    %v1215 = vunpack.c.h.b16 %v747
    %v1216 = vunpack.c.l.b16 %v748
    %v1217 = vunpack.c.h.b16 %v748
    %v1218 = vunpack.c.l.b16 %v749
    %v1219 = vunpack.c.h.b16 %v749
    %v1220 = vunpack.c.l.b16 %v750
    %v1221 = vunpack.c.h.b16 %v750
    %v1222 = vunpack.c.l.b16 %v751
    %v1223 = vunpack.c.h.b16 %v751
    %v1224 = vunpack.c.l.b16 %v752
    %v1225 = vunpack.c.h.b16 %v752
    %v1226 = vunpack.c.l.b16 %v753
    %v1227 = vunpack.c.h.b16 %v753
    %v1228 = vunpack.c.l.b16 %v754
    %v1229 = vunpack.c.h.b16 %v754
    %v1230 = vunpack.c.l.b16 %v755
    %v1231 = vunpack.c.h.b16 %v755
    %v1232 = vunpack.c.l.b16 %v756
    %v1233 = vunpack.c.h.b16 %v756
    %v1234 = vunpack.c.l.b16 %v757
    %v1235 = vunpack.c.h.b16 %v757
    %v1236 = vunpack.c.l.b16 %v758
    %v1237 = vunpack.c.h.b16 %v758
    %v1238 = vunpack.c.l.b16 %v759
    %v1239 = vunpack.c.h.b16 %v759
    %v1240 = vunpack.c.l.b16 %v760
    %v1241 = vunpack.c.h.b16 %v760
    %v1242 = vunpack.c.l.b16 %v761
    %v1243 = vunpack.c.h.b16 %v761
    %v1244 = vunpack.c.l.b16 %v762
    %v1245 = vunpack.c.h.b16 %v762
    %v1246 = vunpack.c.l.b16 %v763
    %v1247 = vunpack.c.h.b16 %v763
    %v1248 = vunpack.c.l.b16 %v764
    %v1249 = vunpack.c.h.b16 %v764
    %v1250 = vunpack.c.l.b16 %v765
    %v1251 = vunpack.c.h.b16 %v765
    %v1252 = vunpack.c.l.b16 %v766
    %v1253 = vunpack.c.h.b16 %v766
    %v1254 = vunpack.c.l.b16 %v767
    %v1255 = vunpack.c.h.b16 %v767
    %v1256 = vunpack.c.l.b16 %v768
    %v1257 = vunpack.c.h.b16 %v768
    %v1258 = vunpack.c.l.b16 %v769
    %v1259 = vunpack.c.h.b16 %v769
    %v1260 = vunpack.c.l.b16 %v770
    %v1261 = vunpack.c.h.b16 %v770
    %v1262 = vunpack.c.l.b16 %v771
    %v1263 = vunpack.c.h.b16 %v771
    %v1264 = vunpack.c.l.b16 %v772
    %v1265 = vunpack.c.h.b16 %v772
    %v1266 = vunpack.c.l.b16 %v773
    %v1267 = vunpack.c.h.b16 %v773
    %v1268 = vunpack.c.l.b16 %v774
    %v1269 = vunpack.c.h.b16 %v774
    %v1270 = vunpack.c.l.b16 %v775
    %v1271 = vunpack.c.h.b16 %v775
    %v1272 = vunpack.c.l.b16 %v776
    %v1273 = vunpack.c.h.b16 %v776
    %v1274 = vunpack.c.l.b16 %v777
    %v1275 = vunpack.c.h.b16 %v777
    %v1276 = vunpack.c.l.b16 %v778
    %v1277 = vunpack.c.h.b16 %v778
    %v1278 = vunpack.c.l.b16 %v779
    %v1279 = vunpack.c.h.b16 %v779
    %v1280 = vunpack.c.l.b16 %v780
    %v1281 = vunpack.c.h.b16 %v780
    %v1282 = vunpack.c.l.b16 %v781
    %v1283 = vunpack.c.h.b16 %v781
    %v1284 = vunpack.c.l.b16 %v782
    %v1285 = vunpack.c.h.b16 %v782
    %v1286 = vunpack.c.l.b16 %v783
    %v1287 = vunpack.c.h.b16 %v783
    %v1288 = vunpack.c.l.b16 %v784
    %v1289 = vunpack.c.h.b16 %v784
    %v1290 = vunpack.c.l.b16 %v785
    %v1291 = vunpack.c.h.b16 %v785
    %v1292 = vunpack.c.l.b16 %v786
    %v1293 = vunpack.c.h.b16 %v786
    %v1294 = vunpack.c.l.b16 %v787
    %v1295 = vunpack.c.h.b16 %v787
    %v1296 = vunpack.c.l.b16 %v788
    %v1297 = vunpack.c.h.b16 %v788
    %v1298 = vunpack.c.l.b16 %v789
    %v1299 = vunpack.c.h.b16 %v789
    %v1300 = vunpack.c.l.b16 %v790
    %v1301 = vunpack.c.h.b16 %v790
    %v1302 = vunpack.c.l.b16 %v791
    %v1303 = vunpack.c.h.b16 %v791
    %v1304 = vunpack.c.l.b16 %v792
    %v1305 = vunpack.c.h.b16 %v792
    %v1306 = vunpack.c.l.b16 %v793
    %v1307 = vunpack.c.h.b16 %v793
    %v1308 = vunpack.c.l.b16 %v794
    %v1309 = vunpack.c.h.b16 %v794
    %v1310 = vunpack.c.l.b16 %v795
    %v1311 = vunpack.c.h.b16 %v795
    %v1312 = vunpack.c.l.b16 %v796
    %v1313 = vunpack.c.h.b16 %v796
    %v1314 = vunpack.c.l.b16 %v797
    %v1315 = vunpack.c.h.b16 %v797
    %v1316 = vunpack.c.l.b16 %v798
    %v1317 = vunpack.c.h.b16 %v798
    %v1318 = vunpack.c.l.b16 %v799
    %v1319 = vunpack.c.h.b16 %v799
    %v1320 = vunpack.c.l.b16 %v800
    %v1321 = vunpack.c.h.b16 %v800
    %v1322 = vunpack.c.l.b16 %v801
    %v1323 = vunpack.c.h.b16 %v801
    %v1324 = vunpack.c.l.b16 %v802
    %v1325 = vunpack.c.h.b16 %v802
    %v1326 = vunpack.c.l.b16 %v803
    %v1327 = vunpack.c.h.b16 %v803
    %v1328 = vunpack.c.l.b16 %v804
    %v1329 = vunpack.c.h.b16 %v804
    %v1330 = vunpack.c.l.b16 %v805
    %v1331 = vunpack.c.h.b16 %v805
    %v1332 = vunpack.c.l.b16 %v806
    %v1333 = vunpack.c.h.b16 %v806
    %v1334 = vunpack.c.l.b16 %v807
    %v1335 = vunpack.c.h.b16 %v807
    %v1336 = vunpack.c.l.b16 %v808
    %v1337 = vunpack.c.h.b16 %v808
    %v1338 = vunpack.c.l.b16 %v809
    %v1339 = vunpack.c.h.b16 %v809
    %v1340 = vunpack.c.l.b16 %v810
    %v1341 = vunpack.c.h.b16 %v810
    %v1342 = vunpack.c.l.b16 %v811
    %v1343 = vunpack.c.h.b16 %v811
    %v1344 = vunpack.c.l.b16 %v812
    %v1345 = vunpack.c.h.b16 %v812
    %v1346 = vunpack.c.l.b16 %v813
    %v1347 = vunpack.c.h.b16 %v813
    %v1348 = vunpack.c.l.b16 %v814
    %v1349 = vunpack.c.h.b16 %v814
    %v1350 = vunpack.c.l.b16 %v815
    %v1351 = vunpack.c.h.b16 %v815
    %v1352 = vunpack.c.l.b16 %v816
    %v1353 = vunpack.c.h.b16 %v816
    %v1354 = vunpack.c.l.b16 %v817
    %v1355 = vunpack.c.h.b16 %v817
    %v1356 = vunpack.c.l.b16 %v818
    %v1357 = vunpack.c.h.b16 %v818
    %v1358 = vunpack.c.l.b16 %v819
    %v1359 = vunpack.c.h.b16 %v819
    %v1360 = vunpack.c.l.b16 %v820
    %v1361 = vunpack.c.h.b16 %v820
    %v1362 = vunpack.c.l.b16 %v821
    %v1363 = vunpack.c.h.b16 %v821
    %v1364 = vunpack.c.l.b16 %v822
    %v1365 = vunpack.c.h.b16 %v822
    %v1366 = vunpack.c.l.b16 %v823
    %v1367 = vunpack.c.h.b16 %v823
    %v1368 = vunpack.c.l.b16 %v824
    %v1369 = vunpack.c.h.b16 %v824
    %v1370 = vunpack.c.l.b16 %v825
    %v1371 = vunpack.c.h.b16 %v825
    %v1372 = vunpack.c.l.b16 %v826
    %v1373 = vunpack.c.h.b16 %v826
    %v1374 = vunpack.c.l.b16 %v827
    %v1375 = vunpack.c.h.b16 %v827
    %v1376 = vunpack.c.l.b16 %v828
    %v1377 = vunpack.c.h.b16 %v828
    %v1378 = vunpack.c.l.b16 %v829
    %v1379 = vunpack.c.h.b16 %v829
    %v1380 = vunpack.c.l.b16 %v830
    %v1381 = vunpack.c.h.b16 %v830
    %v1382 = vunpack.c.l.b16 %v831
    %v1383 = vunpack.c.h.b16 %v831
    %v1384 = vunpack.c.l.b16 %v832
    %v1385 = vunpack.c.h.b16 %v832
    %v1386 = vunpack.c.l.b16 %v833
    %v1387 = vunpack.c.h.b16 %v833
    %v1388 = vunpack.c.l.b16 %v834
    %v1389 = vunpack.c.h.b16 %v834
    %v1390 = vunpack.c.l.b16 %v835
    %v1391 = vunpack.c.h.b16 %v835
    %v1392 = vunpack.c.l.b16 %v836
    %v1393 = vunpack.c.h.b16 %v836
    %v1394 = vunpack.c.l.b16 %v837
    %v1395 = vunpack.c.h.b16 %v837
    %v1396 = vunpack.c.l.b16 %v838
    %v1397 = vunpack.c.h.b16 %v838
    %v1398 = vunpack.c.l.b16 %v839
    %v1399 = vunpack.c.h.b16 %v839
    %v1400 = vunpack.c.l.b16 %v840
    %v1401 = vunpack.c.h.b16 %v840
    %v1402 = vunpack.c.l.b16 %v841
    %v1403 = vunpack.c.h.b16 %v841
    %v1404 = vunpack.c.l.b16 %v842
    %v1405 = vunpack.c.h.b16 %v842
    %v1406 = vunpack.c.l.b16 %v843
    %v1407 = vunpack.c.h.b16 %v843
    %v1408 = vunpack.c.l.b16 %v844
    %v1409 = vunpack.c.h.b16 %v844
    %v1410 = vunpack.c.l.b16 %v845
    %v1411 = vunpack.c.h.b16 %v845
    %v1412 = vunpack.c.l.b16 %v846
    %v1413 = vunpack.c.h.b16 %v846
    %v1414 = vunpack.c.l.b16 %v847
    %v1415 = vunpack.c.h.b16 %v847
    %v1416 = vunpack.c.l.b16 %v848
    %v1417 = vunpack.c.h.b16 %v848
    %v1418 = vunpack.c.l.b16 %v849
    %v1419 = vunpack.c.h.b16 %v849
    %v1420 = vunpack.c.l.b16 %v850
    %v1421 = vunpack.c.h.b16 %v850
    %v1422 = vunpack.c.l.b16 %v851
    %v1423 = vunpack.c.h.b16 %v851
    %v1424 = vunpack.c.l.b16 %v852
    %v1425 = vunpack.c.h.b16 %v852
    %v1426 = vunpack.c.l.b16 %v853
    %v1427 = vunpack.c.h.b16 %v853
    %v1428 = vunpack.c.l.b16 %v854
    %v1429 = vunpack.c.h.b16 %v854
    %v1430 = vunpack.c.l.b16 %v855
    %v1431 = vunpack.c.h.b16 %v855
    %v1432 = vunpack.c.l.b16 %v856
    %v1433 = vunpack.c.h.b16 %v856
    %v1434 = vunpack.c.l.b16 %v857
    %v1435 = vunpack.c.h.b16 %v857
    %v1436 = vunpack.c.l.b16 %v858
    %v1437 = vunpack.c.h.b16 %v858
    %v1438 = vunpack.c.l.b16 %v859
    %v1439 = vunpack.c.h.b16 %v859
    %v1440 = vunpack.c.l.b16 %v860
    %v1441 = vunpack.c.h.b16 %v860
    %v1442 = vunpack.c.l.b16 %v861
    %v1443 = vunpack.c.h.b16 %v861
    %v1444 = vunpack.c.l.b16 %v862
    %v1445 = vunpack.c.h.b16 %v862
    %v1446 = vunpack.c.l.b16 %v863
    %v1447 = vunpack.c.h.b16 %v863
    %v1448 = vunpack.c.l.b16 %v864
    %v1449 = vunpack.c.h.b16 %v864
    %v1450 = vunpack.c.l.b16 %v865
    %v1451 = vunpack.c.h.b16 %v865
    %v1452 = vunpack.c.l.b16 %v866
    %v1453 = vunpack.c.h.b16 %v866
    %v1454 = vunpack.c.l.b16 %v867
    %v1455 = vunpack.c.h.b16 %v867
    %v1456 = vunpack.c.l.b16 %v868
    %v1457 = vunpack.c.h.b16 %v868
    %v1458 = vunpack.c.l.b16 %v869
    %v1459 = vunpack.c.h.b16 %v869
    %v1460 = vunpack.c.l.b16 %v870
    %v1461 = vunpack.c.h.b16 %v870
    %v1462 = vunpack.c.l.b16 %v871
    %v1463 = vunpack.c.h.b16 %v871
    %v1464 = vunpack.c.l.b16 %v872
    %v1465 = vunpack.c.h.b16 %v872
    %v1466 = vunpack.c.l.b16 %v873
    %v1467 = vunpack.c.h.b16 %v873
    %v1468 = vunpack.c.l.b16 %v874
    %v1469 = vunpack.c.h.b16 %v874
    %v1470 = vunpack.c.l.b16 %v875
    %v1471 = vunpack.c.h.b16 %v875
    %v1472 = vunpack.c.l.b16 %v876
    %v1473 = vunpack.c.h.b16 %v876
    %v1474 = vunpack.c.l.b16 %v877
    %v1475 = vunpack.c.h.b16 %v877
    %v1476 = vunpack.c.l.b16 %v878
    %v1477 = vunpack.c.h.b16 %v878
    %v1478 = vunpack.c.l.b16 %v879
    %v1479 = vunpack.c.h.b16 %v879
    %v1480 = vunpack.c.l.b16 %v880
    %v1481 = vunpack.c.h.b16 %v880
    %v1482 = vunpack.c.l.b16 %v881
    %v1483 = vunpack.c.h.b16 %v881
    %v1484 = vunpack.c.l.b16 %v882
    %v1485 = vunpack.c.h.b16 %v882
    %v1486 = vunpack.c.l.b16 %v883
    %v1487 = vunpack.c.h.b16 %v883
    %v1488 = vunpack.c.l.b16 %v884
    %v1489 = vunpack.c.h.b16 %v884
    %v1490 = vunpack.c.l.b16 %v885
    %v1491 = vunpack.c.h.b16 %v885
    %v1492 = vunpack.c.l.b16 %v886
    %v1493 = vunpack.c.h.b16 %v886
    %v1494 = vunpack.c.l.b16 %v887
    %v1495 = vunpack.c.h.b16 %v887
    %v1496 = vunpack.c.l.b16 %v888
    %v1497 = vunpack.c.h.b16 %v888
    %v1498 = vunpack.c.l.b16 %v889
    %v1499 = vunpack.c.h.b16 %v889
    %v1500 = vpack.c.b16 %v1112, %v1108
    %v1501 = vpack.c.b16 %v1113, %v1109
    %v1502 = vpack.c.b16 %v1114, %v1110
    %v1503 = vpack.c.b16 %v1115, %v1111
    %v1504 = vpack.c.b16 %v1120, %v1116
    %v1505 = vpack.c.b16 %v1121, %v1117
    %v1506 = vpack.c.b16 %v1122, %v1118
    %v1507 = vpack.c.b16 %v1123, %v1119
    %v1508 = vpack.c.b16 %v1128, %v1124
    %v1509 = vpack.c.b16 %v1129, %v1125
    %v1510 = vpack.c.b16 %v1130, %v1126
    %v1511 = vpack.c.b16 %v1131, %v1127
    %v1512 = vpack.c.b16 %v1136, %v1132
    %v1513 = vpack.c.b16 %v1137, %v1133
    %v1514 = vpack.c.b16 %v1138, %v1134
    %v1515 = vpack.c.b16 %v1139, %v1135
    %v1516 = vpack.c.b16 %v1144, %v1140
    %v1517 = vpack.c.b16 %v1145, %v1141
    %v1518 = vpack.c.b16 %v1146, %v1142
    %v1519 = vpack.c.b16 %v1147, %v1143
    %v1520 = vpack.c.b16 %v1152, %v1148
    %v1521 = vpack.c.b16 %v1153, %v1149
    %v1522 = vpack.c.b16 %v1154, %v1150
    %v1523 = vpack.c.b16 %v1155, %v1151
    %v1524 = vpack.c.b16 %v1160, %v1156
    %v1525 = vpack.c.b16 %v1161, %v1157
    %v1526 = vpack.c.b16 %v1162, %v1158
    %v1527 = vpack.c.b16 %v1163, %v1159
    %v1528 = vpack.c.b16 %v1168, %v1164
    %v1529 = vpack.c.b16 %v1169, %v1165
    %v1530 = vpack.c.b16 %v1170, %v1166
    %v1531 = vpack.c.b16 %v1171, %v1167
    %v1532 = vpack.c.b16 %v1176, %v1172
    %v1533 = vpack.c.b16 %v1177, %v1173
    %v1534 = vpack.c.b16 %v1178, %v1174
    %v1535 = vpack.c.b16 %v1179, %v1175
    %v1536 = vpack.c.b16 %v1184, %v1180
    %v1537 = vpack.c.b16 %v1185, %v1181
    %v1538 = vpack.c.b16 %v1186, %v1182
    %v1539 = vpack.c.b16 %v1187, %v1183
    %v1540 = vpack.c.b16 %v1192, %v1188
    %v1541 = vpack.c.b16 %v1193, %v1189
    %v1542 = vpack.c.b16 %v1194, %v1190
    %v1543 = vpack.c.b16 %v1195, %v1191
    %v1544 = vpack.c.b16 %v1200, %v1196
    %v1545 = vpack.c.b16 %v1201, %v1197
    %v1546 = vpack.c.b16 %v1202, %v1198
    %v1547 = vpack.c.b16 %v1203, %v1199
    %v1548 = vpack.c.b16 %v1208, %v1204
    %v1549 = vpack.c.b16 %v1209, %v1205
    %v1550 = vpack.c.b16 %v1210, %v1206
    %v1551 = vpack.c.b16 %v1211, %v1207
    %v1552 = vpack.c.b16 %v1216, %v1212
    %v1553 = vpack.c.b16 %v1217, %v1213
    %v1554 = vpack.c.b16 %v1218, %v1214
    %v1555 = vpack.c.b16 %v1219, %v1215
    %v1556 = vpack.c.b16 %v1224, %v1220
    %v1557 = vpack.c.b16 %v1225, %v1221
    %v1558 = vpack.c.b16 %v1226, %v1222
    %v1559 = vpack.c.b16 %v1227, %v1223
    %v1560 = vpack.c.b16 %v1232, %v1228
    %v1561 = vpack.c.b16 %v1233, %v1229
    %v1562 = vpack.c.b16 %v1234, %v1230
    %v1563 = vpack.c.b16 %v1235, %v1231
    %v1564 = vpack.c.b16 %v1240, %v1236
    %v1565 = vpack.c.b16 %v1241, %v1237
    %v1566 = vpack.c.b16 %v1242, %v1238
    %v1567 = vpack.c.b16 %v1243, %v1239
    %v1568 = vpack.c.b16 %v1248, %v1244
    %v1569 = vpack.c.b16 %v1249, %v1245
    %v1570 = vpack.c.b16 %v1250, %v1246
    %v1571 = vpack.c.b16 %v1251, %v1247
    %v1572 = vpack.c.b16 %v1256, %v1252
    %v1573 = vpack.c.b16 %v1257, %v1253
    %v1574 = vpack.c.b16 %v1258, %v1254
    %v1575 = vpack.c.b16 %v1259, %v1255
    %v1576 = vpack.c.b16 %v1264, %v1260
    %v1577 = vpack.c.b16 %v1265, %v1261
    %v1578 = vpack.c.b16 %v1266, %v1262
    %v1579 = vpack.c.b16 %v1267, %v1263
    %v1580 = vpack.c.b16 %v1272, %v1268
    %v1581 = vpack.c.b16 %v1273, %v1269
    %v1582 = vpack.c.b16 %v1274, %v1270
    %v1583 = vpack.c.b16 %v1275, %v1271
    %v1584 = vpack.c.b16 %v1280, %v1276
    %v1585 = vpack.c.b16 %v1281, %v1277
    %v1586 = vpack.c.b16 %v1282, %v1278
    %v1587 = vpack.c.b16 %v1283, %v1279
    %v1588 = vpack.c.b16 %v1288, %v1284
    %v1589 = vpack.c.b16 %v1289, %v1285
    %v1590 = vpack.c.b16 %v1290, %v1286
    %v1591 = vpack.c.b16 %v1291, %v1287
    %v1592 = vpack.c.b16 %v1296, %v1292
    %v1593 = vpack.c.b16 %v1297, %v1293
    %v1594 = vpack.c.b16 %v1298, %v1294
    %v1595 = vpack.c.b16 %v1299, %v1295
    %v1596 = vpack.c.b16 %v1304, %v1300
    %v1597 = vpack.c.b16 %v1305, %v1301
    %v1598 = vpack.c.b16 %v1306, %v1302
    %v1599 = vpack.c.b16 %v1307, %v1303
    %v1600 = vpack.c.b16 %v1312, %v1308
    %v1601 = vpack.c.b16 %v1313, %v1309
    %v1602 = vpack.c.b16 %v1314, %v1310
    %v1603 = vpack.c.b16 %v1315, %v1311
    %v1604 = vpack.c.b16 %v1320, %v1316
    %v1605 = vpack.c.b16 %v1321, %v1317
    %v1606 = vpack.c.b16 %v1322, %v1318
    %v1607 = vpack.c.b16 %v1323, %v1319
    %v1608 = vpack.c.b16 %v1328, %v1324
    %v1609 = vpack.c.b16 %v1329, %v1325
    %v1610 = vpack.c.b16 %v1330, %v1326
    %v1611 = vpack.c.b16 %v1331, %v1327
    %v1612 = vpack.c.b16 %v1336, %v1332
    %v1613 = vpack.c.b16 %v1337, %v1333
    %v1614 = vpack.c.b16 %v1338, %v1334
    %v1615 = vpack.c.b16 %v1339, %v1335
    %v1616 = vpack.c.b16 %v1344, %v1340
    %v1617 = vpack.c.b16 %v1345, %v1341
    %v1618 = vpack.c.b16 %v1346, %v1342
    %v1619 = vpack.c.b16 %v1347, %v1343
    %v1620 = vpack.c.b16 %v1352, %v1348
    %v1621 = vpack.c.b16 %v1353, %v1349
    %v1622 = vpack.c.b16 %v1354, %v1350
    %v1623 = vpack.c.b16 %v1355, %v1351
    %v1624 = vpack.c.b16 %v1360, %v1356
    %v1625 = vpack.c.b16 %v1361, %v1357
    %v1626 = vpack.c.b16 %v1362, %v1358
    %v1627 = vpack.c.b16 %v1363, %v1359
    %v1628 = vpack.c.b16 %v1368, %v1364
    %v1629 = vpack.c.b16 %v1369, %v1365
    %v1630 = vpack.c.b16 %v1370, %v1366
    %v1631 = vpack.c.b16 %v1371, %v1367
    %v1632 = vpack.c.b16 %v1376, %v1372
    %v1633 = vpack.c.b16 %v1377, %v1373
    %v1634 = vpack.c.b16 %v1378, %v1374
    %v1635 = vpack.c.b16 %v1379, %v1375
    %v1636 = vpack.c.b16 %v1384, %v1380
    %v1637 = vpack.c.b16 %v1385, %v1381
    %v1638 = vpack.c.b16 %v1386, %v1382
    %v1639 = vpack.c.b16 %v1387, %v1383
    %v1640 = vpack.c.b16 %v1392, %v1388
    %v1641 = vpack.c.b16 %v1393, %v1389
    %v1642 = vpack.c.b16 %v1394, %v1390
    %v1643 = vpack.c.b16 %v1395, %v1391
    %v1644 = vpack.c.b16 %v1400, %v1396
    %v1645 = vpack.c.b16 %v1401, %v1397
    %v1646 = vpack.c.b16 %v1402, %v1398
    %v1647 = vpack.c.b16 %v1403, %v1399
    %v1648 = vpack.c.b16 %v1408, %v1404
    %v1649 = vpack.c.b16 %v1409, %v1405
    %v1650 = vpack.c.b16 %v1410, %v1406
    %v1651 = vpack.c.b16 %v1411, %v1407
    %v1652 = vpack.c.b16 %v1416, %v1412
    %v1653 = vpack.c.b16 %v1417, %v1413
    %v1654 = vpack.c.b16 %v1418, %v1414
    %v1655 = vpack.c.b16 %v1419, %v1415
    %v1656 = vpack.c.b16 %v1424, %v1420
    %v1657 = vpack.c.b16 %v1425, %v1421
    %v1658 = vpack.c.b16 %v1426, %v1422
    %v1659 = vpack.c.b16 %v1427, %v1423
    %v1660 = vpack.c.b16 %v1432, %v1428
    %v1661 = vpack.c.b16 %v1433, %v1429
    %v1662 = vpack.c.b16 %v1434, %v1430
    %v1663 = vpack.c.b16 %v1435, %v1431
    %v1664 = vpack.c.b16 %v1440, %v1436
    %v1665 = vpack.c.b16 %v1441, %v1437
    %v1666 = vpack.c.b16 %v1442, %v1438
    %v1667 = vpack.c.b16 %v1443, %v1439
    %v1668 = vpack.c.b16 %v1448, %v1444
    %v1669 = vpack.c.b16 %v1449, %v1445
    %v1670 = vpack.c.b16 %v1450, %v1446
    %v1671 = vpack.c.b16 %v1451, %v1447
    %v1672 = vpack.c.b16 %v1456, %v1452
    %v1673 = vpack.c.b16 %v1457, %v1453
    %v1674 = vpack.c.b16 %v1458, %v1454
    %v1675 = vpack.c.b16 %v1459, %v1455
    %v1676 = vpack.c.b16 %v1464, %v1460
    %v1677 = vpack.c.b16 %v1465, %v1461
    %v1678 = vpack.c.b16 %v1466, %v1462
    %v1679 = vpack.c.b16 %v1467, %v1463
    %v1680 = vpack.c.b16 %v1472, %v1468
    %v1681 = vpack.c.b16 %v1473, %v1469
    %v1682 = vpack.c.b16 %v1474, %v1470
    %v1683 = vpack.c.b16 %v1475, %v1471
    %v1684 = vpack.c.b16 %v1480, %v1476
    %v1685 = vpack.c.b16 %v1481, %v1477
    %v1686 = vpack.c.b16 %v1482, %v1478
    %v1687 = vpack.c.b16 %v1483, %v1479
    %v1688 = vpack.c.b16 %v1488, %v1484
    %v1689 = vpack.c.b16 %v1489, %v1485
    %v1690 = vpack.c.b16 %v1490, %v1486
    %v1691 = vpack.c.b16 %v1491, %v1487
    %v1692 = vpack.c.b16 %v1496, %v1492
    %v1693 = vpack.c.b16 %v1497, %v1493
    %v1694 = vpack.c.b16 %v1498, %v1494
    %v1695 = vpack.c.b16 %v1499, %v1495
    %vm1892 = vcmask 130048
    %v1894 = vsel %vm1892, %v476, 0
    %v1897 = vsel %vm1892, %v483, 0
    %v1900 = vsel %vm1892, %v490, 0
    %v1903 = vsel %vm1892, %v497, 0
    %v1906 = vsel %vm1892, %v504, 0
    %v1909 = vsel %vm1892, %v511, 0
    %v1912 = vsel %vm1892, %v518, 0
    %v1915 = vsel %vm1892, %v525, 0
    %v1918 = vsel %vm1892, %v532, 0
    %v1921 = vsel %vm1892, %v539, 0
    %v1924 = vsel %vm1892, %v546, 0
    %v1927 = vsel %vm1892, %v553, 0
    %v1930 = vsel %vm1892, %v560, 0
    %v1933 = vsel %vm1892, %v567, 0
    %v1936 = vsel %vm1892, %v574, 0
    %v1939 = vsel %vm1892, %v581, 0
    %v1942 = vsel %vm1892, %v588, 0
    %v1945 = vsel %vm1892, %v595, 0
    %v1948 = vsel %vm1892, %v602, 0
    %v1951 = vsel %vm1892, %v609, 0
    %v1954 = vsel %vm1892, %v616, 0
    %v1957 = vsel %vm1892, %v623, 0
    %v1960 = vsel %vm1892, %v630, 0
    %v1963 = vsel %vm1892, %v637, 0
    %v1966 = vsel %vm1892, %v644, 0
    %v1969 = vsel %vm1892, %v651, 0
    %v1972 = vsel %vm1892, %v658, 0
    %v1975 = vsel %vm1892, %v665, 0
    %v1978 = vsel %vm1892, %v672, 0
    %v1981 = vsel %vm1892, %v679, 0
    %v1984 = vsel %vm1892, %v686, 0
    %v1987 = vsel %vm1892, %v693, 0
    %1989 = vmatprep.subr.bf16.mxu0 %v1501
    %1990 = vmatpush1.bf16.msra.mxu0 %v1500
    %1991 = vmatprep.subr.bf16.mxu0 %v1505
    %1992 = vmatpush1.bf16.msra.mxu0 %v1504
    %1993 = vmatprep.subr.bf16.mxu0 %v1509
    %1994 = vmatpush1.bf16.msra.mxu0 %v1508
    %1995 = vmatprep.subr.bf16.mxu0 %v1513
    %1996 = vmatpush1.bf16.msra.mxu0 %v1512
    %1997 = vmatprep.subr.bf16.mxu0 %v1517
    %1998 = vmatpush1.bf16.msra.mxu0 %v1516
    %1999 = vmatprep.subr.bf16.mxu0 %v1521
    %2000 = vmatpush1.bf16.msra.mxu0 %v1520
    %2001 = vmatprep.subr.bf16.mxu0 %v1525
    %2002 = vmatpush1.bf16.msra.mxu0 %v1524
    %2003 = vmatprep.subr.bf16.mxu0 %v1529
    %2004 = vmatpush1.bf16.msra.mxu0 %v1528
    %2005 = vmatprep.subr.bf16.mxu0 %v1533
    %2006 = vmatpush1.bf16.msra.mxu0 %v1532
    %2007 = vmatprep.subr.bf16.mxu0 %v1537
    %2008 = vmatpush1.bf16.msra.mxu0 %v1536
    %2009 = vmatprep.subr.bf16.mxu0 %v1541
    %2010 = vmatpush1.bf16.msra.mxu0 %v1540
    %2011 = vmatprep.subr.bf16.mxu0 %v1545
    %2012 = vmatpush1.bf16.msra.mxu0 %v1544
    %2013 = vmatprep.subr.bf16.mxu0 %v1549
    %2014 = vmatpush1.bf16.msra.mxu0 %v1548
    %2015 = vmatprep.subr.bf16.mxu0 %v1553
    %2016 = vmatpush1.bf16.msra.mxu0 %v1552
    %2017 = vmatprep.subr.bf16.mxu0 %v1557
    %2018 = vmatpush1.bf16.msra.mxu0 %v1556
    %2019 = vmatprep.subr.bf16.mxu0 %v1561
    %2020 = vmatpush1.bf16.msra.mxu0 %v1560
    %2021 = vmatprep.mubr.bf16.mxu0 %v471
    %2022 = vmatmul.mubr.bf16.gmra.mrb[0].mxu0 %v470
    %v2023 = vpop.f32.mrb[0].mxu0
    %v2024 = vadd.f32 %v895, %v2023
    %v2025 = vpop.f32.mrb[0].mxu0
    %v2026 = vadd.f32 %v899, %v2025
    %v2027 = vpop.f32.mrb[0].mxu0
    %v2028 = vadd.f32 %v895, %v2027
    %v2029 = vpop.f32.mrb[0].mxu0
    %v2030 = vadd.f32 %v899, %v2029
    %2031 = vmatprep.mubr.bf16.mxu0 %v478
    %2032 = vmatmul.mubr.bf16.gmra.mrb[0].mxu0 %v477
    %v2033 = vpop.f32.mrb[0].mxu0
    %v2034 = vadd.f32 %v895, %v2033
    %v2035 = vpop.f32.mrb[0].mxu0
    %v2036 = vadd.f32 %v899, %v2035
    %v2037 = vpop.f32.mrb[0].mxu0
    %v2038 = vadd.f32 %v895, %v2037
    %v2039 = vpop.f32.mrb[0].mxu0
    %v2040 = vadd.f32 %v899, %v2039
    %2041 = vmatprep.mubr.bf16.mxu0 %v485
    %2042 = vmatmul.mubr.bf16.gmra.mrb[0].mxu0 %v484
    %v2043 = vpop.f32.mrb[0].mxu0
    %v2044 = vadd.f32 %v895, %v2043
    %v2045 = vpop.f32.mrb[0].mxu0
    %v2046 = vadd.f32 %v899, %v2045
    %v2047 = vpop.f32.mrb[0].mxu0
    %v2048 = vadd.f32 %v895, %v2047
    %v2049 = vpop.f32.mrb[0].mxu0
    %v2050 = vadd.f32 %v899, %v2049
    %2051 = vmatprep.mubr.bf16.mxu0 %v492
    %2052 = vmatmul.mubr.bf16.gmra.mrb[0].mxu0 %v491
    %v2053 = vpop.f32.mrb[0].mxu0
    %v2054 = vadd.f32 %v895, %v2053
    %v2055 = vpop.f32.mrb[0].mxu0
    %v2056 = vadd.f32 %v899, %v2055
    %v2057 = vpop.f32.mrb[0].mxu0
    %v2058 = vadd.f32 %v895, %v2057
    %v2059 = vpop.f32.mrb[0].mxu0
    %v2060 = vadd.f32 %v899, %v2059
    %2061 = vmatprep.mubr.bf16.mxu0 %v499
    %2062 = vmatmul.mubr.bf16.gmra.mrb[0].mxu0 %v498
    %v2063 = vpop.f32.mrb[0].mxu0
    %v2064 = vadd.f32 %v895, %v2063
    %v2065 = vpop.f32.mrb[0].mxu0
    %v2066 = vadd.f32 %v899, %v2065
    %v2067 = vpop.f32.mrb[0].mxu0
    %v2068 = vadd.f32 %v895, %v2067
    %v2069 = vpop.f32.mrb[0].mxu0
    %v2070 = vadd.f32 %v899, %v2069
    %2071 = vmatprep.mubr.bf16.mxu0 %v506
    %2072 = vmatmul.mubr.bf16.gmra.mrb[0].mxu0 %v505
    %v2073 = vpop.f32.mrb[0].mxu0
    %v2074 = vadd.f32 %v895, %v2073
    %v2075 = vpop.f32.mrb[0].mxu0
    %v2076 = vadd.f32 %v899, %v2075
    %v2077 = vpop.f32.mrb[0].mxu0
    %v2078 = vadd.f32 %v895, %v2077
    %v2079 = vpop.f32.mrb[0].mxu0
    %v2080 = vadd.f32 %v899, %v2079
    %2081 = vmatprep.mubr.bf16.mxu0 %v513
    %2082 = vmatmul.mubr.bf16.gmra.mrb[0].mxu0 %v512
    %v2083 = vpop.f32.mrb[0].mxu0
    %v2084 = vadd.f32 %v895, %v2083
    %v2085 = vpop.f32.mrb[0].mxu0
    %v2086 = vadd.f32 %v899, %v2085
    %v2087 = vpop.f32.mrb[0].mxu0
    %v2088 = vadd.f32 %v895, %v2087
    %v2089 = vpop.f32.mrb[0].mxu0
    %v2090 = vadd.f32 %v899, %v2089
    %2091 = vmatprep.mubr.bf16.mxu0 %v520
    %2092 = vmatmul.mubr.bf16.gmra.mrb[0].mxu0 %v519
    %v2093 = vpop.f32.mrb[0].mxu0
    %v2094 = vadd.f32 %v895, %v2093
    %v2095 = vpop.f32.mrb[0].mxu0
    %v2096 = vadd.f32 %v899, %v2095
    %v2097 = vpop.f32.mrb[0].mxu0
    %v2098 = vadd.f32 %v895, %v2097
    %v2099 = vpop.f32.mrb[0].mxu0
    %v2100 = vadd.f32 %v899, %v2099
    %2101 = vmatprep.mubr.bf16.mxu0 %v527
    %2102 = vmatmul.mubr.bf16.gmra.mrb[0].mxu0 %v526
    %v2103 = vpop.f32.mrb[0].mxu0
    %v2104 = vadd.f32 %v895, %v2103
    %v2105 = vpop.f32.mrb[0].mxu0
    %v2106 = vadd.f32 %v899, %v2105
    %v2107 = vpop.f32.mrb[0].mxu0
    %v2108 = vadd.f32 %v895, %v2107
    %v2109 = vpop.f32.mrb[0].mxu0
    %v2110 = vadd.f32 %v899, %v2109
    %2111 = vmatprep.mubr.bf16.mxu0 %v534
    %2112 = vmatmul.mubr.bf16.gmra.mrb[0].mxu0 %v533
    %v2113 = vpop.f32.mrb[0].mxu0
    %v2114 = vadd.f32 %v895, %v2113
    %v2115 = vpop.f32.mrb[0].mxu0
    %v2116 = vadd.f32 %v899, %v2115
    %v2117 = vpop.f32.mrb[0].mxu0
    %v2118 = vadd.f32 %v895, %v2117
    %v2119 = vpop.f32.mrb[0].mxu0
    %v2120 = vadd.f32 %v899, %v2119
    %2121 = vmatprep.mubr.bf16.mxu0 %v541
    %2122 = vmatmul.mubr.bf16.gmra.mrb[0].mxu0 %v540
    %v2123 = vpop.f32.mrb[0].mxu0
    %v2124 = vadd.f32 %v895, %v2123
    %v2125 = vpop.f32.mrb[0].mxu0
    %v2126 = vadd.f32 %v899, %v2125
    %v2127 = vpop.f32.mrb[0].mxu0
    %v2128 = vadd.f32 %v895, %v2127
    %v2129 = vpop.f32.mrb[0].mxu0
    %v2130 = vadd.f32 %v899, %v2129
    %2131 = vmatprep.mubr.bf16.mxu0 %v548
    %2132 = vmatmul.mubr.bf16.gmra.mrb[0].mxu0 %v547
    %v2133 = vpop.f32.mrb[0].mxu0
    %v2134 = vadd.f32 %v895, %v2133
    %v2135 = vpop.f32.mrb[0].mxu0
    %v2136 = vadd.f32 %v899, %v2135
    %v2137 = vpop.f32.mrb[0].mxu0
    %v2138 = vadd.f32 %v895, %v2137
    %v2139 = vpop.f32.mrb[0].mxu0
    %v2140 = vadd.f32 %v899, %v2139
    %2141 = vmatprep.mubr.bf16.mxu0 %v555
    %2142 = vmatmul.mubr.bf16.gmra.mrb[0].mxu0 %v554
    %v2143 = vpop.f32.mrb[0].mxu0
    %v2144 = vadd.f32 %v895, %v2143
    %v2145 = vpop.f32.mrb[0].mxu0
    %v2146 = vadd.f32 %v899, %v2145
    %v2147 = vpop.f32.mrb[0].mxu0
    %v2148 = vadd.f32 %v895, %v2147
    %v2149 = vpop.f32.mrb[0].mxu0
    %v2150 = vadd.f32 %v899, %v2149
    %2151 = vmatprep.mubr.bf16.mxu0 %v562
    %2152 = vmatmul.mubr.bf16.gmra.mrb[0].mxu0 %v561
    %v2153 = vpop.f32.mrb[0].mxu0
    %v2154 = vadd.f32 %v895, %v2153
    %v2155 = vpop.f32.mrb[0].mxu0
    %v2156 = vadd.f32 %v899, %v2155
    %v2157 = vpop.f32.mrb[0].mxu0
    %v2158 = vadd.f32 %v895, %v2157
    %v2159 = vpop.f32.mrb[0].mxu0
    %v2160 = vadd.f32 %v899, %v2159
    %2161 = vmatprep.mubr.bf16.mxu0 %v569
    %2162 = vmatmul.mubr.bf16.gmra.mrb[0].mxu0 %v568
    %v2163 = vpop.f32.mrb[0].mxu0
    %v2164 = vadd.f32 %v895, %v2163
    %v2165 = vpop.f32.mrb[0].mxu0
    %v2166 = vadd.f32 %v899, %v2165
    %v2167 = vpop.f32.mrb[0].mxu0
    %v2168 = vadd.f32 %v895, %v2167
    %v2169 = vpop.f32.mrb[0].mxu0
    %v2170 = vadd.f32 %v899, %v2169
    %2171 = vmatprep.mubr.bf16.mxu0 %v576
    %2172 = vmatmul.mubr.bf16.gmra.mrb[0].mxu0 %v575
    %v2173 = vpop.f32.mrb[0].mxu0
    %v2174 = vadd.f32 %v895, %v2173
    %v2175 = vpop.f32.mrb[0].mxu0
    %v2176 = vadd.f32 %v899, %v2175
    %v2177 = vpop.f32.mrb[0].mxu0
    %v2178 = vadd.f32 %v895, %v2177
    %v2179 = vpop.f32.mrb[0].mxu0
    %v2180 = vadd.f32 %v899, %v2179
    %2181 = vmatprep.mubr.bf16.mxu0 %v583
    %2182 = vmatmul.mubr.bf16.gmra.mrb[0].mxu0 %v582
    %v2183 = vpop.f32.mrb[0].mxu0
    %v2184 = vadd.f32 %v895, %v2183
    %v2185 = vpop.f32.mrb[0].mxu0
    %v2186 = vadd.f32 %v899, %v2185
    %v2187 = vpop.f32.mrb[0].mxu0
    %v2188 = vadd.f32 %v895, %v2187
    %v2189 = vpop.f32.mrb[0].mxu0
    %v2190 = vadd.f32 %v899, %v2189
    %2191 = vmatprep.mubr.bf16.mxu0 %v590
    %2192 = vmatmul.mubr.bf16.gmra.mrb[0].mxu0 %v589
    %v2193 = vpop.f32.mrb[0].mxu0
    %v2194 = vadd.f32 %v895, %v2193
    %v2195 = vpop.f32.mrb[0].mxu0
    %v2196 = vadd.f32 %v899, %v2195
    %v2197 = vpop.f32.mrb[0].mxu0
    %v2198 = vadd.f32 %v895, %v2197
    %v2199 = vpop.f32.mrb[0].mxu0
    %v2200 = vadd.f32 %v899, %v2199
    %2201 = vmatprep.mubr.bf16.mxu0 %v597
    %2202 = vmatmul.mubr.bf16.gmra.mrb[0].mxu0 %v596
    %v2203 = vpop.f32.mrb[0].mxu0
    %v2204 = vadd.f32 %v895, %v2203
    %v2205 = vpop.f32.mrb[0].mxu0
    %v2206 = vadd.f32 %v899, %v2205
    %v2207 = vpop.f32.mrb[0].mxu0
    %v2208 = vadd.f32 %v895, %v2207
    %v2209 = vpop.f32.mrb[0].mxu0
    %v2210 = vadd.f32 %v899, %v2209
    %2211 = vmatprep.mubr.bf16.mxu0 %v604
    %2212 = vmatmul.mubr.bf16.gmra.mrb[0].mxu0 %v603
    %v2213 = vpop.f32.mrb[0].mxu0
    %v2214 = vadd.f32 %v895, %v2213
    %v2215 = vpop.f32.mrb[0].mxu0
    %v2216 = vadd.f32 %v899, %v2215
    %v2217 = vpop.f32.mrb[0].mxu0
    %v2218 = vadd.f32 %v895, %v2217
    %v2219 = vpop.f32.mrb[0].mxu0
    %v2220 = vadd.f32 %v899, %v2219
    %2221 = vmatprep.mubr.bf16.mxu0 %v611
    %2222 = vmatmul.mubr.bf16.gmra.mrb[0].mxu0 %v610
    %v2223 = vpop.f32.mrb[0].mxu0
    %v2224 = vadd.f32 %v895, %v2223
    %v2225 = vpop.f32.mrb[0].mxu0
    %v2226 = vadd.f32 %v899, %v2225
    %v2227 = vpop.f32.mrb[0].mxu0
    %v2228 = vadd.f32 %v895, %v2227
    %v2229 = vpop.f32.mrb[0].mxu0
    %v2230 = vadd.f32 %v899, %v2229
    %2231 = vmatprep.mubr.bf16.mxu0 %v618
    %2232 = vmatmul.mubr.bf16.gmra.mrb[0].mxu0 %v617
    %v2233 = vpop.f32.mrb[0].mxu0
    %v2234 = vadd.f32 %v895, %v2233
    %v2235 = vpop.f32.mrb[0].mxu0
    %v2236 = vadd.f32 %v899, %v2235
    %v2237 = vpop.f32.mrb[0].mxu0
    %v2238 = vadd.f32 %v895, %v2237
    %v2239 = vpop.f32.mrb[0].mxu0
    %v2240 = vadd.f32 %v899, %v2239
    %2241 = vmatprep.mubr.bf16.mxu0 %v625
    %2242 = vmatmul.mubr.bf16.gmra.mrb[0].mxu0 %v624
    %v2243 = vpop.f32.mrb[0].mxu0
    %v2244 = vadd.f32 %v895, %v2243
    %v2245 = vpop.f32.mrb[0].mxu0
    %v2246 = vadd.f32 %v899, %v2245
    %v2247 = vpop.f32.mrb[0].mxu0
    %v2248 = vadd.f32 %v895, %v2247
    %v2249 = vpop.f32.mrb[0].mxu0
    %v2250 = vadd.f32 %v899, %v2249
    %2251 = vmatprep.mubr.bf16.mxu0 %v632
    %2252 = vmatmul.mubr.bf16.gmra.mrb[0].mxu0 %v631
    %v2253 = vpop.f32.mrb[0].mxu0
    %v2254 = vadd.f32 %v895, %v2253
    %v2255 = vpop.f32.mrb[0].mxu0
    %v2256 = vadd.f32 %v899, %v2255
    %v2257 = vpop.f32.mrb[0].mxu0
    %v2258 = vadd.f32 %v895, %v2257
    %v2259 = vpop.f32.mrb[0].mxu0
    %v2260 = vadd.f32 %v899, %v2259
    %2261 = vmatprep.mubr.bf16.mxu0 %v639
    %2262 = vmatmul.mubr.bf16.gmra.mrb[0].mxu0 %v638
    %v2263 = vpop.f32.mrb[0].mxu0
    %v2264 = vadd.f32 %v895, %v2263
    %v2265 = vpop.f32.mrb[0].mxu0
    %v2266 = vadd.f32 %v899, %v2265
    %v2267 = vpop.f32.mrb[0].mxu0
    %v2268 = vadd.f32 %v895, %v2267
    %v2269 = vpop.f32.mrb[0].mxu0
    %v2270 = vadd.f32 %v899, %v2269
    %2271 = vmatprep.mubr.bf16.mxu0 %v646
    %2272 = vmatmul.mubr.bf16.gmra.mrb[0].mxu0 %v645
    %v2273 = vpop.f32.mrb[0].mxu0
    %v2274 = vadd.f32 %v895, %v2273
    %v2275 = vpop.f32.mrb[0].mxu0
    %v2276 = vadd.f32 %v899, %v2275
    %v2277 = vpop.f32.mrb[0].mxu0
    %v2278 = vadd.f32 %v895, %v2277
    %v2279 = vpop.f32.mrb[0].mxu0
    %v2280 = vadd.f32 %v899, %v2279
    %2281 = vmatprep.mubr.bf16.mxu0 %v653
    %2282 = vmatmul.mubr.bf16.gmra.mrb[0].mxu0 %v652
    %v2283 = vpop.f32.mrb[0].mxu0
    %v2284 = vadd.f32 %v895, %v2283
    %v2285 = vpop.f32.mrb[0].mxu0
    %v2286 = vadd.f32 %v899, %v2285
    %v2287 = vpop.f32.mrb[0].mxu0
    %v2288 = vadd.f32 %v895, %v2287
    %v2289 = vpop.f32.mrb[0].mxu0
    %v2290 = vadd.f32 %v899, %v2289
    %2291 = vmatprep.mubr.bf16.mxu0 %v660
    %2292 = vmatmul.mubr.bf16.gmra.mrb[0].mxu0 %v659
    %v2293 = vpop.f32.mrb[0].mxu0
    %v2294 = vadd.f32 %v895, %v2293
    %v2295 = vpop.f32.mrb[0].mxu0
    %v2296 = vadd.f32 %v899, %v2295
    %v2297 = vpop.f32.mrb[0].mxu0
    %v2298 = vadd.f32 %v895, %v2297
    %v2299 = vpop.f32.mrb[0].mxu0
    %v2300 = vadd.f32 %v899, %v2299
    %2301 = vmatprep.mubr.bf16.mxu0 %v667
    %2302 = vmatmul.mubr.bf16.gmra.mrb[0].mxu0 %v666
    %v2303 = vpop.f32.mrb[0].mxu0
    %v2304 = vadd.f32 %v895, %v2303
    %v2305 = vpop.f32.mrb[0].mxu0
    %v2306 = vadd.f32 %v899, %v2305
    %v2307 = vpop.f32.mrb[0].mxu0
    %v2308 = vadd.f32 %v895, %v2307
    %v2309 = vpop.f32.mrb[0].mxu0
    %v2310 = vadd.f32 %v899, %v2309
    %2311 = vmatprep.mubr.bf16.mxu0 %v674
    %2312 = vmatmul.mubr.bf16.gmra.mrb[0].mxu0 %v673
    %v2313 = vpop.f32.mrb[0].mxu0
    %v2314 = vadd.f32 %v895, %v2313
    %v2315 = vpop.f32.mrb[0].mxu0
    %v2316 = vadd.f32 %v899, %v2315
    %v2317 = vpop.f32.mrb[0].mxu0
    %v2318 = vadd.f32 %v895, %v2317
    %v2319 = vpop.f32.mrb[0].mxu0
    %v2320 = vadd.f32 %v899, %v2319
    %2321 = vmatprep.mubr.bf16.mxu0 %v681
    %2322 = vmatmul.mubr.bf16.gmra.mrb[0].mxu0 %v680
    %v2323 = vpop.f32.mrb[0].mxu0
    %v2324 = vadd.f32 %v895, %v2323
    %v2325 = vpop.f32.mrb[0].mxu0
    %v2326 = vadd.f32 %v899, %v2325
    %v2327 = vpop.f32.mrb[0].mxu0
    %v2328 = vadd.f32 %v895, %v2327
    %v2329 = vpop.f32.mrb[0].mxu0
    %v2330 = vadd.f32 %v899, %v2329
    %2331 = vmatprep.mubr.bf16.mxu0 %v688
    %2332 = vmatmul.mubr.bf16.gmra.mrb[0].mxu0 %v687
    %v2333 = vpop.f32.mrb[0].mxu0
    %v2334 = vadd.f32 %v895, %v2333
    %v2335 = vpop.f32.mrb[0].mxu0
    %v2336 = vadd.f32 %v899, %v2335
    %v2337 = vpop.f32.mrb[0].mxu0
    %v2338 = vadd.f32 %v895, %v2337
    %v2339 = vpop.f32.mrb[0].mxu0
    %v2340 = vadd.f32 %v899, %v2339
    %2341 = vdwg.mxu0
    %2342 = vmatprep.subr.bf16.mxu0 %v1565
    %2343 = vmatpush1.bf16.msra.mxu0 %v1564
    %2344 = vmatprep.subr.bf16.mxu0 %v1569
    %2345 = vmatpush1.bf16.msra.mxu0 %v1568
    %2346 = vmatprep.subr.bf16.mxu0 %v1573
    %2347 = vmatpush1.bf16.msra.mxu0 %v1572
    %2348 = vmatprep.subr.bf16.mxu0 %v1577
    %2349 = vmatpush1.bf16.msra.mxu0 %v1576
    %2350 = vmatprep.subr.bf16.mxu0 %v1581
    %2351 = vmatpush1.bf16.msra.mxu0 %v1580
    %2352 = vmatprep.subr.bf16.mxu0 %v1585
    %2353 = vmatpush1.bf16.msra.mxu0 %v1584
    %2354 = vmatprep.subr.bf16.mxu0 %v1589
    %2355 = vmatpush1.bf16.msra.mxu0 %v1588
    %2356 = vmatprep.subr.bf16.mxu0 %v1593
    %2357 = vmatpush1.bf16.msra.mxu0 %v1592
    %2358 = vmatprep.subr.bf16.mxu0 %v1597
    %2359 = vmatpush1.bf16.msra.mxu0 %v1596
    %2360 = vmatprep.subr.bf16.mxu0 %v1601
    %2361 = vmatpush1.bf16.msra.mxu0 %v1600
    %2362 = vmatprep.subr.bf16.mxu0 %v1605
    %2363 = vmatpush1.bf16.msra.mxu0 %v1604
    %2364 = vmatprep.subr.bf16.mxu0 %v1609
    %2365 = vmatpush1.bf16.msra.mxu0 %v1608
    %2366 = vmatprep.subr.bf16.mxu0 %v1613
    %2367 = vmatpush1.bf16.msra.mxu0 %v1612
    %2368 = vmatprep.subr.bf16.mxu0 %v1617
    %2369 = vmatpush1.bf16.msra.mxu0 %v1616
    %2370 = vmatprep.subr.bf16.mxu0 %v1621
    %2371 = vmatpush1.bf16.msra.mxu0 %v1620
    %2372 = vmatprep.subr.bf16.mxu0 %v1625
    %2373 = vmatpush1.bf16.msra.mxu0 %v1624
    %2374 = vmatprep.mubr.bf16.mxu0 %v473
    %2375 = vmatmul.mubr.bf16.gmra.mrb[0].mxu0 %v472
    %v2376 = vpop.f32.mrb[0].mxu0
    %v2377 = vadd.f32 %v2024, %v2376
    %v2378 = vpop.f32.mrb[0].mxu0
    %v2379 = vadd.f32 %v2026, %v2378
    %v2380 = vpop.f32.mrb[0].mxu0
    %v2381 = vadd.f32 %v2028, %v2380
    %v2382 = vpop.f32.mrb[0].mxu0
    %v2383 = vadd.f32 %v2030, %v2382
    %2384 = vmatprep.mubr.bf16.mxu0 %v480
    %2385 = vmatmul.mubr.bf16.gmra.mrb[0].mxu0 %v479
    %v2386 = vpop.f32.mrb[0].mxu0
    %v2387 = vadd.f32 %v2034, %v2386
    %v2388 = vpop.f32.mrb[0].mxu0
    %v2389 = vadd.f32 %v2036, %v2388
    %v2390 = vpop.f32.mrb[0].mxu0
    %v2391 = vadd.f32 %v2038, %v2390
    %v2392 = vpop.f32.mrb[0].mxu0
    %v2393 = vadd.f32 %v2040, %v2392
    %2394 = vmatprep.mubr.bf16.mxu0 %v487
    %2395 = vmatmul.mubr.bf16.gmra.mrb[0].mxu0 %v486
    %v2396 = vpop.f32.mrb[0].mxu0
    %v2397 = vadd.f32 %v2044, %v2396
    %v2398 = vpop.f32.mrb[0].mxu0
    %v2399 = vadd.f32 %v2046, %v2398
    %v2400 = vpop.f32.mrb[0].mxu0
    %v2401 = vadd.f32 %v2048, %v2400
    %v2402 = vpop.f32.mrb[0].mxu0
    %v2403 = vadd.f32 %v2050, %v2402
    %2404 = vmatprep.mubr.bf16.mxu0 %v494
    %2405 = vmatmul.mubr.bf16.gmra.mrb[0].mxu0 %v493
    %v2406 = vpop.f32.mrb[0].mxu0
    %v2407 = vadd.f32 %v2054, %v2406
    %v2408 = vpop.f32.mrb[0].mxu0
    %v2409 = vadd.f32 %v2056, %v2408
    %v2410 = vpop.f32.mrb[0].mxu0
    %v2411 = vadd.f32 %v2058, %v2410
    %v2412 = vpop.f32.mrb[0].mxu0
    %v2413 = vadd.f32 %v2060, %v2412
    %2414 = vmatprep.mubr.bf16.mxu0 %v501
    %2415 = vmatmul.mubr.bf16.gmra.mrb[0].mxu0 %v500
    %v2416 = vpop.f32.mrb[0].mxu0
    %v2417 = vadd.f32 %v2064, %v2416
    %v2418 = vpop.f32.mrb[0].mxu0
    %v2419 = vadd.f32 %v2066, %v2418
    %v2420 = vpop.f32.mrb[0].mxu0
    %v2421 = vadd.f32 %v2068, %v2420
    %v2422 = vpop.f32.mrb[0].mxu0
    %v2423 = vadd.f32 %v2070, %v2422
    %2424 = vmatprep.mubr.bf16.mxu0 %v508
    %2425 = vmatmul.mubr.bf16.gmra.mrb[0].mxu0 %v507
    %v2426 = vpop.f32.mrb[0].mxu0
    %v2427 = vadd.f32 %v2074, %v2426
    %v2428 = vpop.f32.mrb[0].mxu0
    %v2429 = vadd.f32 %v2076, %v2428
    %v2430 = vpop.f32.mrb[0].mxu0
    %v2431 = vadd.f32 %v2078, %v2430
    %v2432 = vpop.f32.mrb[0].mxu0
    %v2433 = vadd.f32 %v2080, %v2432
    %2434 = vmatprep.mubr.bf16.mxu0 %v515
    %2435 = vmatmul.mubr.bf16.gmra.mrb[0].mxu0 %v514
    %v2436 = vpop.f32.mrb[0].mxu0
    %v2437 = vadd.f32 %v2084, %v2436
    %v2438 = vpop.f32.mrb[0].mxu0
    %v2439 = vadd.f32 %v2086, %v2438
    %v2440 = vpop.f32.mrb[0].mxu0
    %v2441 = vadd.f32 %v2088, %v2440
    %v2442 = vpop.f32.mrb[0].mxu0
    %v2443 = vadd.f32 %v2090, %v2442
    %2444 = vmatprep.mubr.bf16.mxu0 %v522
    %2445 = vmatmul.mubr.bf16.gmra.mrb[0].mxu0 %v521
    %v2446 = vpop.f32.mrb[0].mxu0
    %v2447 = vadd.f32 %v2094, %v2446
    %v2448 = vpop.f32.mrb[0].mxu0
    %v2449 = vadd.f32 %v2096, %v2448
    %v2450 = vpop.f32.mrb[0].mxu0
    %v2451 = vadd.f32 %v2098, %v2450
    %v2452 = vpop.f32.mrb[0].mxu0
    %v2453 = vadd.f32 %v2100, %v2452
    %2454 = vmatprep.mubr.bf16.mxu0 %v529
    %2455 = vmatmul.mubr.bf16.gmra.mrb[0].mxu0 %v528
    %v2456 = vpop.f32.mrb[0].mxu0
    %v2457 = vadd.f32 %v2104, %v2456
    %v2458 = vpop.f32.mrb[0].mxu0
    %v2459 = vadd.f32 %v2106, %v2458
    %v2460 = vpop.f32.mrb[0].mxu0
    %v2461 = vadd.f32 %v2108, %v2460
    %v2462 = vpop.f32.mrb[0].mxu0
    %v2463 = vadd.f32 %v2110, %v2462
    %2464 = vmatprep.mubr.bf16.mxu0 %v536
    %2465 = vmatmul.mubr.bf16.gmra.mrb[0].mxu0 %v535
    %v2466 = vpop.f32.mrb[0].mxu0
    %v2467 = vadd.f32 %v2114, %v2466
    %v2468 = vpop.f32.mrb[0].mxu0
    %v2469 = vadd.f32 %v2116, %v2468
    %v2470 = vpop.f32.mrb[0].mxu0
    %v2471 = vadd.f32 %v2118, %v2470
    %v2472 = vpop.f32.mrb[0].mxu0
    %v2473 = vadd.f32 %v2120, %v2472
    %2474 = vmatprep.mubr.bf16.mxu0 %v543
    %2475 = vmatmul.mubr.bf16.gmra.mrb[0].mxu0 %v542
    %v2476 = vpop.f32.mrb[0].mxu0
    %v2477 = vadd.f32 %v2124, %v2476
    %v2478 = vpop.f32.mrb[0].mxu0
    %v2479 = vadd.f32 %v2126, %v2478
    %v2480 = vpop.f32.mrb[0].mxu0
    %v2481 = vadd.f32 %v2128, %v2480
    %v2482 = vpop.f32.mrb[0].mxu0
    %v2483 = vadd.f32 %v2130, %v2482
    %2484 = vmatprep.mubr.bf16.mxu0 %v550
    %2485 = vmatmul.mubr.bf16.gmra.mrb[0].mxu0 %v549
    %v2486 = vpop.f32.mrb[0].mxu0
    %v2487 = vadd.f32 %v2134, %v2486
    %v2488 = vpop.f32.mrb[0].mxu0
    %v2489 = vadd.f32 %v2136, %v2488
    %v2490 = vpop.f32.mrb[0].mxu0
    %v2491 = vadd.f32 %v2138, %v2490
    %v2492 = vpop.f32.mrb[0].mxu0
    %v2493 = vadd.f32 %v2140, %v2492
    %2494 = vmatprep.mubr.bf16.mxu0 %v557
    %2495 = vmatmul.mubr.bf16.gmra.mrb[0].mxu0 %v556
    %v2496 = vpop.f32.mrb[0].mxu0
    %v2497 = vadd.f32 %v2144, %v2496
    %v2498 = vpop.f32.mrb[0].mxu0
    %v2499 = vadd.f32 %v2146, %v2498
    %v2500 = vpop.f32.mrb[0].mxu0
    %v2501 = vadd.f32 %v2148, %v2500
    %v2502 = vpop.f32.mrb[0].mxu0
    %v2503 = vadd.f32 %v2150, %v2502
    %2504 = vmatprep.mubr.bf16.mxu0 %v564
    %2505 = vmatmul.mubr.bf16.gmra.mrb[0].mxu0 %v563
    %v2506 = vpop.f32.mrb[0].mxu0
    %v2507 = vadd.f32 %v2154, %v2506
    %v2508 = vpop.f32.mrb[0].mxu0
    %v2509 = vadd.f32 %v2156, %v2508
    %v2510 = vpop.f32.mrb[0].mxu0
    %v2511 = vadd.f32 %v2158, %v2510
    %v2512 = vpop.f32.mrb[0].mxu0
    %v2513 = vadd.f32 %v2160, %v2512
    %2514 = vmatprep.mubr.bf16.mxu0 %v571
    %2515 = vmatmul.mubr.bf16.gmra.mrb[0].mxu0 %v570
    %v2516 = vpop.f32.mrb[0].mxu0
    %v2517 = vadd.f32 %v2164, %v2516
    %v2518 = vpop.f32.mrb[0].mxu0
    %v2519 = vadd.f32 %v2166, %v2518
    %v2520 = vpop.f32.mrb[0].mxu0
    %v2521 = vadd.f32 %v2168, %v2520
    %v2522 = vpop.f32.mrb[0].mxu0
    %v2523 = vadd.f32 %v2170, %v2522
    %2524 = vmatprep.mubr.bf16.mxu0 %v578
    %2525 = vmatmul.mubr.bf16.gmra.mrb[0].mxu0 %v577
    %v2526 = vpop.f32.mrb[0].mxu0
    %v2527 = vadd.f32 %v2174, %v2526
    %v2528 = vpop.f32.mrb[0].mxu0
    %v2529 = vadd.f32 %v2176, %v2528
    %v2530 = vpop.f32.mrb[0].mxu0
    %v2531 = vadd.f32 %v2178, %v2530
    %v2532 = vpop.f32.mrb[0].mxu0
    %v2533 = vadd.f32 %v2180, %v2532
    %2534 = vmatprep.mubr.bf16.mxu0 %v585
    %2535 = vmatmul.mubr.bf16.gmra.mrb[0].mxu0 %v584
    %v2536 = vpop.f32.mrb[0].mxu0
    %v2537 = vadd.f32 %v2184, %v2536
    %v2538 = vpop.f32.mrb[0].mxu0
    %v2539 = vadd.f32 %v2186, %v2538
    %v2540 = vpop.f32.mrb[0].mxu0
    %v2541 = vadd.f32 %v2188, %v2540
    %v2542 = vpop.f32.mrb[0].mxu0
    %v2543 = vadd.f32 %v2190, %v2542
    %2544 = vmatprep.mubr.bf16.mxu0 %v592
    %2545 = vmatmul.mubr.bf16.gmra.mrb[0].mxu0 %v591
    %v2546 = vpop.f32.mrb[0].mxu0
    %v2547 = vadd.f32 %v2194, %v2546
    %v2548 = vpop.f32.mrb[0].mxu0
    %v2549 = vadd.f32 %v2196, %v2548
    %v2550 = vpop.f32.mrb[0].mxu0
    %v2551 = vadd.f32 %v2198, %v2550
    %v2552 = vpop.f32.mrb[0].mxu0
    %v2553 = vadd.f32 %v2200, %v2552
    %2554 = vmatprep.mubr.bf16.mxu0 %v599
    %2555 = vmatmul.mubr.bf16.gmra.mrb[0].mxu0 %v598
    %v2556 = vpop.f32.mrb[0].mxu0
    %v2557 = vadd.f32 %v2204, %v2556
    %v2558 = vpop.f32.mrb[0].mxu0
    %v2559 = vadd.f32 %v2206, %v2558
    %v2560 = vpop.f32.mrb[0].mxu0
    %v2561 = vadd.f32 %v2208, %v2560
    %v2562 = vpop.f32.mrb[0].mxu0
    %v2563 = vadd.f32 %v2210, %v2562
    %2564 = vmatprep.mubr.bf16.mxu0 %v606
    %2565 = vmatmul.mubr.bf16.gmra.mrb[0].mxu0 %v605
    %v2566 = vpop.f32.mrb[0].mxu0
    %v2567 = vadd.f32 %v2214, %v2566
    %v2568 = vpop.f32.mrb[0].mxu0
    %v2569 = vadd.f32 %v2216, %v2568
    %v2570 = vpop.f32.mrb[0].mxu0
    %v2571 = vadd.f32 %v2218, %v2570
    %v2572 = vpop.f32.mrb[0].mxu0
    %v2573 = vadd.f32 %v2220, %v2572
    %2574 = vmatprep.mubr.bf16.mxu0 %v613
    %2575 = vmatmul.mubr.bf16.gmra.mrb[0].mxu0 %v612
    %v2576 = vpop.f32.mrb[0].mxu0
    %v2577 = vadd.f32 %v2224, %v2576
    %v2578 = vpop.f32.mrb[0].mxu0
    %v2579 = vadd.f32 %v2226, %v2578
    %v2580 = vpop.f32.mrb[0].mxu0
    %v2581 = vadd.f32 %v2228, %v2580
    %v2582 = vpop.f32.mrb[0].mxu0
    %v2583 = vadd.f32 %v2230, %v2582
    %2584 = vmatprep.mubr.bf16.mxu0 %v620
    %2585 = vmatmul.mubr.bf16.gmra.mrb[0].mxu0 %v619
    %v2586 = vpop.f32.mrb[0].mxu0
    %v2587 = vadd.f32 %v2234, %v2586
    %v2588 = vpop.f32.mrb[0].mxu0
    %v2589 = vadd.f32 %v2236, %v2588
    %v2590 = vpop.f32.mrb[0].mxu0
    %v2591 = vadd.f32 %v2238, %v2590
    %v2592 = vpop.f32.mrb[0].mxu0
    %v2593 = vadd.f32 %v2240, %v2592
    %2594 = vmatprep.mubr.bf16.mxu0 %v627
    %2595 = vmatmul.mubr.bf16.gmra.mrb[0].mxu0 %v626
    %v2596 = vpop.f32.mrb[0].mxu0
    %v2597 = vadd.f32 %v2244, %v2596
    %v2598 = vpop.f32.mrb[0].mxu0
    %v2599 = vadd.f32 %v2246, %v2598
    %v2600 = vpop.f32.mrb[0].mxu0
    %v2601 = vadd.f32 %v2248, %v2600
    %v2602 = vpop.f32.mrb[0].mxu0
    %v2603 = vadd.f32 %v2250, %v2602
    %2604 = vmatprep.mubr.bf16.mxu0 %v634
    %2605 = vmatmul.mubr.bf16.gmra.mrb[0].mxu0 %v633
    %v2606 = vpop.f32.mrb[0].mxu0
    %v2607 = vadd.f32 %v2254, %v2606
    %v2608 = vpop.f32.mrb[0].mxu0
    %v2609 = vadd.f32 %v2256, %v2608
    %v2610 = vpop.f32.mrb[0].mxu0
    %v2611 = vadd.f32 %v2258, %v2610
    %v2612 = vpop.f32.mrb[0].mxu0
    %v2613 = vadd.f32 %v2260, %v2612
    %2614 = vmatprep.mubr.bf16.mxu0 %v641
    %2615 = vmatmul.mubr.bf16.gmra.mrb[0].mxu0 %v640
    %v2616 = vpop.f32.mrb[0].mxu0
    %v2617 = vadd.f32 %v2264, %v2616
    %v2618 = vpop.f32.mrb[0].mxu0
    %v2619 = vadd.f32 %v2266, %v2618
    %v2620 = vpop.f32.mrb[0].mxu0
    %v2621 = vadd.f32 %v2268, %v2620
    %v2622 = vpop.f32.mrb[0].mxu0
    %v2623 = vadd.f32 %v2270, %v2622
    %2624 = vmatprep.mubr.bf16.mxu0 %v648
    %2625 = vmatmul.mubr.bf16.gmra.mrb[0].mxu0 %v647
    %v2626 = vpop.f32.mrb[0].mxu0
    %v2627 = vadd.f32 %v2274, %v2626
    %v2628 = vpop.f32.mrb[0].mxu0
    %v2629 = vadd.f32 %v2276, %v2628
    %v2630 = vpop.f32.mrb[0].mxu0
    %v2631 = vadd.f32 %v2278, %v2630
    %v2632 = vpop.f32.mrb[0].mxu0
    %v2633 = vadd.f32 %v2280, %v2632
    %2634 = vmatprep.mubr.bf16.mxu0 %v655
    %2635 = vmatmul.mubr.bf16.gmra.mrb[0].mxu0 %v654
    %v2636 = vpop.f32.mrb[0].mxu0
    %v2637 = vadd.f32 %v2284, %v2636
    %v2638 = vpop.f32.mrb[0].mxu0
    %v2639 = vadd.f32 %v2286, %v2638
    %v2640 = vpop.f32.mrb[0].mxu0
    %v2641 = vadd.f32 %v2288, %v2640
    %v2642 = vpop.f32.mrb[0].mxu0
    %v2643 = vadd.f32 %v2290, %v2642
    %2644 = vmatprep.mubr.bf16.mxu0 %v662
    %2645 = vmatmul.mubr.bf16.gmra.mrb[0].mxu0 %v661
    %v2646 = vpop.f32.mrb[0].mxu0
    %v2647 = vadd.f32 %v2294, %v2646
    %v2648 = vpop.f32.mrb[0].mxu0
    %v2649 = vadd.f32 %v2296, %v2648
    %v2650 = vpop.f32.mrb[0].mxu0
    %v2651 = vadd.f32 %v2298, %v2650
    %v2652 = vpop.f32.mrb[0].mxu0
    %v2653 = vadd.f32 %v2300, %v2652
    %2654 = vmatprep.mubr.bf16.mxu0 %v669
    %2655 = vmatmul.mubr.bf16.gmra.mrb[0].mxu0 %v668
    %v2656 = vpop.f32.mrb[0].mxu0
    %v2657 = vadd.f32 %v2304, %v2656
    %v2658 = vpop.f32.mrb[0].mxu0
    %v2659 = vadd.f32 %v2306, %v2658
    %v2660 = vpop.f32.mrb[0].mxu0
    %v2661 = vadd.f32 %v2308, %v2660
    %v2662 = vpop.f32.mrb[0].mxu0
    %v2663 = vadd.f32 %v2310, %v2662
    %2664 = vmatprep.mubr.bf16.mxu0 %v676
    %2665 = vmatmul.mubr.bf16.gmra.mrb[0].mxu0 %v675
    %v2666 = vpop.f32.mrb[0].mxu0
    %v2667 = vadd.f32 %v2314, %v2666
    %v2668 = vpop.f32.mrb[0].mxu0
    %v2669 = vadd.f32 %v2316, %v2668
    %v2670 = vpop.f32.mrb[0].mxu0
    %v2671 = vadd.f32 %v2318, %v2670
    %v2672 = vpop.f32.mrb[0].mxu0
    %v2673 = vadd.f32 %v2320, %v2672
    %2674 = vmatprep.mubr.bf16.mxu0 %v683
    %2675 = vmatmul.mubr.bf16.gmra.mrb[0].mxu0 %v682
    %v2676 = vpop.f32.mrb[0].mxu0
    %v2677 = vadd.f32 %v2324, %v2676
    %v2678 = vpop.f32.mrb[0].mxu0
    %v2679 = vadd.f32 %v2326, %v2678
    %v2680 = vpop.f32.mrb[0].mxu0
    %v2681 = vadd.f32 %v2328, %v2680
    %v2682 = vpop.f32.mrb[0].mxu0
    %v2683 = vadd.f32 %v2330, %v2682
    %2684 = vmatprep.mubr.bf16.mxu0 %v690
    %2685 = vmatmul.mubr.bf16.gmra.mrb[0].mxu0 %v689
    %v2686 = vpop.f32.mrb[0].mxu0
    %v2687 = vadd.f32 %v2334, %v2686
    %v2688 = vpop.f32.mrb[0].mxu0
    %v2689 = vadd.f32 %v2336, %v2688
    %v2690 = vpop.f32.mrb[0].mxu0
    %v2691 = vadd.f32 %v2338, %v2690
    %v2692 = vpop.f32.mrb[0].mxu0
    %v2693 = vadd.f32 %v2340, %v2692
    %2694 = vdwg.mxu0
    %2695 = vmatprep.subr.bf16.mxu0 %v1629
    %2696 = vmatpush1.bf16.msra.mxu0 %v1628
    %2697 = vmatprep.subr.bf16.mxu0 %v1633
    %2698 = vmatpush1.bf16.msra.mxu0 %v1632
    %2699 = vmatprep.subr.bf16.mxu0 %v1637
    %2700 = vmatpush1.bf16.msra.mxu0 %v1636
    %2701 = vmatprep.subr.bf16.mxu0 %v1641
    %2702 = vmatpush1.bf16.msra.mxu0 %v1640
    %2703 = vmatprep.subr.bf16.mxu0 %v1645
    %2704 = vmatpush1.bf16.msra.mxu0 %v1644
    %2705 = vmatprep.subr.bf16.mxu0 %v1649
    %2706 = vmatpush1.bf16.msra.mxu0 %v1648
    %2707 = vmatprep.subr.bf16.mxu0 %v1653
    %2708 = vmatpush1.bf16.msra.mxu0 %v1652
    %2709 = vmatprep.subr.bf16.mxu0 %v1657
    %2710 = vmatpush1.bf16.msra.mxu0 %v1656
    %2711 = vmatprep.subr.bf16.mxu0 %v1661
    %2712 = vmatpush1.bf16.msra.mxu0 %v1660
    %2713 = vmatprep.subr.bf16.mxu0 %v1665
    %2714 = vmatpush1.bf16.msra.mxu0 %v1664
    %2715 = vmatprep.subr.bf16.mxu0 %v1669
    %2716 = vmatpush1.bf16.msra.mxu0 %v1668
    %2717 = vmatprep.subr.bf16.mxu0 %v1673
    %2718 = vmatpush1.bf16.msra.mxu0 %v1672
    %2719 = vmatprep.subr.bf16.mxu0 %v1677
    %2720 = vmatpush1.bf16.msra.mxu0 %v1676
    %2721 = vmatprep.subr.bf16.mxu0 %v1681
    %2722 = vmatpush1.bf16.msra.mxu0 %v1680
    %2723 = vmatprep.subr.bf16.mxu0 %v1685
    %2724 = vmatpush1.bf16.msra.mxu0 %v1684
    %2725 = vmatprep.subr.bf16.mxu0 %v1689
    %2726 = vmatpush1.bf16.msra.mxu0 %v1688
    %2727 = vmatprep.mubr.bf16.mxu0 %v475
    %2728 = vmatmul.mubr.bf16.gmra.mrb[0].mxu0 %v474
    %v2729 = vpop.f32.mrb[0].mxu0
    %v2730 = vadd.f32 %v2377, %v2729
    %v2731 = vpop.f32.mrb[0].mxu0
    %v2732 = vadd.f32 %v2379, %v2731
    %v2733 = vpop.f32.mrb[0].mxu0
    %v2734 = vadd.f32 %v2381, %v2733
    %v2735 = vpop.f32.mrb[0].mxu0
    %v2736 = vadd.f32 %v2383, %v2735
    %2737 = vmatprep.mubr.bf16.mxu0 %v482
    %2738 = vmatmul.mubr.bf16.gmra.mrb[0].mxu0 %v481
    %v2739 = vpop.f32.mrb[0].mxu0
    %v2740 = vadd.f32 %v2387, %v2739
    %v2741 = vpop.f32.mrb[0].mxu0
    %v2742 = vadd.f32 %v2389, %v2741
    %v2743 = vpop.f32.mrb[0].mxu0
    %v2744 = vadd.f32 %v2391, %v2743
    %v2745 = vpop.f32.mrb[0].mxu0
    %v2746 = vadd.f32 %v2393, %v2745
    %2747 = vmatprep.mubr.bf16.mxu0 %v489
    %2748 = vmatmul.mubr.bf16.gmra.mrb[0].mxu0 %v488
    %v2749 = vpop.f32.mrb[0].mxu0
    %v2750 = vadd.f32 %v2397, %v2749
    %v2751 = vpop.f32.mrb[0].mxu0
    %v2752 = vadd.f32 %v2399, %v2751
    %v2753 = vpop.f32.mrb[0].mxu0
    %v2754 = vadd.f32 %v2401, %v2753
    %v2755 = vpop.f32.mrb[0].mxu0
    %v2756 = vadd.f32 %v2403, %v2755
    %2757 = vmatprep.mubr.bf16.mxu0 %v496
    %2758 = vmatmul.mubr.bf16.gmra.mrb[0].mxu0 %v495
    %v2759 = vpop.f32.mrb[0].mxu0
    %v2760 = vadd.f32 %v2407, %v2759
    %v2761 = vpop.f32.mrb[0].mxu0
    %v2762 = vadd.f32 %v2409, %v2761
    %v2763 = vpop.f32.mrb[0].mxu0
    %v2764 = vadd.f32 %v2411, %v2763
    %v2765 = vpop.f32.mrb[0].mxu0
    %v2766 = vadd.f32 %v2413, %v2765
    %2767 = vmatprep.mubr.bf16.mxu0 %v503
    %2768 = vmatmul.mubr.bf16.gmra.mrb[0].mxu0 %v502
    %v2769 = vpop.f32.mrb[0].mxu0
    %v2770 = vadd.f32 %v2417, %v2769
    %v2771 = vpop.f32.mrb[0].mxu0
    %v2772 = vadd.f32 %v2419, %v2771
    %v2773 = vpop.f32.mrb[0].mxu0
    %v2774 = vadd.f32 %v2421, %v2773
    %v2775 = vpop.f32.mrb[0].mxu0
    %v2776 = vadd.f32 %v2423, %v2775
    %2777 = vmatprep.mubr.bf16.mxu0 %v510
    %2778 = vmatmul.mubr.bf16.gmra.mrb[0].mxu0 %v509
    %v2779 = vpop.f32.mrb[0].mxu0
    %v2780 = vadd.f32 %v2427, %v2779
    %v2781 = vpop.f32.mrb[0].mxu0
    %v2782 = vadd.f32 %v2429, %v2781
    %v2783 = vpop.f32.mrb[0].mxu0
    %v2784 = vadd.f32 %v2431, %v2783
    %v2785 = vpop.f32.mrb[0].mxu0
    %v2786 = vadd.f32 %v2433, %v2785
    %2787 = vmatprep.mubr.bf16.mxu0 %v517
    %2788 = vmatmul.mubr.bf16.gmra.mrb[0].mxu0 %v516
    %v2789 = vpop.f32.mrb[0].mxu0
    %v2790 = vadd.f32 %v2437, %v2789
    %v2791 = vpop.f32.mrb[0].mxu0
    %v2792 = vadd.f32 %v2439, %v2791
    %v2793 = vpop.f32.mrb[0].mxu0
    %v2794 = vadd.f32 %v2441, %v2793
    %v2795 = vpop.f32.mrb[0].mxu0
    %v2796 = vadd.f32 %v2443, %v2795
    %2797 = vmatprep.mubr.bf16.mxu0 %v524
    %2798 = vmatmul.mubr.bf16.gmra.mrb[0].mxu0 %v523
    %v2799 = vpop.f32.mrb[0].mxu0
    %v2800 = vadd.f32 %v2447, %v2799
    %v2801 = vpop.f32.mrb[0].mxu0
    %v2802 = vadd.f32 %v2449, %v2801
    %v2803 = vpop.f32.mrb[0].mxu0
    %v2804 = vadd.f32 %v2451, %v2803
    %v2805 = vpop.f32.mrb[0].mxu0
    %v2806 = vadd.f32 %v2453, %v2805
    %2807 = vmatprep.mubr.bf16.mxu0 %v531
    %2808 = vmatmul.mubr.bf16.gmra.mrb[0].mxu0 %v530
    %v2809 = vpop.f32.mrb[0].mxu0
    %v2810 = vadd.f32 %v2457, %v2809
    %v2811 = vpop.f32.mrb[0].mxu0
    %v2812 = vadd.f32 %v2459, %v2811
    %v2813 = vpop.f32.mrb[0].mxu0
    %v2814 = vadd.f32 %v2461, %v2813
    %v2815 = vpop.f32.mrb[0].mxu0
    %v2816 = vadd.f32 %v2463, %v2815
    %2817 = vmatprep.mubr.bf16.mxu0 %v538
    %2818 = vmatmul.mubr.bf16.gmra.mrb[0].mxu0 %v537
    %v2819 = vpop.f32.mrb[0].mxu0
    %v2820 = vadd.f32 %v2467, %v2819
    %v2821 = vpop.f32.mrb[0].mxu0
    %v2822 = vadd.f32 %v2469, %v2821
    %v2823 = vpop.f32.mrb[0].mxu0
    %v2824 = vadd.f32 %v2471, %v2823
    %v2825 = vpop.f32.mrb[0].mxu0
    %v2826 = vadd.f32 %v2473, %v2825
    %2827 = vmatprep.mubr.bf16.mxu0 %v545
    %2828 = vmatmul.mubr.bf16.gmra.mrb[0].mxu0 %v544
    %v2829 = vpop.f32.mrb[0].mxu0
    %v2830 = vadd.f32 %v2477, %v2829
    %v2831 = vpop.f32.mrb[0].mxu0
    %v2832 = vadd.f32 %v2479, %v2831
    %v2833 = vpop.f32.mrb[0].mxu0
    %v2834 = vadd.f32 %v2481, %v2833
    %v2835 = vpop.f32.mrb[0].mxu0
    %v2836 = vadd.f32 %v2483, %v2835
    %2837 = vmatprep.mubr.bf16.mxu0 %v552
    %2838 = vmatmul.mubr.bf16.gmra.mrb[0].mxu0 %v551
    %v2839 = vpop.f32.mrb[0].mxu0
    %v2840 = vadd.f32 %v2487, %v2839
    %v2841 = vpop.f32.mrb[0].mxu0
    %v2842 = vadd.f32 %v2489, %v2841
    %v2843 = vpop.f32.mrb[0].mxu0
    %v2844 = vadd.f32 %v2491, %v2843
    %v2845 = vpop.f32.mrb[0].mxu0
    %v2846 = vadd.f32 %v2493, %v2845
    %2847 = vmatprep.mubr.bf16.mxu0 %v559
    %2848 = vmatmul.mubr.bf16.gmra.mrb[0].mxu0 %v558
    %v2849 = vpop.f32.mrb[0].mxu0
    %v2850 = vadd.f32 %v2497, %v2849
    %v2851 = vpop.f32.mrb[0].mxu0
    %v2852 = vadd.f32 %v2499, %v2851
    %v2853 = vpop.f32.mrb[0].mxu0
    %v2854 = vadd.f32 %v2501, %v2853
    %v2855 = vpop.f32.mrb[0].mxu0
    %v2856 = vadd.f32 %v2503, %v2855
    %2857 = vmatprep.mubr.bf16.mxu0 %v566
    %2858 = vmatmul.mubr.bf16.gmra.mrb[0].mxu0 %v565
    %v2859 = vpop.f32.mrb[0].mxu0
    %v2860 = vadd.f32 %v2507, %v2859
    %v2861 = vpop.f32.mrb[0].mxu0
    %v2862 = vadd.f32 %v2509, %v2861
    %v2863 = vpop.f32.mrb[0].mxu0
    %v2864 = vadd.f32 %v2511, %v2863
    %v2865 = vpop.f32.mrb[0].mxu0
    %v2866 = vadd.f32 %v2513, %v2865
    %2867 = vmatprep.mubr.bf16.mxu0 %v573
    %2868 = vmatmul.mubr.bf16.gmra.mrb[0].mxu0 %v572
    %v2869 = vpop.f32.mrb[0].mxu0
    %v2870 = vadd.f32 %v2517, %v2869
    %v2871 = vpop.f32.mrb[0].mxu0
    %v2872 = vadd.f32 %v2519, %v2871
    %v2873 = vpop.f32.mrb[0].mxu0
    %v2874 = vadd.f32 %v2521, %v2873
    %v2875 = vpop.f32.mrb[0].mxu0
    %v2876 = vadd.f32 %v2523, %v2875
    %2877 = vmatprep.mubr.bf16.mxu0 %v580
    %2878 = vmatmul.mubr.bf16.gmra.mrb[0].mxu0 %v579
    %v2879 = vpop.f32.mrb[0].mxu0
    %v2880 = vadd.f32 %v2527, %v2879
    %v2881 = vpop.f32.mrb[0].mxu0
    %v2882 = vadd.f32 %v2529, %v2881
    %v2883 = vpop.f32.mrb[0].mxu0
    %v2884 = vadd.f32 %v2531, %v2883
    %v2885 = vpop.f32.mrb[0].mxu0
    %v2886 = vadd.f32 %v2533, %v2885
    %2887 = vmatprep.mubr.bf16.mxu0 %v587
    %2888 = vmatmul.mubr.bf16.gmra.mrb[0].mxu0 %v586
    %v2889 = vpop.f32.mrb[0].mxu0
    %v2890 = vadd.f32 %v2537, %v2889
    %v2891 = vpop.f32.mrb[0].mxu0
    %v2892 = vadd.f32 %v2539, %v2891
    %v2893 = vpop.f32.mrb[0].mxu0
    %v2894 = vadd.f32 %v2541, %v2893
    %v2895 = vpop.f32.mrb[0].mxu0
    %v2896 = vadd.f32 %v2543, %v2895
    %2897 = vmatprep.mubr.bf16.mxu0 %v594
    %2898 = vmatmul.mubr.bf16.gmra.mrb[0].mxu0 %v593
    %v2899 = vpop.f32.mrb[0].mxu0
    %v2900 = vadd.f32 %v2547, %v2899
    %v2901 = vpop.f32.mrb[0].mxu0
    %v2902 = vadd.f32 %v2549, %v2901
    %v2903 = vpop.f32.mrb[0].mxu0
    %v2904 = vadd.f32 %v2551, %v2903
    %v2905 = vpop.f32.mrb[0].mxu0
    %v2906 = vadd.f32 %v2553, %v2905
    %2907 = vmatprep.mubr.bf16.mxu0 %v601
    %2908 = vmatmul.mubr.bf16.gmra.mrb[0].mxu0 %v600
    %v2909 = vpop.f32.mrb[0].mxu0
    %v2910 = vadd.f32 %v2557, %v2909
    %v2911 = vpop.f32.mrb[0].mxu0
    %v2912 = vadd.f32 %v2559, %v2911
    %v2913 = vpop.f32.mrb[0].mxu0
    %v2914 = vadd.f32 %v2561, %v2913
    %v2915 = vpop.f32.mrb[0].mxu0
    %v2916 = vadd.f32 %v2563, %v2915
    %2917 = vmatprep.mubr.bf16.mxu0 %v608
    %2918 = vmatmul.mubr.bf16.gmra.mrb[0].mxu0 %v607
    %v2919 = vpop.f32.mrb[0].mxu0
    %v2920 = vadd.f32 %v2567, %v2919
    %v2921 = vpop.f32.mrb[0].mxu0
    %v2922 = vadd.f32 %v2569, %v2921
    %v2923 = vpop.f32.mrb[0].mxu0
    %v2924 = vadd.f32 %v2571, %v2923
    %v2925 = vpop.f32.mrb[0].mxu0
    %v2926 = vadd.f32 %v2573, %v2925
    %2927 = vmatprep.mubr.bf16.mxu0 %v615
    %2928 = vmatmul.mubr.bf16.gmra.mrb[0].mxu0 %v614
    %v2929 = vpop.f32.mrb[0].mxu0
    %v2930 = vadd.f32 %v2577, %v2929
    %v2931 = vpop.f32.mrb[0].mxu0
    %v2932 = vadd.f32 %v2579, %v2931
    %v2933 = vpop.f32.mrb[0].mxu0
    %v2934 = vadd.f32 %v2581, %v2933
    %v2935 = vpop.f32.mrb[0].mxu0
    %v2936 = vadd.f32 %v2583, %v2935
    %2937 = vmatprep.mubr.bf16.mxu0 %v622
    %2938 = vmatmul.mubr.bf16.gmra.mrb[0].mxu0 %v621
    %v2939 = vpop.f32.mrb[0].mxu0
    %v2940 = vadd.f32 %v2587, %v2939
    %v2941 = vpop.f32.mrb[0].mxu0
    %v2942 = vadd.f32 %v2589, %v2941
    %v2943 = vpop.f32.mrb[0].mxu0
    %v2944 = vadd.f32 %v2591, %v2943
    %v2945 = vpop.f32.mrb[0].mxu0
    %v2946 = vadd.f32 %v2593, %v2945
    %2947 = vmatprep.mubr.bf16.mxu0 %v629
    %2948 = vmatmul.mubr.bf16.gmra.mrb[0].mxu0 %v628
    %v2949 = vpop.f32.mrb[0].mxu0
    %v2950 = vadd.f32 %v2597, %v2949
    %v2951 = vpop.f32.mrb[0].mxu0
    %v2952 = vadd.f32 %v2599, %v2951
    %v2953 = vpop.f32.mrb[0].mxu0
    %v2954 = vadd.f32 %v2601, %v2953
    %v2955 = vpop.f32.mrb[0].mxu0
    %v2956 = vadd.f32 %v2603, %v2955
    %2957 = vmatprep.mubr.bf16.mxu0 %v636
    %2958 = vmatmul.mubr.bf16.gmra.mrb[0].mxu0 %v635
    %v2959 = vpop.f32.mrb[0].mxu0
    %v2960 = vadd.f32 %v2607, %v2959
    %v2961 = vpop.f32.mrb[0].mxu0
    %v2962 = vadd.f32 %v2609, %v2961
    %v2963 = vpop.f32.mrb[0].mxu0
    %v2964 = vadd.f32 %v2611, %v2963
    %v2965 = vpop.f32.mrb[0].mxu0
    %v2966 = vadd.f32 %v2613, %v2965
    %2967 = vmatprep.mubr.bf16.mxu0 %v643
    %2968 = vmatmul.mubr.bf16.gmra.mrb[0].mxu0 %v642
    %v2969 = vpop.f32.mrb[0].mxu0
    %v2970 = vadd.f32 %v2617, %v2969
    %v2971 = vpop.f32.mrb[0].mxu0
    %v2972 = vadd.f32 %v2619, %v2971
    %v2973 = vpop.f32.mrb[0].mxu0
    %v2974 = vadd.f32 %v2621, %v2973
    %v2975 = vpop.f32.mrb[0].mxu0
    %v2976 = vadd.f32 %v2623, %v2975
    %2977 = vmatprep.mubr.bf16.mxu0 %v650
    %2978 = vmatmul.mubr.bf16.gmra.mrb[0].mxu0 %v649
    %v2979 = vpop.f32.mrb[0].mxu0
    %v2980 = vadd.f32 %v2627, %v2979
    %v2981 = vpop.f32.mrb[0].mxu0
    %v2982 = vadd.f32 %v2629, %v2981
    %v2983 = vpop.f32.mrb[0].mxu0
    %v2984 = vadd.f32 %v2631, %v2983
    %v2985 = vpop.f32.mrb[0].mxu0
    %v2986 = vadd.f32 %v2633, %v2985
    %2987 = vmatprep.mubr.bf16.mxu0 %v657
    %2988 = vmatmul.mubr.bf16.gmra.mrb[0].mxu0 %v656
    %v2989 = vpop.f32.mrb[0].mxu0
    %v2990 = vadd.f32 %v2637, %v2989
    %v2991 = vpop.f32.mrb[0].mxu0
    %v2992 = vadd.f32 %v2639, %v2991
    %v2993 = vpop.f32.mrb[0].mxu0
    %v2994 = vadd.f32 %v2641, %v2993
    %v2995 = vpop.f32.mrb[0].mxu0
    %v2996 = vadd.f32 %v2643, %v2995
    %2997 = vmatprep.mubr.bf16.mxu0 %v664
    %2998 = vmatmul.mubr.bf16.gmra.mrb[0].mxu0 %v663
    %v2999 = vpop.f32.mrb[0].mxu0
    %v3000 = vadd.f32 %v2647, %v2999
    %v3001 = vpop.f32.mrb[0].mxu0
    %v3002 = vadd.f32 %v2649, %v3001
    %v3003 = vpop.f32.mrb[0].mxu0
    %v3004 = vadd.f32 %v2651, %v3003
    %v3005 = vpop.f32.mrb[0].mxu0
    %v3006 = vadd.f32 %v2653, %v3005
    %3007 = vmatprep.mubr.bf16.mxu0 %v671
    %3008 = vmatmul.mubr.bf16.gmra.mrb[0].mxu0 %v670
    %v3009 = vpop.f32.mrb[0].mxu0
    %v3010 = vadd.f32 %v2657, %v3009
    %v3011 = vpop.f32.mrb[0].mxu0
    %v3012 = vadd.f32 %v2659, %v3011
    %v3013 = vpop.f32.mrb[0].mxu0
    %v3014 = vadd.f32 %v2661, %v3013
    %v3015 = vpop.f32.mrb[0].mxu0
    %v3016 = vadd.f32 %v2663, %v3015
    %3017 = vmatprep.mubr.bf16.mxu0 %v678
    %3018 = vmatmul.mubr.bf16.gmra.mrb[0].mxu0 %v677
    %v3019 = vpop.f32.mrb[0].mxu0
    %v3020 = vadd.f32 %v2667, %v3019
    %v3021 = vpop.f32.mrb[0].mxu0
    %v3022 = vadd.f32 %v2669, %v3021
    %v3023 = vpop.f32.mrb[0].mxu0
    %v3024 = vadd.f32 %v2671, %v3023
    %v3025 = vpop.f32.mrb[0].mxu0
    %v3026 = vadd.f32 %v2673, %v3025
    %3027 = vmatprep.mubr.bf16.mxu0 %v685
    %3028 = vmatmul.mubr.bf16.gmra.mrb[0].mxu0 %v684
    %v3029 = vpop.f32.mrb[0].mxu0
    %v3030 = vadd.f32 %v2677, %v3029
    %v3031 = vpop.f32.mrb[0].mxu0
    %v3032 = vadd.f32 %v2679, %v3031
    %v3033 = vpop.f32.mrb[0].mxu0
    %v3034 = vadd.f32 %v2681, %v3033
    %v3035 = vpop.f32.mrb[0].mxu0
    %v3036 = vadd.f32 %v2683, %v3035
    %3037 = vmatprep.mubr.bf16.mxu0 %v692
    %3038 = vmatmul.mubr.bf16.gmra.mrb[0].mxu0 %v691
    %v3039 = vpop.f32.mrb[0].mxu0
    %v3040 = vadd.f32 %v2687, %v3039
    %v3041 = vpop.f32.mrb[0].mxu0
    %v3042 = vadd.f32 %v2689, %v3041
    %v3043 = vpop.f32.mrb[0].mxu0
    %v3044 = vadd.f32 %v2691, %v3043
    %v3045 = vpop.f32.mrb[0].mxu0
    %v3046 = vadd.f32 %v2693, %v3045
    %3047 = vdwg.mxu0
    %3048 = vmatprep.subr.bf16.mxu0 %v1693
    %3049 = vmatpush1.bf16.msra.mxu0 %v1692
    %3050 = vmatprep.subr.bf16.mxu0 0
    %3051 = vmatpush1.bf16.msra.mxu0 0
    %3052 = vmatprep.subr.bf16.mxu0 0
    %3053 = vmatpush1.bf16.msra.mxu0 0
    %3054 = vmatprep.subr.bf16.mxu0 0
    %3055 = vmatpush1.bf16.msra.mxu0 0
    %3056 = vmatprep.subr.bf16.mxu0 0
    %3057 = vmatpush1.bf16.msra.mxu0 0
    %3058 = vmatprep.subr.bf16.mxu0 0
    %3059 = vmatpush1.bf16.msra.mxu0 0
    %3060 = vmatprep.subr.bf16.mxu0 0
    %3061 = vmatpush1.bf16.msra.mxu0 0
    %3062 = vmatprep.subr.bf16.mxu0 0
    %3063 = vmatpush1.bf16.msra.mxu0 0
    %3064 = vmatprep.subr.bf16.mxu0 0
    %3065 = vmatpush1.bf16.msra.mxu0 0
    %3066 = vmatprep.subr.bf16.mxu0 0
    %3067 = vmatpush1.bf16.msra.mxu0 0
    %3068 = vmatprep.subr.bf16.mxu0 0
    %3069 = vmatpush1.bf16.msra.mxu0 0
    %3070 = vmatprep.subr.bf16.mxu0 0
    %3071 = vmatpush1.bf16.msra.mxu0 0
    %3072 = vmatprep.subr.bf16.mxu0 0
    %3073 = vmatpush1.bf16.msra.mxu0 0
    %3074 = vmatprep.subr.bf16.mxu0 0
    %3075 = vmatpush1.bf16.msra.mxu0 0
    %3076 = vmatprep.subr.bf16.mxu0 0
    %3077 = vmatpush1.bf16.msra.mxu0 0
    %3078 = vmatprep.subr.bf16.mxu0 0
    %3079 = vmatpush1.bf16.msra.mxu0 0
    %3080 = vmatprep.mubr.bf16.mxu0 0
    %3081 = vmatmul.mubr.bf16.gmra.mrb[0].mxu0 %v1894
    %v3082 = vpop.f32.mrb[0].mxu0
    %v3083 = vadd.f32 %v2730, %v3082
    %v3084 = vpop.f32.mrb[0].mxu0
    %v3085 = vadd.f32 %v2732, %v3084
    %v3086 = vpop.f32.mrb[0].mxu0
    %v3087 = vadd.f32 %v2734, %v3086
    %v3088 = vpop.f32.mrb[0].mxu0
    %v3089 = vadd.f32 %v2736, %v3088
    %3090 = vmatprep.mubr.bf16.mxu0 0
    %3091 = vmatmul.mubr.bf16.gmra.mrb[0].mxu0 %v1897
    %v3092 = vpop.f32.mrb[0].mxu0
    %v3093 = vadd.f32 %v2740, %v3092
    %v3094 = vpop.f32.mrb[0].mxu0
    %v3095 = vadd.f32 %v2742, %v3094
    %v3096 = vpop.f32.mrb[0].mxu0
    %v3097 = vadd.f32 %v2744, %v3096
    %v3098 = vpop.f32.mrb[0].mxu0
    %v3099 = vadd.f32 %v2746, %v3098
    %3100 = vmatprep.mubr.bf16.mxu0 0
    %3101 = vmatmul.mubr.bf16.gmra.mrb[0].mxu0 %v1900
    %v3102 = vpop.f32.mrb[0].mxu0
    %v3103 = vadd.f32 %v2750, %v3102
    %v3104 = vpop.f32.mrb[0].mxu0
    %v3105 = vadd.f32 %v2752, %v3104
    %v3106 = vpop.f32.mrb[0].mxu0
    %v3107 = vadd.f32 %v2754, %v3106
    %v3108 = vpop.f32.mrb[0].mxu0
    %v3109 = vadd.f32 %v2756, %v3108
    %3110 = vmatprep.mubr.bf16.mxu0 0
    %3111 = vmatmul.mubr.bf16.gmra.mrb[0].mxu0 %v1903
    %v3112 = vpop.f32.mrb[0].mxu0
    %v3113 = vadd.f32 %v2760, %v3112
    %v3114 = vpop.f32.mrb[0].mxu0
    %v3115 = vadd.f32 %v2762, %v3114
    %v3116 = vpop.f32.mrb[0].mxu0
    %v3117 = vadd.f32 %v2764, %v3116
    %v3118 = vpop.f32.mrb[0].mxu0
    %v3119 = vadd.f32 %v2766, %v3118
    %3120 = vmatprep.mubr.bf16.mxu0 0
    %3121 = vmatmul.mubr.bf16.gmra.mrb[0].mxu0 %v1906
    %v3122 = vpop.f32.mrb[0].mxu0
    %v3123 = vadd.f32 %v2770, %v3122
    %v3124 = vpop.f32.mrb[0].mxu0
    %v3125 = vadd.f32 %v2772, %v3124
    %v3126 = vpop.f32.mrb[0].mxu0
    %v3127 = vadd.f32 %v2774, %v3126
    %v3128 = vpop.f32.mrb[0].mxu0
    %v3129 = vadd.f32 %v2776, %v3128
    %3130 = vmatprep.mubr.bf16.mxu0 0
    %3131 = vmatmul.mubr.bf16.gmra.mrb[0].mxu0 %v1909
    %v3132 = vpop.f32.mrb[0].mxu0
    %v3133 = vadd.f32 %v2780, %v3132
    %v3134 = vpop.f32.mrb[0].mxu0
    %v3135 = vadd.f32 %v2782, %v3134
    %v3136 = vpop.f32.mrb[0].mxu0
    %v3137 = vadd.f32 %v2784, %v3136
    %v3138 = vpop.f32.mrb[0].mxu0
    %v3139 = vadd.f32 %v2786, %v3138
    %3140 = vmatprep.mubr.bf16.mxu0 0
    %3141 = vmatmul.mubr.bf16.gmra.mrb[0].mxu0 %v1912
    %v3142 = vpop.f32.mrb[0].mxu0
    %v3143 = vadd.f32 %v2790, %v3142
    %v3144 = vpop.f32.mrb[0].mxu0
    %v3145 = vadd.f32 %v2792, %v3144
    %v3146 = vpop.f32.mrb[0].mxu0
    %v3147 = vadd.f32 %v2794, %v3146
    %v3148 = vpop.f32.mrb[0].mxu0
    %v3149 = vadd.f32 %v2796, %v3148
    %3150 = vmatprep.mubr.bf16.mxu0 0
    %3151 = vmatmul.mubr.bf16.gmra.mrb[0].mxu0 %v1915
    %v3152 = vpop.f32.mrb[0].mxu0
    %v3153 = vadd.f32 %v2800, %v3152
    %v3154 = vpop.f32.mrb[0].mxu0
    %v3155 = vadd.f32 %v2802, %v3154
    %v3156 = vpop.f32.mrb[0].mxu0
    %v3157 = vadd.f32 %v2804, %v3156
    %v3158 = vpop.f32.mrb[0].mxu0
    %v3159 = vadd.f32 %v2806, %v3158
    %3160 = vmatprep.mubr.bf16.mxu0 0
    %3161 = vmatmul.mubr.bf16.gmra.mrb[0].mxu0 %v1918
    %v3162 = vpop.f32.mrb[0].mxu0
    %v3163 = vadd.f32 %v2810, %v3162
    %v3164 = vpop.f32.mrb[0].mxu0
    %v3165 = vadd.f32 %v2812, %v3164
    %v3166 = vpop.f32.mrb[0].mxu0
    %v3167 = vadd.f32 %v2814, %v3166
    %v3168 = vpop.f32.mrb[0].mxu0
    %v3169 = vadd.f32 %v2816, %v3168
    %3170 = vmatprep.mubr.bf16.mxu0 0
    %3171 = vmatmul.mubr.bf16.gmra.mrb[0].mxu0 %v1921
    %v3172 = vpop.f32.mrb[0].mxu0
    %v3173 = vadd.f32 %v2820, %v3172
    %v3174 = vpop.f32.mrb[0].mxu0
    %v3175 = vadd.f32 %v2822, %v3174
    %v3176 = vpop.f32.mrb[0].mxu0
    %v3177 = vadd.f32 %v2824, %v3176
    %v3178 = vpop.f32.mrb[0].mxu0
    %v3179 = vadd.f32 %v2826, %v3178
    %3180 = vmatprep.mubr.bf16.mxu0 0
    %3181 = vmatmul.mubr.bf16.gmra.mrb[0].mxu0 %v1924
    %v3182 = vpop.f32.mrb[0].mxu0
    %v3183 = vadd.f32 %v2830, %v3182
    %v3184 = vpop.f32.mrb[0].mxu0
    %v3185 = vadd.f32 %v2832, %v3184
    %v3186 = vpop.f32.mrb[0].mxu0
    %v3187 = vadd.f32 %v2834, %v3186
    %v3188 = vpop.f32.mrb[0].mxu0
    %v3189 = vadd.f32 %v2836, %v3188
    %3190 = vmatprep.mubr.bf16.mxu0 0
    %3191 = vmatmul.mubr.bf16.gmra.mrb[0].mxu0 %v1927
    %v3192 = vpop.f32.mrb[0].mxu0
    %v3193 = vadd.f32 %v2840, %v3192
    %v3194 = vpop.f32.mrb[0].mxu0
    %v3195 = vadd.f32 %v2842, %v3194
    %v3196 = vpop.f32.mrb[0].mxu0
    %v3197 = vadd.f32 %v2844, %v3196
    %v3198 = vpop.f32.mrb[0].mxu0
    %v3199 = vadd.f32 %v2846, %v3198
    %3200 = vmatprep.mubr.bf16.mxu0 0
    %3201 = vmatmul.mubr.bf16.gmra.mrb[0].mxu0 %v1930
    %v3202 = vpop.f32.mrb[0].mxu0
    %v3203 = vadd.f32 %v2850, %v3202
    %v3204 = vpop.f32.mrb[0].mxu0
    %v3205 = vadd.f32 %v2852, %v3204
    %v3206 = vpop.f32.mrb[0].mxu0
    %v3207 = vadd.f32 %v2854, %v3206
    %v3208 = vpop.f32.mrb[0].mxu0
    %v3209 = vadd.f32 %v2856, %v3208
    %3210 = vmatprep.mubr.bf16.mxu0 0
    %3211 = vmatmul.mubr.bf16.gmra.mrb[0].mxu0 %v1933
    %v3212 = vpop.f32.mrb[0].mxu0
    %v3213 = vadd.f32 %v2860, %v3212
    %v3214 = vpop.f32.mrb[0].mxu0
    %v3215 = vadd.f32 %v2862, %v3214
    %v3216 = vpop.f32.mrb[0].mxu0
    %v3217 = vadd.f32 %v2864, %v3216
    %v3218 = vpop.f32.mrb[0].mxu0
    %v3219 = vadd.f32 %v2866, %v3218
    %3220 = vmatprep.mubr.bf16.mxu0 0
    %3221 = vmatmul.mubr.bf16.gmra.mrb[0].mxu0 %v1936
    %v3222 = vpop.f32.mrb[0].mxu0
    %v3223 = vadd.f32 %v2870, %v3222
    %v3224 = vpop.f32.mrb[0].mxu0
    %v3225 = vadd.f32 %v2872, %v3224
    %v3226 = vpop.f32.mrb[0].mxu0
    %v3227 = vadd.f32 %v2874, %v3226
    %v3228 = vpop.f32.mrb[0].mxu0
    %v3229 = vadd.f32 %v2876, %v3228
    %3230 = vmatprep.mubr.bf16.mxu0 0
    %3231 = vmatmul.mubr.bf16.gmra.mrb[0].mxu0 %v1939
    %v3232 = vpop.f32.mrb[0].mxu0
    %v3233 = vadd.f32 %v2880, %v3232
    %v3234 = vpop.f32.mrb[0].mxu0
    %v3235 = vadd.f32 %v2882, %v3234
    %v3236 = vpop.f32.mrb[0].mxu0
    %v3237 = vadd.f32 %v2884, %v3236
    %v3238 = vpop.f32.mrb[0].mxu0
    %v3239 = vadd.f32 %v2886, %v3238
    %3240 = vmatprep.mubr.bf16.mxu0 0
    %3241 = vmatmul.mubr.bf16.gmra.mrb[0].mxu0 %v1942
    %v3242 = vpop.f32.mrb[0].mxu0
    %v3243 = vadd.f32 %v2890, %v3242
    %v3244 = vpop.f32.mrb[0].mxu0
    %v3245 = vadd.f32 %v2892, %v3244
    %v3246 = vpop.f32.mrb[0].mxu0
    %v3247 = vadd.f32 %v2894, %v3246
    %v3248 = vpop.f32.mrb[0].mxu0
    %v3249 = vadd.f32 %v2896, %v3248
    %3250 = vmatprep.mubr.bf16.mxu0 0
    %3251 = vmatmul.mubr.bf16.gmra.mrb[0].mxu0 %v1945
    %v3252 = vpop.f32.mrb[0].mxu0
    %v3253 = vadd.f32 %v2900, %v3252
    %v3254 = vpop.f32.mrb[0].mxu0
    %v3255 = vadd.f32 %v2902, %v3254
    %v3256 = vpop.f32.mrb[0].mxu0
    %v3257 = vadd.f32 %v2904, %v3256
    %v3258 = vpop.f32.mrb[0].mxu0
    %v3259 = vadd.f32 %v2906, %v3258
    %3260 = vmatprep.mubr.bf16.mxu0 0
    %3261 = vmatmul.mubr.bf16.gmra.mrb[0].mxu0 %v1948
    %v3262 = vpop.f32.mrb[0].mxu0
    %v3263 = vadd.f32 %v2910, %v3262
    %v3264 = vpop.f32.mrb[0].mxu0
    %v3265 = vadd.f32 %v2912, %v3264
    %v3266 = vpop.f32.mrb[0].mxu0
    %v3267 = vadd.f32 %v2914, %v3266
    %v3268 = vpop.f32.mrb[0].mxu0
    %v3269 = vadd.f32 %v2916, %v3268
    %3270 = vmatprep.mubr.bf16.mxu0 0
    %3271 = vmatmul.mubr.bf16.gmra.mrb[0].mxu0 %v1951
    %v3272 = vpop.f32.mrb[0].mxu0
    %v3273 = vadd.f32 %v2920, %v3272
    %v3274 = vpop.f32.mrb[0].mxu0
    %v3275 = vadd.f32 %v2922, %v3274
    %v3276 = vpop.f32.mrb[0].mxu0
    %v3277 = vadd.f32 %v2924, %v3276
    %v3278 = vpop.f32.mrb[0].mxu0
    %v3279 = vadd.f32 %v2926, %v3278
    %3280 = vmatprep.mubr.bf16.mxu0 0
    %3281 = vmatmul.mubr.bf16.gmra.mrb[0].mxu0 %v1954
    %v3282 = vpop.f32.mrb[0].mxu0
    %v3283 = vadd.f32 %v2930, %v3282
    %v3284 = vpop.f32.mrb[0].mxu0
    %v3285 = vadd.f32 %v2932, %v3284
    %v3286 = vpop.f32.mrb[0].mxu0
    %v3287 = vadd.f32 %v2934, %v3286
    %v3288 = vpop.f32.mrb[0].mxu0
    %v3289 = vadd.f32 %v2936, %v3288
    %3290 = vmatprep.mubr.bf16.mxu0 0
    %3291 = vmatmul.mubr.bf16.gmra.mrb[0].mxu0 %v1957
    %v3292 = vpop.f32.mrb[0].mxu0
    %v3293 = vadd.f32 %v2940, %v3292
    %v3294 = vpop.f32.mrb[0].mxu0
    %v3295 = vadd.f32 %v2942, %v3294
    %v3296 = vpop.f32.mrb[0].mxu0
    %v3297 = vadd.f32 %v2944, %v3296
    %v3298 = vpop.f32.mrb[0].mxu0
    %v3299 = vadd.f32 %v2946, %v3298
    %3300 = vmatprep.mubr.bf16.mxu0 0
    %3301 = vmatmul.mubr.bf16.gmra.mrb[0].mxu0 %v1960
    %v3302 = vpop.f32.mrb[0].mxu0
    %v3303 = vadd.f32 %v2950, %v3302
    %v3304 = vpop.f32.mrb[0].mxu0
    %v3305 = vadd.f32 %v2952, %v3304
    %v3306 = vpop.f32.mrb[0].mxu0
    %v3307 = vadd.f32 %v2954, %v3306
    %v3308 = vpop.f32.mrb[0].mxu0
    %v3309 = vadd.f32 %v2956, %v3308
    %3310 = vmatprep.mubr.bf16.mxu0 0
    %3311 = vmatmul.mubr.bf16.gmra.mrb[0].mxu0 %v1963
    %v3312 = vpop.f32.mrb[0].mxu0
    %v3313 = vadd.f32 %v2960, %v3312
    %v3314 = vpop.f32.mrb[0].mxu0
    %v3315 = vadd.f32 %v2962, %v3314
    %v3316 = vpop.f32.mrb[0].mxu0
    %v3317 = vadd.f32 %v2964, %v3316
    %v3318 = vpop.f32.mrb[0].mxu0
    %v3319 = vadd.f32 %v2966, %v3318
    %3320 = vmatprep.mubr.bf16.mxu0 0
    %3321 = vmatmul.mubr.bf16.gmra.mrb[0].mxu0 %v1966
    %v3322 = vpop.f32.mrb[0].mxu0
    %v3323 = vadd.f32 %v2970, %v3322
    %v3324 = vpop.f32.mrb[0].mxu0
    %v3325 = vadd.f32 %v2972, %v3324
    %v3326 = vpop.f32.mrb[0].mxu0
    %v3327 = vadd.f32 %v2974, %v3326
    %v3328 = vpop.f32.mrb[0].mxu0
    %v3329 = vadd.f32 %v2976, %v3328
    %3330 = vmatprep.mubr.bf16.mxu0 0
    %3331 = vmatmul.mubr.bf16.gmra.mrb[0].mxu0 %v1969
    %v3332 = vpop.f32.mrb[0].mxu0
    %v3333 = vadd.f32 %v2980, %v3332
    %v3334 = vpop.f32.mrb[0].mxu0
    %v3335 = vadd.f32 %v2982, %v3334
    %v3336 = vpop.f32.mrb[0].mxu0
    %v3337 = vadd.f32 %v2984, %v3336
    %v3338 = vpop.f32.mrb[0].mxu0
    %v3339 = vadd.f32 %v2986, %v3338
    %3340 = vmatprep.mubr.bf16.mxu0 0
    %3341 = vmatmul.mubr.bf16.gmra.mrb[0].mxu0 %v1972
    %v3342 = vpop.f32.mrb[0].mxu0
    %v3343 = vadd.f32 %v2990, %v3342
    %v3344 = vpop.f32.mrb[0].mxu0
    %v3345 = vadd.f32 %v2992, %v3344
    %v3346 = vpop.f32.mrb[0].mxu0
    %v3347 = vadd.f32 %v2994, %v3346
    %v3348 = vpop.f32.mrb[0].mxu0
    %v3349 = vadd.f32 %v2996, %v3348
    %3350 = vmatprep.mubr.bf16.mxu0 0
    %3351 = vmatmul.mubr.bf16.gmra.mrb[0].mxu0 %v1975
    %v3352 = vpop.f32.mrb[0].mxu0
    %v3353 = vadd.f32 %v3000, %v3352
    %v3354 = vpop.f32.mrb[0].mxu0
    %v3355 = vadd.f32 %v3002, %v3354
    %v3356 = vpop.f32.mrb[0].mxu0
    %v3357 = vadd.f32 %v3004, %v3356
    %v3358 = vpop.f32.mrb[0].mxu0
    %v3359 = vadd.f32 %v3006, %v3358
    %3360 = vmatprep.mubr.bf16.mxu0 0
    %3361 = vmatmul.mubr.bf16.gmra.mrb[0].mxu0 %v1978
    %v3362 = vpop.f32.mrb[0].mxu0
    %v3363 = vadd.f32 %v3010, %v3362
    %v3364 = vpop.f32.mrb[0].mxu0
    %v3365 = vadd.f32 %v3012, %v3364
    %v3366 = vpop.f32.mrb[0].mxu0
    %v3367 = vadd.f32 %v3014, %v3366
    %v3368 = vpop.f32.mrb[0].mxu0
    %v3369 = vadd.f32 %v3016, %v3368
    %3370 = vmatprep.mubr.bf16.mxu0 0
    %3371 = vmatmul.mubr.bf16.gmra.mrb[0].mxu0 %v1981
    %v3372 = vpop.f32.mrb[0].mxu0
    %v3373 = vadd.f32 %v3020, %v3372
    %v3374 = vpop.f32.mrb[0].mxu0
    %v3375 = vadd.f32 %v3022, %v3374
    %v3376 = vpop.f32.mrb[0].mxu0
    %v3377 = vadd.f32 %v3024, %v3376
    %v3378 = vpop.f32.mrb[0].mxu0
    %v3379 = vadd.f32 %v3026, %v3378
    %3380 = vmatprep.mubr.bf16.mxu0 0
    %3381 = vmatmul.mubr.bf16.gmra.mrb[0].mxu0 %v1984
    %v3382 = vpop.f32.mrb[0].mxu0
    %v3383 = vadd.f32 %v3030, %v3382
    %v3384 = vpop.f32.mrb[0].mxu0
    %v3385 = vadd.f32 %v3032, %v3384
    %v3386 = vpop.f32.mrb[0].mxu0
    %v3387 = vadd.f32 %v3034, %v3386
    %v3388 = vpop.f32.mrb[0].mxu0
    %v3389 = vadd.f32 %v3036, %v3388
    %3390 = vmatprep.mubr.bf16.mxu0 0
    %3391 = vmatmul.mubr.bf16.gmra.mrb[0].mxu0 %v1987
    %v3392 = vpop.f32.mrb[0].mxu0
    %v3393 = vadd.f32 %v3040, %v3392
    %v3394 = vpop.f32.mrb[0].mxu0
    %v3395 = vadd.f32 %v3042, %v3394
    %v3396 = vpop.f32.mrb[0].mxu0
    %v3397 = vadd.f32 %v3044, %v3396
    %v3398 = vpop.f32.mrb[0].mxu0
    %v3399 = vadd.f32 %v3046, %v3398
    %3400 = vdwg.mxu0
    %3401 = vmatprep.subr.bf16.mxu0 %v1503
    %3402 = vmatpush1.bf16.msra.mxu0 %v1502
    %3403 = vmatprep.subr.bf16.mxu0 %v1507
    %3404 = vmatpush1.bf16.msra.mxu0 %v1506
    %3405 = vmatprep.subr.bf16.mxu0 %v1511
    %3406 = vmatpush1.bf16.msra.mxu0 %v1510
    %3407 = vmatprep.subr.bf16.mxu0 %v1515
    %3408 = vmatpush1.bf16.msra.mxu0 %v1514
    %3409 = vmatprep.subr.bf16.mxu0 %v1519
    %3410 = vmatpush1.bf16.msra.mxu0 %v1518
    %3411 = vmatprep.subr.bf16.mxu0 %v1523
    %3412 = vmatpush1.bf16.msra.mxu0 %v1522
    %3413 = vmatprep.subr.bf16.mxu0 %v1527
    %3414 = vmatpush1.bf16.msra.mxu0 %v1526
    %3415 = vmatprep.subr.bf16.mxu0 %v1531
    %3416 = vmatpush1.bf16.msra.mxu0 %v1530
    %3417 = vmatprep.subr.bf16.mxu0 %v1535
    %3418 = vmatpush1.bf16.msra.mxu0 %v1534
    %3419 = vmatprep.subr.bf16.mxu0 %v1539
    %3420 = vmatpush1.bf16.msra.mxu0 %v1538
    %3421 = vmatprep.subr.bf16.mxu0 %v1543
    %3422 = vmatpush1.bf16.msra.mxu0 %v1542
    %3423 = vmatprep.subr.bf16.mxu0 %v1547
    %3424 = vmatpush1.bf16.msra.mxu0 %v1546
    %3425 = vmatprep.subr.bf16.mxu0 %v1551
    %3426 = vmatpush1.bf16.msra.mxu0 %v1550
    %3427 = vmatprep.subr.bf16.mxu0 %v1555
    %3428 = vmatpush1.bf16.msra.mxu0 %v1554
    %3429 = vmatprep.subr.bf16.mxu0 %v1559
    %3430 = vmatpush1.bf16.msra.mxu0 %v1558
    %3431 = vmatprep.subr.bf16.mxu0 %v1563
    %3432 = vmatpush1.bf16.msra.mxu0 %v1562
    %3433 = vmatprep.mubr.bf16.mxu0 %v471
    %3434 = vmatmul.mubr.bf16.gmra.mrb[0].mxu0 %v470
    %v3435 = vpop.f32.mrb[0].mxu0
    %v3436 = vadd.f32 %v903, %v3435
    %v3437 = vpop.f32.mrb[0].mxu0
    %v3438 = vadd.f32 %v907, %v3437
    %v3439 = vpop.f32.mrb[0].mxu0
    %v3440 = vadd.f32 %v903, %v3439
    %v3441 = vpop.f32.mrb[0].mxu0
    %v3442 = vadd.f32 %v907, %v3441
    %3443 = vmatprep.mubr.bf16.mxu0 %v478
    %3444 = vmatmul.mubr.bf16.gmra.mrb[0].mxu0 %v477
    %v3445 = vpop.f32.mrb[0].mxu0
    %v3446 = vadd.f32 %v903, %v3445
    %v3447 = vpop.f32.mrb[0].mxu0
    %v3448 = vadd.f32 %v907, %v3447
    %v3449 = vpop.f32.mrb[0].mxu0
    %v3450 = vadd.f32 %v903, %v3449
    %v3451 = vpop.f32.mrb[0].mxu0
    %v3452 = vadd.f32 %v907, %v3451
    %3453 = vmatprep.mubr.bf16.mxu0 %v485
    %3454 = vmatmul.mubr.bf16.gmra.mrb[0].mxu0 %v484
    %v3455 = vpop.f32.mrb[0].mxu0
    %v3456 = vadd.f32 %v903, %v3455
    %v3457 = vpop.f32.mrb[0].mxu0
    %v3458 = vadd.f32 %v907, %v3457
    %v3459 = vpop.f32.mrb[0].mxu0
    %v3460 = vadd.f32 %v903, %v3459
    %v3461 = vpop.f32.mrb[0].mxu0
    %v3462 = vadd.f32 %v907, %v3461
    %3463 = vmatprep.mubr.bf16.mxu0 %v492
    %3464 = vmatmul.mubr.bf16.gmra.mrb[0].mxu0 %v491
    %v3465 = vpop.f32.mrb[0].mxu0
    %v3466 = vadd.f32 %v903, %v3465
    %v3467 = vpop.f32.mrb[0].mxu0
    %v3468 = vadd.f32 %v907, %v3467
    %v3469 = vpop.f32.mrb[0].mxu0
    %v3470 = vadd.f32 %v903, %v3469
    %v3471 = vpop.f32.mrb[0].mxu0
    %v3472 = vadd.f32 %v907, %v3471
    %3473 = vmatprep.mubr.bf16.mxu0 %v499
    %3474 = vmatmul.mubr.bf16.gmra.mrb[0].mxu0 %v498
    %v3475 = vpop.f32.mrb[0].mxu0
    %v3476 = vadd.f32 %v903, %v3475
    %v3477 = vpop.f32.mrb[0].mxu0
    %v3478 = vadd.f32 %v907, %v3477
    %v3479 = vpop.f32.mrb[0].mxu0
    %v3480 = vadd.f32 %v903, %v3479
    %v3481 = vpop.f32.mrb[0].mxu0
    %v3482 = vadd.f32 %v907, %v3481
    %3483 = vmatprep.mubr.bf16.mxu0 %v506
    %3484 = vmatmul.mubr.bf16.gmra.mrb[0].mxu0 %v505
    %v3485 = vpop.f32.mrb[0].mxu0
    %v3486 = vadd.f32 %v903, %v3485
    %v3487 = vpop.f32.mrb[0].mxu0
    %v3488 = vadd.f32 %v907, %v3487
    %v3489 = vpop.f32.mrb[0].mxu0
    %v3490 = vadd.f32 %v903, %v3489
    %v3491 = vpop.f32.mrb[0].mxu0
    %v3492 = vadd.f32 %v907, %v3491
    %3493 = vmatprep.mubr.bf16.mxu0 %v513
    %3494 = vmatmul.mubr.bf16.gmra.mrb[0].mxu0 %v512
    %v3495 = vpop.f32.mrb[0].mxu0
    %v3496 = vadd.f32 %v903, %v3495
    %v3497 = vpop.f32.mrb[0].mxu0
    %v3498 = vadd.f32 %v907, %v3497
    %v3499 = vpop.f32.mrb[0].mxu0
    %v3500 = vadd.f32 %v903, %v3499
    %v3501 = vpop.f32.mrb[0].mxu0
    %v3502 = vadd.f32 %v907, %v3501
    %3503 = vmatprep.mubr.bf16.mxu0 %v520
    %3504 = vmatmul.mubr.bf16.gmra.mrb[0].mxu0 %v519
    %v3505 = vpop.f32.mrb[0].mxu0
    %v3506 = vadd.f32 %v903, %v3505
    %v3507 = vpop.f32.mrb[0].mxu0
    %v3508 = vadd.f32 %v907, %v3507
    %v3509 = vpop.f32.mrb[0].mxu0
    %v3510 = vadd.f32 %v903, %v3509
    %v3511 = vpop.f32.mrb[0].mxu0
    %v3512 = vadd.f32 %v907, %v3511
    %3513 = vmatprep.mubr.bf16.mxu0 %v527
    %3514 = vmatmul.mubr.bf16.gmra.mrb[0].mxu0 %v526
    %v3515 = vpop.f32.mrb[0].mxu0
    %v3516 = vadd.f32 %v903, %v3515
    %v3517 = vpop.f32.mrb[0].mxu0
    %v3518 = vadd.f32 %v907, %v3517
    %v3519 = vpop.f32.mrb[0].mxu0
    %v3520 = vadd.f32 %v903, %v3519
    %v3521 = vpop.f32.mrb[0].mxu0
    %v3522 = vadd.f32 %v907, %v3521
    %3523 = vmatprep.mubr.bf16.mxu0 %v534
    %3524 = vmatmul.mubr.bf16.gmra.mrb[0].mxu0 %v533
    %v3525 = vpop.f32.mrb[0].mxu0
    %v3526 = vadd.f32 %v903, %v3525
    %v3527 = vpop.f32.mrb[0].mxu0
    %v3528 = vadd.f32 %v907, %v3527
    %v3529 = vpop.f32.mrb[0].mxu0
    %v3530 = vadd.f32 %v903, %v3529
    %v3531 = vpop.f32.mrb[0].mxu0
    %v3532 = vadd.f32 %v907, %v3531
    %3533 = vmatprep.mubr.bf16.mxu0 %v541
    %3534 = vmatmul.mubr.bf16.gmra.mrb[0].mxu0 %v540
    %v3535 = vpop.f32.mrb[0].mxu0
    %v3536 = vadd.f32 %v903, %v3535
    %v3537 = vpop.f32.mrb[0].mxu0
    %v3538 = vadd.f32 %v907, %v3537
    %v3539 = vpop.f32.mrb[0].mxu0
    %v3540 = vadd.f32 %v903, %v3539
    %v3541 = vpop.f32.mrb[0].mxu0
    %v3542 = vadd.f32 %v907, %v3541
    %3543 = vmatprep.mubr.bf16.mxu0 %v548
    %3544 = vmatmul.mubr.bf16.gmra.mrb[0].mxu0 %v547
    %v3545 = vpop.f32.mrb[0].mxu0
    %v3546 = vadd.f32 %v903, %v3545
    %v3547 = vpop.f32.mrb[0].mxu0
    %v3548 = vadd.f32 %v907, %v3547
    %v3549 = vpop.f32.mrb[0].mxu0
    %v3550 = vadd.f32 %v903, %v3549
    %v3551 = vpop.f32.mrb[0].mxu0
    %v3552 = vadd.f32 %v907, %v3551
    %3553 = vmatprep.mubr.bf16.mxu0 %v555
    %3554 = vmatmul.mubr.bf16.gmra.mrb[0].mxu0 %v554
    %v3555 = vpop.f32.mrb[0].mxu0
    %v3556 = vadd.f32 %v903, %v3555
    %v3557 = vpop.f32.mrb[0].mxu0
    %v3558 = vadd.f32 %v907, %v3557
    %v3559 = vpop.f32.mrb[0].mxu0
    %v3560 = vadd.f32 %v903, %v3559
    %v3561 = vpop.f32.mrb[0].mxu0
    %v3562 = vadd.f32 %v907, %v3561
    %3563 = vmatprep.mubr.bf16.mxu0 %v562
    %3564 = vmatmul.mubr.bf16.gmra.mrb[0].mxu0 %v561
    %v3565 = vpop.f32.mrb[0].mxu0
    %v3566 = vadd.f32 %v903, %v3565
    %v3567 = vpop.f32.mrb[0].mxu0
    %v3568 = vadd.f32 %v907, %v3567
    %v3569 = vpop.f32.mrb[0].mxu0
    %v3570 = vadd.f32 %v903, %v3569
    %v3571 = vpop.f32.mrb[0].mxu0
    %v3572 = vadd.f32 %v907, %v3571
    %3573 = vmatprep.mubr.bf16.mxu0 %v569
    %3574 = vmatmul.mubr.bf16.gmra.mrb[0].mxu0 %v568
    %v3575 = vpop.f32.mrb[0].mxu0
    %v3576 = vadd.f32 %v903, %v3575
    %v3577 = vpop.f32.mrb[0].mxu0
    %v3578 = vadd.f32 %v907, %v3577
    %v3579 = vpop.f32.mrb[0].mxu0
    %v3580 = vadd.f32 %v903, %v3579
    %v3581 = vpop.f32.mrb[0].mxu0
    %v3582 = vadd.f32 %v907, %v3581
    %3583 = vmatprep.mubr.bf16.mxu0 %v576
    %3584 = vmatmul.mubr.bf16.gmra.mrb[0].mxu0 %v575
    %v3585 = vpop.f32.mrb[0].mxu0
    %v3586 = vadd.f32 %v903, %v3585
    %v3587 = vpop.f32.mrb[0].mxu0
    %v3588 = vadd.f32 %v907, %v3587
    %v3589 = vpop.f32.mrb[0].mxu0
    %v3590 = vadd.f32 %v903, %v3589
    %v3591 = vpop.f32.mrb[0].mxu0
    %v3592 = vadd.f32 %v907, %v3591
    %3593 = vmatprep.mubr.bf16.mxu0 %v583
    %3594 = vmatmul.mubr.bf16.gmra.mrb[0].mxu0 %v582
    %v3595 = vpop.f32.mrb[0].mxu0
    %v3596 = vadd.f32 %v903, %v3595
    %v3597 = vpop.f32.mrb[0].mxu0
    %v3598 = vadd.f32 %v907, %v3597
    %v3599 = vpop.f32.mrb[0].mxu0
    %v3600 = vadd.f32 %v903, %v3599
    %v3601 = vpop.f32.mrb[0].mxu0
    %v3602 = vadd.f32 %v907, %v3601
    %3603 = vmatprep.mubr.bf16.mxu0 %v590
    %3604 = vmatmul.mubr.bf16.gmra.mrb[0].mxu0 %v589
    %v3605 = vpop.f32.mrb[0].mxu0
    %v3606 = vadd.f32 %v903, %v3605
    %v3607 = vpop.f32.mrb[0].mxu0
    %v3608 = vadd.f32 %v907, %v3607
    %v3609 = vpop.f32.mrb[0].mxu0
    %v3610 = vadd.f32 %v903, %v3609
    %v3611 = vpop.f32.mrb[0].mxu0
    %v3612 = vadd.f32 %v907, %v3611
    %3613 = vmatprep.mubr.bf16.mxu0 %v597
    %3614 = vmatmul.mubr.bf16.gmra.mrb[0].mxu0 %v596
    %v3615 = vpop.f32.mrb[0].mxu0
    %v3616 = vadd.f32 %v903, %v3615
    %v3617 = vpop.f32.mrb[0].mxu0
    %v3618 = vadd.f32 %v907, %v3617
    %v3619 = vpop.f32.mrb[0].mxu0
    %v3620 = vadd.f32 %v903, %v3619
    %v3621 = vpop.f32.mrb[0].mxu0
    %v3622 = vadd.f32 %v907, %v3621
    %3623 = vmatprep.mubr.bf16.mxu0 %v604
    %3624 = vmatmul.mubr.bf16.gmra.mrb[0].mxu0 %v603
    %v3625 = vpop.f32.mrb[0].mxu0
    %v3626 = vadd.f32 %v903, %v3625
    %v3627 = vpop.f32.mrb[0].mxu0
    %v3628 = vadd.f32 %v907, %v3627
    %v3629 = vpop.f32.mrb[0].mxu0
    %v3630 = vadd.f32 %v903, %v3629
    %v3631 = vpop.f32.mrb[0].mxu0
    %v3632 = vadd.f32 %v907, %v3631
    %3633 = vmatprep.mubr.bf16.mxu0 %v611
    %3634 = vmatmul.mubr.bf16.gmra.mrb[0].mxu0 %v610
    %v3635 = vpop.f32.mrb[0].mxu0
    %v3636 = vadd.f32 %v903, %v3635
    %v3637 = vpop.f32.mrb[0].mxu0
    %v3638 = vadd.f32 %v907, %v3637
    %v3639 = vpop.f32.mrb[0].mxu0
    %v3640 = vadd.f32 %v903, %v3639
    %v3641 = vpop.f32.mrb[0].mxu0
    %v3642 = vadd.f32 %v907, %v3641
    %3643 = vmatprep.mubr.bf16.mxu0 %v618
    %3644 = vmatmul.mubr.bf16.gmra.mrb[0].mxu0 %v617
    %v3645 = vpop.f32.mrb[0].mxu0
    %v3646 = vadd.f32 %v903, %v3645
    %v3647 = vpop.f32.mrb[0].mxu0
    %v3648 = vadd.f32 %v907, %v3647
    %v3649 = vpop.f32.mrb[0].mxu0
    %v3650 = vadd.f32 %v903, %v3649
    %v3651 = vpop.f32.mrb[0].mxu0
    %v3652 = vadd.f32 %v907, %v3651
    %3653 = vmatprep.mubr.bf16.mxu0 %v625
    %3654 = vmatmul.mubr.bf16.gmra.mrb[0].mxu0 %v624
    %v3655 = vpop.f32.mrb[0].mxu0
    %v3656 = vadd.f32 %v903, %v3655
    %v3657 = vpop.f32.mrb[0].mxu0
    %v3658 = vadd.f32 %v907, %v3657
    %v3659 = vpop.f32.mrb[0].mxu0
    %v3660 = vadd.f32 %v903, %v3659
    %v3661 = vpop.f32.mrb[0].mxu0
    %v3662 = vadd.f32 %v907, %v3661
    %3663 = vmatprep.mubr.bf16.mxu0 %v632
    %3664 = vmatmul.mubr.bf16.gmra.mrb[0].mxu0 %v631
    %v3665 = vpop.f32.mrb[0].mxu0
    %v3666 = vadd.f32 %v903, %v3665
    %v3667 = vpop.f32.mrb[0].mxu0
    %v3668 = vadd.f32 %v907, %v3667
    %v3669 = vpop.f32.mrb[0].mxu0
    %v3670 = vadd.f32 %v903, %v3669
    %v3671 = vpop.f32.mrb[0].mxu0
    %v3672 = vadd.f32 %v907, %v3671
    %3673 = vmatprep.mubr.bf16.mxu0 %v639
    %3674 = vmatmul.mubr.bf16.gmra.mrb[0].mxu0 %v638
    %v3675 = vpop.f32.mrb[0].mxu0
    %v3676 = vadd.f32 %v903, %v3675
    %v3677 = vpop.f32.mrb[0].mxu0
    %v3678 = vadd.f32 %v907, %v3677
    %v3679 = vpop.f32.mrb[0].mxu0
    %v3680 = vadd.f32 %v903, %v3679
    %v3681 = vpop.f32.mrb[0].mxu0
    %v3682 = vadd.f32 %v907, %v3681
    %3683 = vmatprep.mubr.bf16.mxu0 %v646
    %3684 = vmatmul.mubr.bf16.gmra.mrb[0].mxu0 %v645
    %v3685 = vpop.f32.mrb[0].mxu0
    %v3686 = vadd.f32 %v903, %v3685
    %v3687 = vpop.f32.mrb[0].mxu0
    %v3688 = vadd.f32 %v907, %v3687
    %v3689 = vpop.f32.mrb[0].mxu0
    %v3690 = vadd.f32 %v903, %v3689
    %v3691 = vpop.f32.mrb[0].mxu0
    %v3692 = vadd.f32 %v907, %v3691
    %3693 = vmatprep.mubr.bf16.mxu0 %v653
    %3694 = vmatmul.mubr.bf16.gmra.mrb[0].mxu0 %v652
    %v3695 = vpop.f32.mrb[0].mxu0
    %v3696 = vadd.f32 %v903, %v3695
    %v3697 = vpop.f32.mrb[0].mxu0
    %v3698 = vadd.f32 %v907, %v3697
    %v3699 = vpop.f32.mrb[0].mxu0
    %v3700 = vadd.f32 %v903, %v3699
    %v3701 = vpop.f32.mrb[0].mxu0
    %v3702 = vadd.f32 %v907, %v3701
    %3703 = vmatprep.mubr.bf16.mxu0 %v660
    %3704 = vmatmul.mubr.bf16.gmra.mrb[0].mxu0 %v659
    %v3705 = vpop.f32.mrb[0].mxu0
    %v3706 = vadd.f32 %v903, %v3705
    %v3707 = vpop.f32.mrb[0].mxu0
    %v3708 = vadd.f32 %v907, %v3707
    %v3709 = vpop.f32.mrb[0].mxu0
    %v3710 = vadd.f32 %v903, %v3709
    %v3711 = vpop.f32.mrb[0].mxu0
    %v3712 = vadd.f32 %v907, %v3711
    %3713 = vmatprep.mubr.bf16.mxu0 %v667
    %3714 = vmatmul.mubr.bf16.gmra.mrb[0].mxu0 %v666
    %v3715 = vpop.f32.mrb[0].mxu0
    %v3716 = vadd.f32 %v903, %v3715
    %v3717 = vpop.f32.mrb[0].mxu0
    %v3718 = vadd.f32 %v907, %v3717
    %v3719 = vpop.f32.mrb[0].mxu0
    %v3720 = vadd.f32 %v903, %v3719
    %v3721 = vpop.f32.mrb[0].mxu0
    %v3722 = vadd.f32 %v907, %v3721
    %3723 = vmatprep.mubr.bf16.mxu0 %v674
    %3724 = vmatmul.mubr.bf16.gmra.mrb[0].mxu0 %v673
    %v3725 = vpop.f32.mrb[0].mxu0
    %v3726 = vadd.f32 %v903, %v3725
    %v3727 = vpop.f32.mrb[0].mxu0
    %v3728 = vadd.f32 %v907, %v3727
    %v3729 = vpop.f32.mrb[0].mxu0
    %v3730 = vadd.f32 %v903, %v3729
    %v3731 = vpop.f32.mrb[0].mxu0
    %v3732 = vadd.f32 %v907, %v3731
    %3733 = vmatprep.mubr.bf16.mxu0 %v681
    %3734 = vmatmul.mubr.bf16.gmra.mrb[0].mxu0 %v680
    %v3735 = vpop.f32.mrb[0].mxu0
    %v3736 = vadd.f32 %v903, %v3735
    %v3737 = vpop.f32.mrb[0].mxu0
    %v3738 = vadd.f32 %v907, %v3737
    %v3739 = vpop.f32.mrb[0].mxu0
    %v3740 = vadd.f32 %v903, %v3739
    %v3741 = vpop.f32.mrb[0].mxu0
    %v3742 = vadd.f32 %v907, %v3741
    %3743 = vmatprep.mubr.bf16.mxu0 %v688
    %3744 = vmatmul.mubr.bf16.gmra.mrb[0].mxu0 %v687
    %v3745 = vpop.f32.mrb[0].mxu0
    %v3746 = vadd.f32 %v903, %v3745
    %v3747 = vpop.f32.mrb[0].mxu0
    %v3748 = vadd.f32 %v907, %v3747
    %v3749 = vpop.f32.mrb[0].mxu0
    %v3750 = vadd.f32 %v903, %v3749
    %v3751 = vpop.f32.mrb[0].mxu0
    %v3752 = vadd.f32 %v907, %v3751
    %3753 = vdwg.mxu0
    %3754 = vmatprep.subr.bf16.mxu0 %v1567
    %3755 = vmatpush1.bf16.msra.mxu0 %v1566
    %3756 = vmatprep.subr.bf16.mxu0 %v1571
    %3757 = vmatpush1.bf16.msra.mxu0 %v1570
    %3758 = vmatprep.subr.bf16.mxu0 %v1575
    %3759 = vmatpush1.bf16.msra.mxu0 %v1574
    %3760 = vmatprep.subr.bf16.mxu0 %v1579
    %3761 = vmatpush1.bf16.msra.mxu0 %v1578
    %3762 = vmatprep.subr.bf16.mxu0 %v1583
    %3763 = vmatpush1.bf16.msra.mxu0 %v1582
    %3764 = vmatprep.subr.bf16.mxu0 %v1587
    %3765 = vmatpush1.bf16.msra.mxu0 %v1586
    %3766 = vmatprep.subr.bf16.mxu0 %v1591
    %3767 = vmatpush1.bf16.msra.mxu0 %v1590
    %3768 = vmatprep.subr.bf16.mxu0 %v1595
    %3769 = vmatpush1.bf16.msra.mxu0 %v1594
    %3770 = vmatprep.subr.bf16.mxu0 %v1599
    %3771 = vmatpush1.bf16.msra.mxu0 %v1598
    %3772 = vmatprep.subr.bf16.mxu0 %v1603
    %3773 = vmatpush1.bf16.msra.mxu0 %v1602
    %3774 = vmatprep.subr.bf16.mxu0 %v1607
    %3775 = vmatpush1.bf16.msra.mxu0 %v1606
    %3776 = vmatprep.subr.bf16.mxu0 %v1611
    %3777 = vmatpush1.bf16.msra.mxu0 %v1610
    %3778 = vmatprep.subr.bf16.mxu0 %v1615
    %3779 = vmatpush1.bf16.msra.mxu0 %v1614
    %3780 = vmatprep.subr.bf16.mxu0 %v1619
    %3781 = vmatpush1.bf16.msra.mxu0 %v1618
    %3782 = vmatprep.subr.bf16.mxu0 %v1623
    %3783 = vmatpush1.bf16.msra.mxu0 %v1622
    %3784 = vmatprep.subr.bf16.mxu0 %v1627
    %3785 = vmatpush1.bf16.msra.mxu0 %v1626
    %3786 = vmatprep.mubr.bf16.mxu0 %v473
    %3787 = vmatmul.mubr.bf16.gmra.mrb[0].mxu0 %v472
    %v3788 = vpop.f32.mrb[0].mxu0
    %v3789 = vadd.f32 %v3436, %v3788
    %v3790 = vpop.f32.mrb[0].mxu0
    %v3791 = vadd.f32 %v3438, %v3790
    %v3792 = vpop.f32.mrb[0].mxu0
    %v3793 = vadd.f32 %v3440, %v3792
    %v3794 = vpop.f32.mrb[0].mxu0
    %v3795 = vadd.f32 %v3442, %v3794
    %3796 = vmatprep.mubr.bf16.mxu0 %v480
    %3797 = vmatmul.mubr.bf16.gmra.mrb[0].mxu0 %v479
    %v3798 = vpop.f32.mrb[0].mxu0
    %v3799 = vadd.f32 %v3446, %v3798
    %v3800 = vpop.f32.mrb[0].mxu0
    %v3801 = vadd.f32 %v3448, %v3800
    %v3802 = vpop.f32.mrb[0].mxu0
    %v3803 = vadd.f32 %v3450, %v3802
    %v3804 = vpop.f32.mrb[0].mxu0
    %v3805 = vadd.f32 %v3452, %v3804
    %3806 = vmatprep.mubr.bf16.mxu0 %v487
    %3807 = vmatmul.mubr.bf16.gmra.mrb[0].mxu0 %v486
    %v3808 = vpop.f32.mrb[0].mxu0
    %v3809 = vadd.f32 %v3456, %v3808
    %v3810 = vpop.f32.mrb[0].mxu0
    %v3811 = vadd.f32 %v3458, %v3810
    %v3812 = vpop.f32.mrb[0].mxu0
    %v3813 = vadd.f32 %v3460, %v3812
    %v3814 = vpop.f32.mrb[0].mxu0
    %v3815 = vadd.f32 %v3462, %v3814
    %3816 = vmatprep.mubr.bf16.mxu0 %v494
    %3817 = vmatmul.mubr.bf16.gmra.mrb[0].mxu0 %v493
    %v3818 = vpop.f32.mrb[0].mxu0
    %v3819 = vadd.f32 %v3466, %v3818
    %v3820 = vpop.f32.mrb[0].mxu0
    %v3821 = vadd.f32 %v3468, %v3820
    %v3822 = vpop.f32.mrb[0].mxu0
    %v3823 = vadd.f32 %v3470, %v3822
    %v3824 = vpop.f32.mrb[0].mxu0
    %v3825 = vadd.f32 %v3472, %v3824
    %3826 = vmatprep.mubr.bf16.mxu0 %v501
    %3827 = vmatmul.mubr.bf16.gmra.mrb[0].mxu0 %v500
    %v3828 = vpop.f32.mrb[0].mxu0
    %v3829 = vadd.f32 %v3476, %v3828
    %v3830 = vpop.f32.mrb[0].mxu0
    %v3831 = vadd.f32 %v3478, %v3830
    %v3832 = vpop.f32.mrb[0].mxu0
    %v3833 = vadd.f32 %v3480, %v3832
    %v3834 = vpop.f32.mrb[0].mxu0
    %v3835 = vadd.f32 %v3482, %v3834
    %3836 = vmatprep.mubr.bf16.mxu0 %v508
    %3837 = vmatmul.mubr.bf16.gmra.mrb[0].mxu0 %v507
    %v3838 = vpop.f32.mrb[0].mxu0
    %v3839 = vadd.f32 %v3486, %v3838
    %v3840 = vpop.f32.mrb[0].mxu0
    %v3841 = vadd.f32 %v3488, %v3840
    %v3842 = vpop.f32.mrb[0].mxu0
    %v3843 = vadd.f32 %v3490, %v3842
    %v3844 = vpop.f32.mrb[0].mxu0
    %v3845 = vadd.f32 %v3492, %v3844
    %3846 = vmatprep.mubr.bf16.mxu0 %v515
    %3847 = vmatmul.mubr.bf16.gmra.mrb[0].mxu0 %v514
    %v3848 = vpop.f32.mrb[0].mxu0
    %v3849 = vadd.f32 %v3496, %v3848
    %v3850 = vpop.f32.mrb[0].mxu0
    %v3851 = vadd.f32 %v3498, %v3850
    %v3852 = vpop.f32.mrb[0].mxu0
    %v3853 = vadd.f32 %v3500, %v3852
    %v3854 = vpop.f32.mrb[0].mxu0
    %v3855 = vadd.f32 %v3502, %v3854
    %3856 = vmatprep.mubr.bf16.mxu0 %v522
    %3857 = vmatmul.mubr.bf16.gmra.mrb[0].mxu0 %v521
    %v3858 = vpop.f32.mrb[0].mxu0
    %v3859 = vadd.f32 %v3506, %v3858
    %v3860 = vpop.f32.mrb[0].mxu0
    %v3861 = vadd.f32 %v3508, %v3860
    %v3862 = vpop.f32.mrb[0].mxu0
    %v3863 = vadd.f32 %v3510, %v3862
    %v3864 = vpop.f32.mrb[0].mxu0
    %v3865 = vadd.f32 %v3512, %v3864
    %3866 = vmatprep.mubr.bf16.mxu0 %v529
    %3867 = vmatmul.mubr.bf16.gmra.mrb[0].mxu0 %v528
    %v3868 = vpop.f32.mrb[0].mxu0
    %v3869 = vadd.f32 %v3516, %v3868
    %v3870 = vpop.f32.mrb[0].mxu0
    %v3871 = vadd.f32 %v3518, %v3870
    %v3872 = vpop.f32.mrb[0].mxu0
    %v3873 = vadd.f32 %v3520, %v3872
    %v3874 = vpop.f32.mrb[0].mxu0
    %v3875 = vadd.f32 %v3522, %v3874
    %3876 = vmatprep.mubr.bf16.mxu0 %v536
    %3877 = vmatmul.mubr.bf16.gmra.mrb[0].mxu0 %v535
    %v3878 = vpop.f32.mrb[0].mxu0
    %v3879 = vadd.f32 %v3526, %v3878
    %v3880 = vpop.f32.mrb[0].mxu0
    %v3881 = vadd.f32 %v3528, %v3880
    %v3882 = vpop.f32.mrb[0].mxu0
    %v3883 = vadd.f32 %v3530, %v3882
    %v3884 = vpop.f32.mrb[0].mxu0
    %v3885 = vadd.f32 %v3532, %v3884
    %3886 = vmatprep.mubr.bf16.mxu0 %v543
    %3887 = vmatmul.mubr.bf16.gmra.mrb[0].mxu0 %v542
    %v3888 = vpop.f32.mrb[0].mxu0
    %v3889 = vadd.f32 %v3536, %v3888
    %v3890 = vpop.f32.mrb[0].mxu0
    %v3891 = vadd.f32 %v3538, %v3890
    %v3892 = vpop.f32.mrb[0].mxu0
    %v3893 = vadd.f32 %v3540, %v3892
    %v3894 = vpop.f32.mrb[0].mxu0
    %v3895 = vadd.f32 %v3542, %v3894
    %3896 = vmatprep.mubr.bf16.mxu0 %v550
    %3897 = vmatmul.mubr.bf16.gmra.mrb[0].mxu0 %v549
    %v3898 = vpop.f32.mrb[0].mxu0
    %v3899 = vadd.f32 %v3546, %v3898
    %v3900 = vpop.f32.mrb[0].mxu0
    %v3901 = vadd.f32 %v3548, %v3900
    %v3902 = vpop.f32.mrb[0].mxu0
    %v3903 = vadd.f32 %v3550, %v3902
    %v3904 = vpop.f32.mrb[0].mxu0
    %v3905 = vadd.f32 %v3552, %v3904
    %3906 = vmatprep.mubr.bf16.mxu0 %v557
    %3907 = vmatmul.mubr.bf16.gmra.mrb[0].mxu0 %v556
    %v3908 = vpop.f32.mrb[0].mxu0
    %v3909 = vadd.f32 %v3556, %v3908
    %v3910 = vpop.f32.mrb[0].mxu0
    %v3911 = vadd.f32 %v3558, %v3910
    %v3912 = vpop.f32.mrb[0].mxu0
    %v3913 = vadd.f32 %v3560, %v3912
    %v3914 = vpop.f32.mrb[0].mxu0
    %v3915 = vadd.f32 %v3562, %v3914
    %3916 = vmatprep.mubr.bf16.mxu0 %v564
    %3917 = vmatmul.mubr.bf16.gmra.mrb[0].mxu0 %v563
    %v3918 = vpop.f32.mrb[0].mxu0
    %v3919 = vadd.f32 %v3566, %v3918
    %v3920 = vpop.f32.mrb[0].mxu0
    %v3921 = vadd.f32 %v3568, %v3920
    %v3922 = vpop.f32.mrb[0].mxu0
    %v3923 = vadd.f32 %v3570, %v3922
    %v3924 = vpop.f32.mrb[0].mxu0
    %v3925 = vadd.f32 %v3572, %v3924
    %3926 = vmatprep.mubr.bf16.mxu0 %v571
    %3927 = vmatmul.mubr.bf16.gmra.mrb[0].mxu0 %v570
    %v3928 = vpop.f32.mrb[0].mxu0
    %v3929 = vadd.f32 %v3576, %v3928
    %v3930 = vpop.f32.mrb[0].mxu0
    %v3931 = vadd.f32 %v3578, %v3930
    %v3932 = vpop.f32.mrb[0].mxu0
    %v3933 = vadd.f32 %v3580, %v3932
    %v3934 = vpop.f32.mrb[0].mxu0
    %v3935 = vadd.f32 %v3582, %v3934
    %3936 = vmatprep.mubr.bf16.mxu0 %v578
    %3937 = vmatmul.mubr.bf16.gmra.mrb[0].mxu0 %v577
    %v3938 = vpop.f32.mrb[0].mxu0
    %v3939 = vadd.f32 %v3586, %v3938
    %v3940 = vpop.f32.mrb[0].mxu0
    %v3941 = vadd.f32 %v3588, %v3940
    %v3942 = vpop.f32.mrb[0].mxu0
    %v3943 = vadd.f32 %v3590, %v3942
    %v3944 = vpop.f32.mrb[0].mxu0
    %v3945 = vadd.f32 %v3592, %v3944
    %3946 = vmatprep.mubr.bf16.mxu0 %v585
    %3947 = vmatmul.mubr.bf16.gmra.mrb[0].mxu0 %v584
    %v3948 = vpop.f32.mrb[0].mxu0
    %v3949 = vadd.f32 %v3596, %v3948
    %v3950 = vpop.f32.mrb[0].mxu0
    %v3951 = vadd.f32 %v3598, %v3950
    %v3952 = vpop.f32.mrb[0].mxu0
    %v3953 = vadd.f32 %v3600, %v3952
    %v3954 = vpop.f32.mrb[0].mxu0
    %v3955 = vadd.f32 %v3602, %v3954
    %3956 = vmatprep.mubr.bf16.mxu0 %v592
    %3957 = vmatmul.mubr.bf16.gmra.mrb[0].mxu0 %v591
    %v3958 = vpop.f32.mrb[0].mxu0
    %v3959 = vadd.f32 %v3606, %v3958
    %v3960 = vpop.f32.mrb[0].mxu0
    %v3961 = vadd.f32 %v3608, %v3960
    %v3962 = vpop.f32.mrb[0].mxu0
    %v3963 = vadd.f32 %v3610, %v3962
    %v3964 = vpop.f32.mrb[0].mxu0
    %v3965 = vadd.f32 %v3612, %v3964
    %3966 = vmatprep.mubr.bf16.mxu0 %v599
    %3967 = vmatmul.mubr.bf16.gmra.mrb[0].mxu0 %v598
    %v3968 = vpop.f32.mrb[0].mxu0
    %v3969 = vadd.f32 %v3616, %v3968
    %v3970 = vpop.f32.mrb[0].mxu0
    %v3971 = vadd.f32 %v3618, %v3970
    %v3972 = vpop.f32.mrb[0].mxu0
    %v3973 = vadd.f32 %v3620, %v3972
    %v3974 = vpop.f32.mrb[0].mxu0
    %v3975 = vadd.f32 %v3622, %v3974
    %3976 = vmatprep.mubr.bf16.mxu0 %v606
    %3977 = vmatmul.mubr.bf16.gmra.mrb[0].mxu0 %v605
    %v3978 = vpop.f32.mrb[0].mxu0
    %v3979 = vadd.f32 %v3626, %v3978
    %v3980 = vpop.f32.mrb[0].mxu0
    %v3981 = vadd.f32 %v3628, %v3980
    %v3982 = vpop.f32.mrb[0].mxu0
    %v3983 = vadd.f32 %v3630, %v3982
    %v3984 = vpop.f32.mrb[0].mxu0
    %v3985 = vadd.f32 %v3632, %v3984
    %3986 = vmatprep.mubr.bf16.mxu0 %v613
    %3987 = vmatmul.mubr.bf16.gmra.mrb[0].mxu0 %v612
    %v3988 = vpop.f32.mrb[0].mxu0
    %v3989 = vadd.f32 %v3636, %v3988
    %v3990 = vpop.f32.mrb[0].mxu0
    %v3991 = vadd.f32 %v3638, %v3990
    %v3992 = vpop.f32.mrb[0].mxu0
    %v3993 = vadd.f32 %v3640, %v3992
    %v3994 = vpop.f32.mrb[0].mxu0
    %v3995 = vadd.f32 %v3642, %v3994
    %3996 = vmatprep.mubr.bf16.mxu0 %v620
    %3997 = vmatmul.mubr.bf16.gmra.mrb[0].mxu0 %v619
    %v3998 = vpop.f32.mrb[0].mxu0
    %v3999 = vadd.f32 %v3646, %v3998
    %v4000 = vpop.f32.mrb[0].mxu0
    %v4001 = vadd.f32 %v3648, %v4000
    %v4002 = vpop.f32.mrb[0].mxu0
    %v4003 = vadd.f32 %v3650, %v4002
    %v4004 = vpop.f32.mrb[0].mxu0
    %v4005 = vadd.f32 %v3652, %v4004
    %4006 = vmatprep.mubr.bf16.mxu0 %v627
    %4007 = vmatmul.mubr.bf16.gmra.mrb[0].mxu0 %v626
    %v4008 = vpop.f32.mrb[0].mxu0
    %v4009 = vadd.f32 %v3656, %v4008
    %v4010 = vpop.f32.mrb[0].mxu0
    %v4011 = vadd.f32 %v3658, %v4010
    %v4012 = vpop.f32.mrb[0].mxu0
    %v4013 = vadd.f32 %v3660, %v4012
    %v4014 = vpop.f32.mrb[0].mxu0
    %v4015 = vadd.f32 %v3662, %v4014
    %4016 = vmatprep.mubr.bf16.mxu0 %v634
    %4017 = vmatmul.mubr.bf16.gmra.mrb[0].mxu0 %v633
    %v4018 = vpop.f32.mrb[0].mxu0
    %v4019 = vadd.f32 %v3666, %v4018
    %v4020 = vpop.f32.mrb[0].mxu0
    %v4021 = vadd.f32 %v3668, %v4020
    %v4022 = vpop.f32.mrb[0].mxu0
    %v4023 = vadd.f32 %v3670, %v4022
    %v4024 = vpop.f32.mrb[0].mxu0
    %v4025 = vadd.f32 %v3672, %v4024
    %4026 = vmatprep.mubr.bf16.mxu0 %v641
    %4027 = vmatmul.mubr.bf16.gmra.mrb[0].mxu0 %v640
    %v4028 = vpop.f32.mrb[0].mxu0
    %v4029 = vadd.f32 %v3676, %v4028
    %v4030 = vpop.f32.mrb[0].mxu0
    %v4031 = vadd.f32 %v3678, %v4030
    %v4032 = vpop.f32.mrb[0].mxu0
    %v4033 = vadd.f32 %v3680, %v4032
    %v4034 = vpop.f32.mrb[0].mxu0
    %v4035 = vadd.f32 %v3682, %v4034
    %4036 = vmatprep.mubr.bf16.mxu0 %v648
    %4037 = vmatmul.mubr.bf16.gmra.mrb[0].mxu0 %v647
    %v4038 = vpop.f32.mrb[0].mxu0
    %v4039 = vadd.f32 %v3686, %v4038
    %v4040 = vpop.f32.mrb[0].mxu0
    %v4041 = vadd.f32 %v3688, %v4040
    %v4042 = vpop.f32.mrb[0].mxu0
    %v4043 = vadd.f32 %v3690, %v4042
    %v4044 = vpop.f32.mrb[0].mxu0
    %v4045 = vadd.f32 %v3692, %v4044
    %4046 = vmatprep.mubr.bf16.mxu0 %v655
    %4047 = vmatmul.mubr.bf16.gmra.mrb[0].mxu0 %v654
    %v4048 = vpop.f32.mrb[0].mxu0
    %v4049 = vadd.f32 %v3696, %v4048
    %v4050 = vpop.f32.mrb[0].mxu0
    %v4051 = vadd.f32 %v3698, %v4050
    %v4052 = vpop.f32.mrb[0].mxu0
    %v4053 = vadd.f32 %v3700, %v4052
    %v4054 = vpop.f32.mrb[0].mxu0
    %v4055 = vadd.f32 %v3702, %v4054
    %4056 = vmatprep.mubr.bf16.mxu0 %v662
    %4057 = vmatmul.mubr.bf16.gmra.mrb[0].mxu0 %v661
    %v4058 = vpop.f32.mrb[0].mxu0
    %v4059 = vadd.f32 %v3706, %v4058
    %v4060 = vpop.f32.mrb[0].mxu0
    %v4061 = vadd.f32 %v3708, %v4060
    %v4062 = vpop.f32.mrb[0].mxu0
    %v4063 = vadd.f32 %v3710, %v4062
    %v4064 = vpop.f32.mrb[0].mxu0
    %v4065 = vadd.f32 %v3712, %v4064
    %4066 = vmatprep.mubr.bf16.mxu0 %v669
    %4067 = vmatmul.mubr.bf16.gmra.mrb[0].mxu0 %v668
    %v4068 = vpop.f32.mrb[0].mxu0
    %v4069 = vadd.f32 %v3716, %v4068
    %v4070 = vpop.f32.mrb[0].mxu0
    %v4071 = vadd.f32 %v3718, %v4070
    %v4072 = vpop.f32.mrb[0].mxu0
    %v4073 = vadd.f32 %v3720, %v4072
    %v4074 = vpop.f32.mrb[0].mxu0
    %v4075 = vadd.f32 %v3722, %v4074
    %4076 = vmatprep.mubr.bf16.mxu0 %v676
    %4077 = vmatmul.mubr.bf16.gmra.mrb[0].mxu0 %v675
    %v4078 = vpop.f32.mrb[0].mxu0
    %v4079 = vadd.f32 %v3726, %v4078
    %v4080 = vpop.f32.mrb[0].mxu0
    %v4081 = vadd.f32 %v3728, %v4080
    %v4082 = vpop.f32.mrb[0].mxu0
    %v4083 = vadd.f32 %v3730, %v4082
    %v4084 = vpop.f32.mrb[0].mxu0
    %v4085 = vadd.f32 %v3732, %v4084
    %4086 = vmatprep.mubr.bf16.mxu0 %v683
    %4087 = vmatmul.mubr.bf16.gmra.mrb[0].mxu0 %v682
    %v4088 = vpop.f32.mrb[0].mxu0
    %v4089 = vadd.f32 %v3736, %v4088
    %v4090 = vpop.f32.mrb[0].mxu0
    %v4091 = vadd.f32 %v3738, %v4090
    %v4092 = vpop.f32.mrb[0].mxu0
    %v4093 = vadd.f32 %v3740, %v4092
    %v4094 = vpop.f32.mrb[0].mxu0
    %v4095 = vadd.f32 %v3742, %v4094
    %4096 = vmatprep.mubr.bf16.mxu0 %v690
    %4097 = vmatmul.mubr.bf16.gmra.mrb[0].mxu0 %v689
    %v4098 = vpop.f32.mrb[0].mxu0
    %v4099 = vadd.f32 %v3746, %v4098
    %v4100 = vpop.f32.mrb[0].mxu0
    %v4101 = vadd.f32 %v3748, %v4100
    %v4102 = vpop.f32.mrb[0].mxu0
    %v4103 = vadd.f32 %v3750, %v4102
    %v4104 = vpop.f32.mrb[0].mxu0
    %v4105 = vadd.f32 %v3752, %v4104
    %4106 = vdwg.mxu0
    %4107 = vmatprep.subr.bf16.mxu0 %v1631
    %4108 = vmatpush1.bf16.msra.mxu0 %v1630
    %4109 = vmatprep.subr.bf16.mxu0 %v1635
    %4110 = vmatpush1.bf16.msra.mxu0 %v1634
    %4111 = vmatprep.subr.bf16.mxu0 %v1639
    %4112 = vmatpush1.bf16.msra.mxu0 %v1638
    %4113 = vmatprep.subr.bf16.mxu0 %v1643
    %4114 = vmatpush1.bf16.msra.mxu0 %v1642
    %4115 = vmatprep.subr.bf16.mxu0 %v1647
    %4116 = vmatpush1.bf16.msra.mxu0 %v1646
    %4117 = vmatprep.subr.bf16.mxu0 %v1651
    %4118 = vmatpush1.bf16.msra.mxu0 %v1650
    %4119 = vmatprep.subr.bf16.mxu0 %v1655
    %4120 = vmatpush1.bf16.msra.mxu0 %v1654
    %4121 = vmatprep.subr.bf16.mxu0 %v1659
    %4122 = vmatpush1.bf16.msra.mxu0 %v1658
    %4123 = vmatprep.subr.bf16.mxu0 %v1663
    %4124 = vmatpush1.bf16.msra.mxu0 %v1662
    %4125 = vmatprep.subr.bf16.mxu0 %v1667
    %4126 = vmatpush1.bf16.msra.mxu0 %v1666
    %4127 = vmatprep.subr.bf16.mxu0 %v1671
    %4128 = vmatpush1.bf16.msra.mxu0 %v1670
    %4129 = vmatprep.subr.bf16.mxu0 %v1675
    %4130 = vmatpush1.bf16.msra.mxu0 %v1674
    %4131 = vmatprep.subr.bf16.mxu0 %v1679
    %4132 = vmatpush1.bf16.msra.mxu0 %v1678
    %4133 = vmatprep.subr.bf16.mxu0 %v1683
    %4134 = vmatpush1.bf16.msra.mxu0 %v1682
    %4135 = vmatprep.subr.bf16.mxu0 %v1687
    %4136 = vmatpush1.bf16.msra.mxu0 %v1686
    %4137 = vmatprep.subr.bf16.mxu0 %v1691
    %4138 = vmatpush1.bf16.msra.mxu0 %v1690
    %4139 = vmatprep.mubr.bf16.mxu0 %v475
    %4140 = vmatmul.mubr.bf16.gmra.mrb[0].mxu0 %v474
    %v4141 = vpop.f32.mrb[0].mxu0
    %v4142 = vadd.f32 %v3789, %v4141
    %v4143 = vpop.f32.mrb[0].mxu0
    %v4144 = vadd.f32 %v3791, %v4143
    %v4145 = vpop.f32.mrb[0].mxu0
    %v4146 = vadd.f32 %v3793, %v4145
    %v4147 = vpop.f32.mrb[0].mxu0
    %v4148 = vadd.f32 %v3795, %v4147
    %4149 = vmatprep.mubr.bf16.mxu0 %v482
    %4150 = vmatmul.mubr.bf16.gmra.mrb[0].mxu0 %v481
    %v4151 = vpop.f32.mrb[0].mxu0
    %v4152 = vadd.f32 %v3799, %v4151
    %v4153 = vpop.f32.mrb[0].mxu0
    %v4154 = vadd.f32 %v3801, %v4153
    %v4155 = vpop.f32.mrb[0].mxu0
    %v4156 = vadd.f32 %v3803, %v4155
    %v4157 = vpop.f32.mrb[0].mxu0
    %v4158 = vadd.f32 %v3805, %v4157
    %4159 = vmatprep.mubr.bf16.mxu0 %v489
    %4160 = vmatmul.mubr.bf16.gmra.mrb[0].mxu0 %v488
    %v4161 = vpop.f32.mrb[0].mxu0
    %v4162 = vadd.f32 %v3809, %v4161
    %v4163 = vpop.f32.mrb[0].mxu0
    %v4164 = vadd.f32 %v3811, %v4163
    %v4165 = vpop.f32.mrb[0].mxu0
    %v4166 = vadd.f32 %v3813, %v4165
    %v4167 = vpop.f32.mrb[0].mxu0
    %v4168 = vadd.f32 %v3815, %v4167
    %4169 = vmatprep.mubr.bf16.mxu0 %v496
    %4170 = vmatmul.mubr.bf16.gmra.mrb[0].mxu0 %v495
    %v4171 = vpop.f32.mrb[0].mxu0
    %v4172 = vadd.f32 %v3819, %v4171
    %v4173 = vpop.f32.mrb[0].mxu0
    %v4174 = vadd.f32 %v3821, %v4173
    %v4175 = vpop.f32.mrb[0].mxu0
    %v4176 = vadd.f32 %v3823, %v4175
    %v4177 = vpop.f32.mrb[0].mxu0
    %v4178 = vadd.f32 %v3825, %v4177
    %4179 = vmatprep.mubr.bf16.mxu0 %v503
    %4180 = vmatmul.mubr.bf16.gmra.mrb[0].mxu0 %v502
    %v4181 = vpop.f32.mrb[0].mxu0
    %v4182 = vadd.f32 %v3829, %v4181
    %v4183 = vpop.f32.mrb[0].mxu0
    %v4184 = vadd.f32 %v3831, %v4183
    %v4185 = vpop.f32.mrb[0].mxu0
    %v4186 = vadd.f32 %v3833, %v4185
    %v4187 = vpop.f32.mrb[0].mxu0
    %v4188 = vadd.f32 %v3835, %v4187
    %4189 = vmatprep.mubr.bf16.mxu0 %v510
    %4190 = vmatmul.mubr.bf16.gmra.mrb[0].mxu0 %v509
    %v4191 = vpop.f32.mrb[0].mxu0
    %v4192 = vadd.f32 %v3839, %v4191
    %v4193 = vpop.f32.mrb[0].mxu0
    %v4194 = vadd.f32 %v3841, %v4193
    %v4195 = vpop.f32.mrb[0].mxu0
    %v4196 = vadd.f32 %v3843, %v4195
    %v4197 = vpop.f32.mrb[0].mxu0
    %v4198 = vadd.f32 %v3845, %v4197
    %4199 = vmatprep.mubr.bf16.mxu0 %v517
    %4200 = vmatmul.mubr.bf16.gmra.mrb[0].mxu0 %v516
    %v4201 = vpop.f32.mrb[0].mxu0
    %v4202 = vadd.f32 %v3849, %v4201
    %v4203 = vpop.f32.mrb[0].mxu0
    %v4204 = vadd.f32 %v3851, %v4203
    %v4205 = vpop.f32.mrb[0].mxu0
    %v4206 = vadd.f32 %v3853, %v4205
    %v4207 = vpop.f32.mrb[0].mxu0
    %v4208 = vadd.f32 %v3855, %v4207
    %4209 = vmatprep.mubr.bf16.mxu0 %v524
    %4210 = vmatmul.mubr.bf16.gmra.mrb[0].mxu0 %v523
    %v4211 = vpop.f32.mrb[0].mxu0
    %v4212 = vadd.f32 %v3859, %v4211
    %v4213 = vpop.f32.mrb[0].mxu0
    %v4214 = vadd.f32 %v3861, %v4213
    %v4215 = vpop.f32.mrb[0].mxu0
    %v4216 = vadd.f32 %v3863, %v4215
    %v4217 = vpop.f32.mrb[0].mxu0
    %v4218 = vadd.f32 %v3865, %v4217
    %4219 = vmatprep.mubr.bf16.mxu0 %v531
    %4220 = vmatmul.mubr.bf16.gmra.mrb[0].mxu0 %v530
    %v4221 = vpop.f32.mrb[0].mxu0
    %v4222 = vadd.f32 %v3869, %v4221
    %v4223 = vpop.f32.mrb[0].mxu0
    %v4224 = vadd.f32 %v3871, %v4223
    %v4225 = vpop.f32.mrb[0].mxu0
    %v4226 = vadd.f32 %v3873, %v4225
    %v4227 = vpop.f32.mrb[0].mxu0
    %v4228 = vadd.f32 %v3875, %v4227
    %4229 = vmatprep.mubr.bf16.mxu0 %v538
    %4230 = vmatmul.mubr.bf16.gmra.mrb[0].mxu0 %v537
    %v4231 = vpop.f32.mrb[0].mxu0
    %v4232 = vadd.f32 %v3879, %v4231
    %v4233 = vpop.f32.mrb[0].mxu0
    %v4234 = vadd.f32 %v3881, %v4233
    %v4235 = vpop.f32.mrb[0].mxu0
    %v4236 = vadd.f32 %v3883, %v4235
    %v4237 = vpop.f32.mrb[0].mxu0
    %v4238 = vadd.f32 %v3885, %v4237
    %4239 = vmatprep.mubr.bf16.mxu0 %v545
    %4240 = vmatmul.mubr.bf16.gmra.mrb[0].mxu0 %v544
    %v4241 = vpop.f32.mrb[0].mxu0
    %v4242 = vadd.f32 %v3889, %v4241
    %v4243 = vpop.f32.mrb[0].mxu0
    %v4244 = vadd.f32 %v3891, %v4243
    %v4245 = vpop.f32.mrb[0].mxu0
    %v4246 = vadd.f32 %v3893, %v4245
    %v4247 = vpop.f32.mrb[0].mxu0
    %v4248 = vadd.f32 %v3895, %v4247
    %4249 = vmatprep.mubr.bf16.mxu0 %v552
    %4250 = vmatmul.mubr.bf16.gmra.mrb[0].mxu0 %v551
    %v4251 = vpop.f32.mrb[0].mxu0
    %v4252 = vadd.f32 %v3899, %v4251
    %v4253 = vpop.f32.mrb[0].mxu0
    %v4254 = vadd.f32 %v3901, %v4253
    %v4255 = vpop.f32.mrb[0].mxu0
    %v4256 = vadd.f32 %v3903, %v4255
    %v4257 = vpop.f32.mrb[0].mxu0
    %v4258 = vadd.f32 %v3905, %v4257
    %4259 = vmatprep.mubr.bf16.mxu0 %v559
    %4260 = vmatmul.mubr.bf16.gmra.mrb[0].mxu0 %v558
    %v4261 = vpop.f32.mrb[0].mxu0
    %v4262 = vadd.f32 %v3909, %v4261
    %v4263 = vpop.f32.mrb[0].mxu0
    %v4264 = vadd.f32 %v3911, %v4263
    %v4265 = vpop.f32.mrb[0].mxu0
    %v4266 = vadd.f32 %v3913, %v4265
    %v4267 = vpop.f32.mrb[0].mxu0
    %v4268 = vadd.f32 %v3915, %v4267
    %4269 = vmatprep.mubr.bf16.mxu0 %v566
    %4270 = vmatmul.mubr.bf16.gmra.mrb[0].mxu0 %v565
    %v4271 = vpop.f32.mrb[0].mxu0
    %v4272 = vadd.f32 %v3919, %v4271
    %v4273 = vpop.f32.mrb[0].mxu0
    %v4274 = vadd.f32 %v3921, %v4273
    %v4275 = vpop.f32.mrb[0].mxu0
    %v4276 = vadd.f32 %v3923, %v4275
    %v4277 = vpop.f32.mrb[0].mxu0
    %v4278 = vadd.f32 %v3925, %v4277
    %4279 = vmatprep.mubr.bf16.mxu0 %v573
    %4280 = vmatmul.mubr.bf16.gmra.mrb[0].mxu0 %v572
    %v4281 = vpop.f32.mrb[0].mxu0
    %v4282 = vadd.f32 %v3929, %v4281
    %v4283 = vpop.f32.mrb[0].mxu0
    %v4284 = vadd.f32 %v3931, %v4283
    %v4285 = vpop.f32.mrb[0].mxu0
    %v4286 = vadd.f32 %v3933, %v4285
    %v4287 = vpop.f32.mrb[0].mxu0
    %v4288 = vadd.f32 %v3935, %v4287
    %4289 = vmatprep.mubr.bf16.mxu0 %v580
    %4290 = vmatmul.mubr.bf16.gmra.mrb[0].mxu0 %v579
    %v4291 = vpop.f32.mrb[0].mxu0
    %v4292 = vadd.f32 %v3939, %v4291
    %v4293 = vpop.f32.mrb[0].mxu0
    %v4294 = vadd.f32 %v3941, %v4293
    %v4295 = vpop.f32.mrb[0].mxu0
    %v4296 = vadd.f32 %v3943, %v4295
    %v4297 = vpop.f32.mrb[0].mxu0
    %v4298 = vadd.f32 %v3945, %v4297
    %4299 = vmatprep.mubr.bf16.mxu0 %v587
    %4300 = vmatmul.mubr.bf16.gmra.mrb[0].mxu0 %v586
    %v4301 = vpop.f32.mrb[0].mxu0
    %v4302 = vadd.f32 %v3949, %v4301
    %v4303 = vpop.f32.mrb[0].mxu0
    %v4304 = vadd.f32 %v3951, %v4303
    %v4305 = vpop.f32.mrb[0].mxu0
    %v4306 = vadd.f32 %v3953, %v4305
    %v4307 = vpop.f32.mrb[0].mxu0
    %v4308 = vadd.f32 %v3955, %v4307
    %4309 = vmatprep.mubr.bf16.mxu0 %v594
    %4310 = vmatmul.mubr.bf16.gmra.mrb[0].mxu0 %v593
    %v4311 = vpop.f32.mrb[0].mxu0
    %v4312 = vadd.f32 %v3959, %v4311
    %v4313 = vpop.f32.mrb[0].mxu0
    %v4314 = vadd.f32 %v3961, %v4313
    %v4315 = vpop.f32.mrb[0].mxu0
    %v4316 = vadd.f32 %v3963, %v4315
    %v4317 = vpop.f32.mrb[0].mxu0
    %v4318 = vadd.f32 %v3965, %v4317
    %4319 = vmatprep.mubr.bf16.mxu0 %v601
    %4320 = vmatmul.mubr.bf16.gmra.mrb[0].mxu0 %v600
    %v4321 = vpop.f32.mrb[0].mxu0
    %v4322 = vadd.f32 %v3969, %v4321
    %v4323 = vpop.f32.mrb[0].mxu0
    %v4324 = vadd.f32 %v3971, %v4323
    %v4325 = vpop.f32.mrb[0].mxu0
    %v4326 = vadd.f32 %v3973, %v4325
    %v4327 = vpop.f32.mrb[0].mxu0
    %v4328 = vadd.f32 %v3975, %v4327
    %4329 = vmatprep.mubr.bf16.mxu0 %v608
    %4330 = vmatmul.mubr.bf16.gmra.mrb[0].mxu0 %v607
    %v4331 = vpop.f32.mrb[0].mxu0
    %v4332 = vadd.f32 %v3979, %v4331
    %v4333 = vpop.f32.mrb[0].mxu0
    %v4334 = vadd.f32 %v3981, %v4333
    %v4335 = vpop.f32.mrb[0].mxu0
    %v4336 = vadd.f32 %v3983, %v4335
    %v4337 = vpop.f32.mrb[0].mxu0
    %v4338 = vadd.f32 %v3985, %v4337
    %4339 = vmatprep.mubr.bf16.mxu0 %v615
    %4340 = vmatmul.mubr.bf16.gmra.mrb[0].mxu0 %v614
    %v4341 = vpop.f32.mrb[0].mxu0
    %v4342 = vadd.f32 %v3989, %v4341
    %v4343 = vpop.f32.mrb[0].mxu0
    %v4344 = vadd.f32 %v3991, %v4343
    %v4345 = vpop.f32.mrb[0].mxu0
    %v4346 = vadd.f32 %v3993, %v4345
    %v4347 = vpop.f32.mrb[0].mxu0
    %v4348 = vadd.f32 %v3995, %v4347
    %4349 = vmatprep.mubr.bf16.mxu0 %v622
    %4350 = vmatmul.mubr.bf16.gmra.mrb[0].mxu0 %v621
    %v4351 = vpop.f32.mrb[0].mxu0
    %v4352 = vadd.f32 %v3999, %v4351
    %v4353 = vpop.f32.mrb[0].mxu0
    %v4354 = vadd.f32 %v4001, %v4353
    %v4355 = vpop.f32.mrb[0].mxu0
    %v4356 = vadd.f32 %v4003, %v4355
    %v4357 = vpop.f32.mrb[0].mxu0
    %v4358 = vadd.f32 %v4005, %v4357
    %4359 = vmatprep.mubr.bf16.mxu0 %v629
    %4360 = vmatmul.mubr.bf16.gmra.mrb[0].mxu0 %v628
    %v4361 = vpop.f32.mrb[0].mxu0
    %v4362 = vadd.f32 %v4009, %v4361
    %v4363 = vpop.f32.mrb[0].mxu0
    %v4364 = vadd.f32 %v4011, %v4363
    %v4365 = vpop.f32.mrb[0].mxu0
    %v4366 = vadd.f32 %v4013, %v4365
    %v4367 = vpop.f32.mrb[0].mxu0
    %v4368 = vadd.f32 %v4015, %v4367
    %4369 = vmatprep.mubr.bf16.mxu0 %v636
    %4370 = vmatmul.mubr.bf16.gmra.mrb[0].mxu0 %v635
    %v4371 = vpop.f32.mrb[0].mxu0
    %v4372 = vadd.f32 %v4019, %v4371
    %v4373 = vpop.f32.mrb[0].mxu0
    %v4374 = vadd.f32 %v4021, %v4373
    %v4375 = vpop.f32.mrb[0].mxu0
    %v4376 = vadd.f32 %v4023, %v4375
    %v4377 = vpop.f32.mrb[0].mxu0
    %v4378 = vadd.f32 %v4025, %v4377
    %4379 = vmatprep.mubr.bf16.mxu0 %v643
    %4380 = vmatmul.mubr.bf16.gmra.mrb[0].mxu0 %v642
    %v4381 = vpop.f32.mrb[0].mxu0
    %v4382 = vadd.f32 %v4029, %v4381
    %v4383 = vpop.f32.mrb[0].mxu0
    %v4384 = vadd.f32 %v4031, %v4383
    %v4385 = vpop.f32.mrb[0].mxu0
    %v4386 = vadd.f32 %v4033, %v4385
    %v4387 = vpop.f32.mrb[0].mxu0
    %v4388 = vadd.f32 %v4035, %v4387
    %4389 = vmatprep.mubr.bf16.mxu0 %v650
    %4390 = vmatmul.mubr.bf16.gmra.mrb[0].mxu0 %v649
    %v4391 = vpop.f32.mrb[0].mxu0
    %v4392 = vadd.f32 %v4039, %v4391
    %v4393 = vpop.f32.mrb[0].mxu0
    %v4394 = vadd.f32 %v4041, %v4393
    %v4395 = vpop.f32.mrb[0].mxu0
    %v4396 = vadd.f32 %v4043, %v4395
    %v4397 = vpop.f32.mrb[0].mxu0
    %v4398 = vadd.f32 %v4045, %v4397
    %4399 = vmatprep.mubr.bf16.mxu0 %v657
    %4400 = vmatmul.mubr.bf16.gmra.mrb[0].mxu0 %v656
    %v4401 = vpop.f32.mrb[0].mxu0
    %v4402 = vadd.f32 %v4049, %v4401
    %v4403 = vpop.f32.mrb[0].mxu0
    %v4404 = vadd.f32 %v4051, %v4403
    %v4405 = vpop.f32.mrb[0].mxu0
    %v4406 = vadd.f32 %v4053, %v4405
    %v4407 = vpop.f32.mrb[0].mxu0
    %v4408 = vadd.f32 %v4055, %v4407
    %4409 = vmatprep.mubr.bf16.mxu0 %v664
    %4410 = vmatmul.mubr.bf16.gmra.mrb[0].mxu0 %v663
    %v4411 = vpop.f32.mrb[0].mxu0
    %v4412 = vadd.f32 %v4059, %v4411
    %v4413 = vpop.f32.mrb[0].mxu0
    %v4414 = vadd.f32 %v4061, %v4413
    %v4415 = vpop.f32.mrb[0].mxu0
    %v4416 = vadd.f32 %v4063, %v4415
    %v4417 = vpop.f32.mrb[0].mxu0
    %v4418 = vadd.f32 %v4065, %v4417
    %4419 = vmatprep.mubr.bf16.mxu0 %v671
    %4420 = vmatmul.mubr.bf16.gmra.mrb[0].mxu0 %v670
    %v4421 = vpop.f32.mrb[0].mxu0
    %v4422 = vadd.f32 %v4069, %v4421
    %v4423 = vpop.f32.mrb[0].mxu0
    %v4424 = vadd.f32 %v4071, %v4423
    %v4425 = vpop.f32.mrb[0].mxu0
    %v4426 = vadd.f32 %v4073, %v4425
    %v4427 = vpop.f32.mrb[0].mxu0
    %v4428 = vadd.f32 %v4075, %v4427
    %4429 = vmatprep.mubr.bf16.mxu0 %v678
    %4430 = vmatmul.mubr.bf16.gmra.mrb[0].mxu0 %v677
    %v4431 = vpop.f32.mrb[0].mxu0
    %v4432 = vadd.f32 %v4079, %v4431
    %v4433 = vpop.f32.mrb[0].mxu0
    %v4434 = vadd.f32 %v4081, %v4433
    %v4435 = vpop.f32.mrb[0].mxu0
    %v4436 = vadd.f32 %v4083, %v4435
    %v4437 = vpop.f32.mrb[0].mxu0
    %v4438 = vadd.f32 %v4085, %v4437
    %4439 = vmatprep.mubr.bf16.mxu0 %v685
    %4440 = vmatmul.mubr.bf16.gmra.mrb[0].mxu0 %v684
    %v4441 = vpop.f32.mrb[0].mxu0
    %v4442 = vadd.f32 %v4089, %v4441
    %v4443 = vpop.f32.mrb[0].mxu0
    %v4444 = vadd.f32 %v4091, %v4443
    %v4445 = vpop.f32.mrb[0].mxu0
    %v4446 = vadd.f32 %v4093, %v4445
    %v4447 = vpop.f32.mrb[0].mxu0
    %v4448 = vadd.f32 %v4095, %v4447
    %4449 = vmatprep.mubr.bf16.mxu0 %v692
    %4450 = vmatmul.mubr.bf16.gmra.mrb[0].mxu0 %v691
    %v4451 = vpop.f32.mrb[0].mxu0
    %v4452 = vadd.f32 %v4099, %v4451
    %v4453 = vpop.f32.mrb[0].mxu0
    %v4454 = vadd.f32 %v4101, %v4453
    %v4455 = vpop.f32.mrb[0].mxu0
    %v4456 = vadd.f32 %v4103, %v4455
    %v4457 = vpop.f32.mrb[0].mxu0
    %v4458 = vadd.f32 %v4105, %v4457
    %4459 = vdwg.mxu0
    %4460 = vmatprep.subr.bf16.mxu0 %v1695
    %4461 = vmatpush1.bf16.msra.mxu0 %v1694
    %4462 = vmatprep.subr.bf16.mxu0 0
    %4463 = vmatpush1.bf16.msra.mxu0 0
    %4464 = vmatprep.subr.bf16.mxu0 0
    %4465 = vmatpush1.bf16.msra.mxu0 0
    %4466 = vmatprep.subr.bf16.mxu0 0
    %4467 = vmatpush1.bf16.msra.mxu0 0
    %4468 = vmatprep.subr.bf16.mxu0 0
    %4469 = vmatpush1.bf16.msra.mxu0 0
    %4470 = vmatprep.subr.bf16.mxu0 0
    %4471 = vmatpush1.bf16.msra.mxu0 0
    %4472 = vmatprep.subr.bf16.mxu0 0
    %4473 = vmatpush1.bf16.msra.mxu0 0
    %4474 = vmatprep.subr.bf16.mxu0 0
    %4475 = vmatpush1.bf16.msra.mxu0 0
    %4476 = vmatprep.subr.bf16.mxu0 0
    %4477 = vmatpush1.bf16.msra.mxu0 0
    %4478 = vmatprep.subr.bf16.mxu0 0
    %4479 = vmatpush1.bf16.msra.mxu0 0
    %4480 = vmatprep.subr.bf16.mxu0 0
    %4481 = vmatpush1.bf16.msra.mxu0 0
    %4482 = vmatprep.subr.bf16.mxu0 0
    %4483 = vmatpush1.bf16.msra.mxu0 0
    %4484 = vmatprep.subr.bf16.mxu0 0
    %4485 = vmatpush1.bf16.msra.mxu0 0
    %4486 = vmatprep.subr.bf16.mxu0 0
    %4487 = vmatpush1.bf16.msra.mxu0 0
    %4488 = vmatprep.subr.bf16.mxu0 0
    %4489 = vmatpush1.bf16.msra.mxu0 0
    %4490 = vmatprep.subr.bf16.mxu0 0
    %4491 = vmatpush1.bf16.msra.mxu0 0
    %4492 = vmatprep.mubr.bf16.mxu0 0
    %4493 = vmatmul.mubr.bf16.gmra.mrb[0].mxu0 %v1894
    %v4494 = vpop.f32.mrb[0].mxu0
    %v4495 = vadd.f32 %v4142, %v4494
    %v4496 = vpop.f32.mrb[0].mxu0
    %v4497 = vadd.f32 %v4144, %v4496
    %v4498 = vpop.f32.mrb[0].mxu0
    %v4499 = vadd.f32 %v4146, %v4498
    %v4500 = vpop.f32.mrb[0].mxu0
    %v4501 = vadd.f32 %v4148, %v4500
    %4502 = vmatprep.mubr.bf16.mxu0 0
    %4503 = vmatmul.mubr.bf16.gmra.mrb[0].mxu0 %v1897
    %v4504 = vpop.f32.mrb[0].mxu0
    %v4505 = vadd.f32 %v4152, %v4504
    %v4506 = vpop.f32.mrb[0].mxu0
    %v4507 = vadd.f32 %v4154, %v4506
    %v4508 = vpop.f32.mrb[0].mxu0
    %v4509 = vadd.f32 %v4156, %v4508
    %v4510 = vpop.f32.mrb[0].mxu0
    %v4511 = vadd.f32 %v4158, %v4510
    %4512 = vmatprep.mubr.bf16.mxu0 0
    %4513 = vmatmul.mubr.bf16.gmra.mrb[0].mxu0 %v1900
    %v4514 = vpop.f32.mrb[0].mxu0
    %v4515 = vadd.f32 %v4162, %v4514
    %v4516 = vpop.f32.mrb[0].mxu0
    %v4517 = vadd.f32 %v4164, %v4516
    %v4518 = vpop.f32.mrb[0].mxu0
    %v4519 = vadd.f32 %v4166, %v4518
    %v4520 = vpop.f32.mrb[0].mxu0
    %v4521 = vadd.f32 %v4168, %v4520
    %4522 = vmatprep.mubr.bf16.mxu0 0
    %4523 = vmatmul.mubr.bf16.gmra.mrb[0].mxu0 %v1903
    %v4524 = vpop.f32.mrb[0].mxu0
    %v4525 = vadd.f32 %v4172, %v4524
    %v4526 = vpop.f32.mrb[0].mxu0
    %v4527 = vadd.f32 %v4174, %v4526
    %v4528 = vpop.f32.mrb[0].mxu0
    %v4529 = vadd.f32 %v4176, %v4528
    %v4530 = vpop.f32.mrb[0].mxu0
    %v4531 = vadd.f32 %v4178, %v4530
    %4532 = vmatprep.mubr.bf16.mxu0 0
    %4533 = vmatmul.mubr.bf16.gmra.mrb[0].mxu0 %v1906
    %v4534 = vpop.f32.mrb[0].mxu0
    %v4535 = vadd.f32 %v4182, %v4534
    %v4536 = vpop.f32.mrb[0].mxu0
    %v4537 = vadd.f32 %v4184, %v4536
    %v4538 = vpop.f32.mrb[0].mxu0
    %v4539 = vadd.f32 %v4186, %v4538
    %v4540 = vpop.f32.mrb[0].mxu0
    %v4541 = vadd.f32 %v4188, %v4540
    %4542 = vmatprep.mubr.bf16.mxu0 0
    %4543 = vmatmul.mubr.bf16.gmra.mrb[0].mxu0 %v1909
    %v4544 = vpop.f32.mrb[0].mxu0
    %v4545 = vadd.f32 %v4192, %v4544
    %v4546 = vpop.f32.mrb[0].mxu0
    %v4547 = vadd.f32 %v4194, %v4546
    %v4548 = vpop.f32.mrb[0].mxu0
    %v4549 = vadd.f32 %v4196, %v4548
    %v4550 = vpop.f32.mrb[0].mxu0
    %v4551 = vadd.f32 %v4198, %v4550
    %4552 = vmatprep.mubr.bf16.mxu0 0
    %4553 = vmatmul.mubr.bf16.gmra.mrb[0].mxu0 %v1912
    %v4554 = vpop.f32.mrb[0].mxu0
    %v4555 = vadd.f32 %v4202, %v4554
    %v4556 = vpop.f32.mrb[0].mxu0
    %v4557 = vadd.f32 %v4204, %v4556
    %v4558 = vpop.f32.mrb[0].mxu0
    %v4559 = vadd.f32 %v4206, %v4558
    %v4560 = vpop.f32.mrb[0].mxu0
    %v4561 = vadd.f32 %v4208, %v4560
    %4562 = vmatprep.mubr.bf16.mxu0 0
    %4563 = vmatmul.mubr.bf16.gmra.mrb[0].mxu0 %v1915
    %v4564 = vpop.f32.mrb[0].mxu0
    %v4565 = vadd.f32 %v4212, %v4564
    %v4566 = vpop.f32.mrb[0].mxu0
    %v4567 = vadd.f32 %v4214, %v4566
    %v4568 = vpop.f32.mrb[0].mxu0
    %v4569 = vadd.f32 %v4216, %v4568
    %v4570 = vpop.f32.mrb[0].mxu0
    %v4571 = vadd.f32 %v4218, %v4570
    %4572 = vmatprep.mubr.bf16.mxu0 0
    %4573 = vmatmul.mubr.bf16.gmra.mrb[0].mxu0 %v1918
    %v4574 = vpop.f32.mrb[0].mxu0
    %v4575 = vadd.f32 %v4222, %v4574
    %v4576 = vpop.f32.mrb[0].mxu0
    %v4577 = vadd.f32 %v4224, %v4576
    %v4578 = vpop.f32.mrb[0].mxu0
    %v4579 = vadd.f32 %v4226, %v4578
    %v4580 = vpop.f32.mrb[0].mxu0
    %v4581 = vadd.f32 %v4228, %v4580
    %4582 = vmatprep.mubr.bf16.mxu0 0
    %4583 = vmatmul.mubr.bf16.gmra.mrb[0].mxu0 %v1921
    %v4584 = vpop.f32.mrb[0].mxu0
    %v4585 = vadd.f32 %v4232, %v4584
    %v4586 = vpop.f32.mrb[0].mxu0
    %v4587 = vadd.f32 %v4234, %v4586
    %v4588 = vpop.f32.mrb[0].mxu0
    %v4589 = vadd.f32 %v4236, %v4588
    %v4590 = vpop.f32.mrb[0].mxu0
    %v4591 = vadd.f32 %v4238, %v4590
    %4592 = vmatprep.mubr.bf16.mxu0 0
    %4593 = vmatmul.mubr.bf16.gmra.mrb[0].mxu0 %v1924
    %v4594 = vpop.f32.mrb[0].mxu0
    %v4595 = vadd.f32 %v4242, %v4594
    %v4596 = vpop.f32.mrb[0].mxu0
    %v4597 = vadd.f32 %v4244, %v4596
    %v4598 = vpop.f32.mrb[0].mxu0
    %v4599 = vadd.f32 %v4246, %v4598
    %v4600 = vpop.f32.mrb[0].mxu0
    %v4601 = vadd.f32 %v4248, %v4600
    %4602 = vmatprep.mubr.bf16.mxu0 0
    %4603 = vmatmul.mubr.bf16.gmra.mrb[0].mxu0 %v1927
    %v4604 = vpop.f32.mrb[0].mxu0
    %v4605 = vadd.f32 %v4252, %v4604
    %v4606 = vpop.f32.mrb[0].mxu0
    %v4607 = vadd.f32 %v4254, %v4606
    %v4608 = vpop.f32.mrb[0].mxu0
    %v4609 = vadd.f32 %v4256, %v4608
    %v4610 = vpop.f32.mrb[0].mxu0
    %v4611 = vadd.f32 %v4258, %v4610
    %4612 = vmatprep.mubr.bf16.mxu0 0
    %4613 = vmatmul.mubr.bf16.gmra.mrb[0].mxu0 %v1930
    %v4614 = vpop.f32.mrb[0].mxu0
    %v4615 = vadd.f32 %v4262, %v4614
    %v4616 = vpop.f32.mrb[0].mxu0
    %v4617 = vadd.f32 %v4264, %v4616
    %v4618 = vpop.f32.mrb[0].mxu0
    %v4619 = vadd.f32 %v4266, %v4618
    %v4620 = vpop.f32.mrb[0].mxu0
    %v4621 = vadd.f32 %v4268, %v4620
    %4622 = vmatprep.mubr.bf16.mxu0 0
    %4623 = vmatmul.mubr.bf16.gmra.mrb[0].mxu0 %v1933
    %v4624 = vpop.f32.mrb[0].mxu0
    %v4625 = vadd.f32 %v4272, %v4624
    %v4626 = vpop.f32.mrb[0].mxu0
    %v4627 = vadd.f32 %v4274, %v4626
    %v4628 = vpop.f32.mrb[0].mxu0
    %v4629 = vadd.f32 %v4276, %v4628
    %v4630 = vpop.f32.mrb[0].mxu0
    %v4631 = vadd.f32 %v4278, %v4630
    %4632 = vmatprep.mubr.bf16.mxu0 0
    %4633 = vmatmul.mubr.bf16.gmra.mrb[0].mxu0 %v1936
    %v4634 = vpop.f32.mrb[0].mxu0
    %v4635 = vadd.f32 %v4282, %v4634
    %v4636 = vpop.f32.mrb[0].mxu0
    %v4637 = vadd.f32 %v4284, %v4636
    %v4638 = vpop.f32.mrb[0].mxu0
    %v4639 = vadd.f32 %v4286, %v4638
    %v4640 = vpop.f32.mrb[0].mxu0
    %v4641 = vadd.f32 %v4288, %v4640
    %4642 = vmatprep.mubr.bf16.mxu0 0
    %4643 = vmatmul.mubr.bf16.gmra.mrb[0].mxu0 %v1939
    %v4644 = vpop.f32.mrb[0].mxu0
    %v4645 = vadd.f32 %v4292, %v4644
    %v4646 = vpop.f32.mrb[0].mxu0
    %v4647 = vadd.f32 %v4294, %v4646
    %v4648 = vpop.f32.mrb[0].mxu0
    %v4649 = vadd.f32 %v4296, %v4648
    %v4650 = vpop.f32.mrb[0].mxu0
    %v4651 = vadd.f32 %v4298, %v4650
    %4652 = vmatprep.mubr.bf16.mxu0 0
    %4653 = vmatmul.mubr.bf16.gmra.mrb[0].mxu0 %v1942
    %v4654 = vpop.f32.mrb[0].mxu0
    %v4655 = vadd.f32 %v4302, %v4654
    %v4656 = vpop.f32.mrb[0].mxu0
    %v4657 = vadd.f32 %v4304, %v4656
    %v4658 = vpop.f32.mrb[0].mxu0
    %v4659 = vadd.f32 %v4306, %v4658
    %v4660 = vpop.f32.mrb[0].mxu0
    %v4661 = vadd.f32 %v4308, %v4660
    %4662 = vmatprep.mubr.bf16.mxu0 0
    %4663 = vmatmul.mubr.bf16.gmra.mrb[0].mxu0 %v1945
    %v4664 = vpop.f32.mrb[0].mxu0
    %v4665 = vadd.f32 %v4312, %v4664
    %v4666 = vpop.f32.mrb[0].mxu0
    %v4667 = vadd.f32 %v4314, %v4666
    %v4668 = vpop.f32.mrb[0].mxu0
    %v4669 = vadd.f32 %v4316, %v4668
    %v4670 = vpop.f32.mrb[0].mxu0
    %v4671 = vadd.f32 %v4318, %v4670
    %4672 = vmatprep.mubr.bf16.mxu0 0
    %4673 = vmatmul.mubr.bf16.gmra.mrb[0].mxu0 %v1948
    %v4674 = vpop.f32.mrb[0].mxu0
    %v4675 = vadd.f32 %v4322, %v4674
    %v4676 = vpop.f32.mrb[0].mxu0
    %v4677 = vadd.f32 %v4324, %v4676
    %v4678 = vpop.f32.mrb[0].mxu0
    %v4679 = vadd.f32 %v4326, %v4678
    %v4680 = vpop.f32.mrb[0].mxu0
    %v4681 = vadd.f32 %v4328, %v4680
    %4682 = vmatprep.mubr.bf16.mxu0 0
    %4683 = vmatmul.mubr.bf16.gmra.mrb[0].mxu0 %v1951
    %v4684 = vpop.f32.mrb[0].mxu0
    %v4685 = vadd.f32 %v4332, %v4684
    %v4686 = vpop.f32.mrb[0].mxu0
    %v4687 = vadd.f32 %v4334, %v4686
    %v4688 = vpop.f32.mrb[0].mxu0
    %v4689 = vadd.f32 %v4336, %v4688
    %v4690 = vpop.f32.mrb[0].mxu0
    %v4691 = vadd.f32 %v4338, %v4690
    %4692 = vmatprep.mubr.bf16.mxu0 0
    %4693 = vmatmul.mubr.bf16.gmra.mrb[0].mxu0 %v1954
    %v4694 = vpop.f32.mrb[0].mxu0
    %v4695 = vadd.f32 %v4342, %v4694
    %v4696 = vpop.f32.mrb[0].mxu0
    %v4697 = vadd.f32 %v4344, %v4696
    %v4698 = vpop.f32.mrb[0].mxu0
    %v4699 = vadd.f32 %v4346, %v4698
    %v4700 = vpop.f32.mrb[0].mxu0
    %v4701 = vadd.f32 %v4348, %v4700
    %4702 = vmatprep.mubr.bf16.mxu0 0
    %4703 = vmatmul.mubr.bf16.gmra.mrb[0].mxu0 %v1957
    %v4704 = vpop.f32.mrb[0].mxu0
    %v4705 = vadd.f32 %v4352, %v4704
    %v4706 = vpop.f32.mrb[0].mxu0
    %v4707 = vadd.f32 %v4354, %v4706
    %v4708 = vpop.f32.mrb[0].mxu0
    %v4709 = vadd.f32 %v4356, %v4708
    %v4710 = vpop.f32.mrb[0].mxu0
    %v4711 = vadd.f32 %v4358, %v4710
    %4712 = vmatprep.mubr.bf16.mxu0 0
    %4713 = vmatmul.mubr.bf16.gmra.mrb[0].mxu0 %v1960
    %v4714 = vpop.f32.mrb[0].mxu0
    %v4715 = vadd.f32 %v4362, %v4714
    %v4716 = vpop.f32.mrb[0].mxu0
    %v4717 = vadd.f32 %v4364, %v4716
    %v4718 = vpop.f32.mrb[0].mxu0
    %v4719 = vadd.f32 %v4366, %v4718
    %v4720 = vpop.f32.mrb[0].mxu0
    %v4721 = vadd.f32 %v4368, %v4720
    %4722 = vmatprep.mubr.bf16.mxu0 0
    %4723 = vmatmul.mubr.bf16.gmra.mrb[0].mxu0 %v1963
    %v4724 = vpop.f32.mrb[0].mxu0
    %v4725 = vadd.f32 %v4372, %v4724
    %v4726 = vpop.f32.mrb[0].mxu0
    %v4727 = vadd.f32 %v4374, %v4726
    %v4728 = vpop.f32.mrb[0].mxu0
    %v4729 = vadd.f32 %v4376, %v4728
    %v4730 = vpop.f32.mrb[0].mxu0
    %v4731 = vadd.f32 %v4378, %v4730
    %4732 = vmatprep.mubr.bf16.mxu0 0
    %4733 = vmatmul.mubr.bf16.gmra.mrb[0].mxu0 %v1966
    %v4734 = vpop.f32.mrb[0].mxu0
    %v4735 = vadd.f32 %v4382, %v4734
    %v4736 = vpop.f32.mrb[0].mxu0
    %v4737 = vadd.f32 %v4384, %v4736
    %v4738 = vpop.f32.mrb[0].mxu0
    %v4739 = vadd.f32 %v4386, %v4738
    %v4740 = vpop.f32.mrb[0].mxu0
    %v4741 = vadd.f32 %v4388, %v4740
    %4742 = vmatprep.mubr.bf16.mxu0 0
    %4743 = vmatmul.mubr.bf16.gmra.mrb[0].mxu0 %v1969
    %v4744 = vpop.f32.mrb[0].mxu0
    %v4745 = vadd.f32 %v4392, %v4744
    %v4746 = vpop.f32.mrb[0].mxu0
    %v4747 = vadd.f32 %v4394, %v4746
    %v4748 = vpop.f32.mrb[0].mxu0
    %v4749 = vadd.f32 %v4396, %v4748
    %v4750 = vpop.f32.mrb[0].mxu0
    %v4751 = vadd.f32 %v4398, %v4750
    %4752 = vmatprep.mubr.bf16.mxu0 0
    %4753 = vmatmul.mubr.bf16.gmra.mrb[0].mxu0 %v1972
    %v4754 = vpop.f32.mrb[0].mxu0
    %v4755 = vadd.f32 %v4402, %v4754
    %v4756 = vpop.f32.mrb[0].mxu0
    %v4757 = vadd.f32 %v4404, %v4756
    %v4758 = vpop.f32.mrb[0].mxu0
    %v4759 = vadd.f32 %v4406, %v4758
    %v4760 = vpop.f32.mrb[0].mxu0
    %v4761 = vadd.f32 %v4408, %v4760
    %4762 = vmatprep.mubr.bf16.mxu0 0
    %4763 = vmatmul.mubr.bf16.gmra.mrb[0].mxu0 %v1975
    %v4764 = vpop.f32.mrb[0].mxu0
    %v4765 = vadd.f32 %v4412, %v4764
    %v4766 = vpop.f32.mrb[0].mxu0
    %v4767 = vadd.f32 %v4414, %v4766
    %v4768 = vpop.f32.mrb[0].mxu0
    %v4769 = vadd.f32 %v4416, %v4768
    %v4770 = vpop.f32.mrb[0].mxu0
    %v4771 = vadd.f32 %v4418, %v4770
    %4772 = vmatprep.mubr.bf16.mxu0 0
    %4773 = vmatmul.mubr.bf16.gmra.mrb[0].mxu0 %v1978
    %v4774 = vpop.f32.mrb[0].mxu0
    %v4775 = vadd.f32 %v4422, %v4774
    %v4776 = vpop.f32.mrb[0].mxu0
    %v4777 = vadd.f32 %v4424, %v4776
    %v4778 = vpop.f32.mrb[0].mxu0
    %v4779 = vadd.f32 %v4426, %v4778
    %v4780 = vpop.f32.mrb[0].mxu0
    %v4781 = vadd.f32 %v4428, %v4780
    %4782 = vmatprep.mubr.bf16.mxu0 0
    %4783 = vmatmul.mubr.bf16.gmra.mrb[0].mxu0 %v1981
    %v4784 = vpop.f32.mrb[0].mxu0
    %v4785 = vadd.f32 %v4432, %v4784
    %v4786 = vpop.f32.mrb[0].mxu0
    %v4787 = vadd.f32 %v4434, %v4786
    %v4788 = vpop.f32.mrb[0].mxu0
    %v4789 = vadd.f32 %v4436, %v4788
    %v4790 = vpop.f32.mrb[0].mxu0
    %v4791 = vadd.f32 %v4438, %v4790
    %4792 = vmatprep.mubr.bf16.mxu0 0
    %4793 = vmatmul.mubr.bf16.gmra.mrb[0].mxu0 %v1984
    %v4794 = vpop.f32.mrb[0].mxu0
    %v4795 = vadd.f32 %v4442, %v4794
    %v4796 = vpop.f32.mrb[0].mxu0
    %v4797 = vadd.f32 %v4444, %v4796
    %v4798 = vpop.f32.mrb[0].mxu0
    %v4799 = vadd.f32 %v4446, %v4798
    %v4800 = vpop.f32.mrb[0].mxu0
    %v4801 = vadd.f32 %v4448, %v4800
    %4802 = vmatprep.mubr.bf16.mxu0 0
    %4803 = vmatmul.mubr.bf16.gmra.mrb[0].mxu0 %v1987
    %v4804 = vpop.f32.mrb[0].mxu0
    %v4805 = vadd.f32 %v4452, %v4804
    %v4806 = vpop.f32.mrb[0].mxu0
    %v4807 = vadd.f32 %v4454, %v4806
    %v4808 = vpop.f32.mrb[0].mxu0
    %v4809 = vadd.f32 %v4456, %v4808
    %v4810 = vpop.f32.mrb[0].mxu0
    %v4811 = vadd.f32 %v4458, %v4810
    %4812 = vdwg.mxu0
    %v4813 = vmax.f32 %v3083, 0.0
    %v4814 = vmax.f32 %v3085, 0.0
    %v4815 = vmax.f32 %v4495, 0.0
    %v4816 = vmax.f32 %v4497, 0.0
    %v4817 = vmax.f32 %v3087, 0.0
    %v4818 = vmax.f32 %v3089, 0.0
    %v4819 = vmax.f32 %v4499, 0.0
    %v4820 = vmax.f32 %v4501, 0.0
    %v4821 = vmax.f32 %v3093, 0.0
    %v4822 = vmax.f32 %v3095, 0.0
    %v4823 = vmax.f32 %v4505, 0.0
    %v4824 = vmax.f32 %v4507, 0.0
    %v4825 = vmax.f32 %v3097, 0.0
    %v4826 = vmax.f32 %v3099, 0.0
    %v4827 = vmax.f32 %v4509, 0.0
    %v4828 = vmax.f32 %v4511, 0.0
    %v4829 = vmax.f32 %v3103, 0.0
    %v4830 = vmax.f32 %v3105, 0.0
    %v4831 = vmax.f32 %v4515, 0.0
    %v4832 = vmax.f32 %v4517, 0.0
    %v4833 = vmax.f32 %v3107, 0.0
    %v4834 = vmax.f32 %v3109, 0.0
    %v4835 = vmax.f32 %v4519, 0.0
    %v4836 = vmax.f32 %v4521, 0.0
    %v4837 = vmax.f32 %v3113, 0.0
    %v4838 = vmax.f32 %v3115, 0.0
    %v4839 = vmax.f32 %v4525, 0.0
    %v4840 = vmax.f32 %v4527, 0.0
    %v4841 = vmax.f32 %v3117, 0.0
    %v4842 = vmax.f32 %v3119, 0.0
    %v4843 = vmax.f32 %v4529, 0.0
    %v4844 = vmax.f32 %v4531, 0.0
    %v4845 = vmax.f32 %v3123, 0.0
    %v4846 = vmax.f32 %v3125, 0.0
    %v4847 = vmax.f32 %v4535, 0.0
    %v4848 = vmax.f32 %v4537, 0.0
    %v4849 = vmax.f32 %v3127, 0.0
    %v4850 = vmax.f32 %v3129, 0.0
    %v4851 = vmax.f32 %v4539, 0.0
    %v4852 = vmax.f32 %v4541, 0.0
    %v4853 = vmax.f32 %v3133, 0.0
    %v4854 = vmax.f32 %v3135, 0.0
    %v4855 = vmax.f32 %v4545, 0.0
    %v4856 = vmax.f32 %v4547, 0.0
    %v4857 = vmax.f32 %v3137, 0.0
    %v4858 = vmax.f32 %v3139, 0.0
    %v4859 = vmax.f32 %v4549, 0.0
    %v4860 = vmax.f32 %v4551, 0.0
    %v4861 = vmax.f32 %v3143, 0.0
    %v4862 = vmax.f32 %v3145, 0.0
    %v4863 = vmax.f32 %v4555, 0.0
    %v4864 = vmax.f32 %v4557, 0.0
    %v4865 = vmax.f32 %v3147, 0.0
    %v4866 = vmax.f32 %v3149, 0.0
    %v4867 = vmax.f32 %v4559, 0.0
    %v4868 = vmax.f32 %v4561, 0.0
    %v4869 = vmax.f32 %v3153, 0.0
    %v4870 = vmax.f32 %v3155, 0.0
    %v4871 = vmax.f32 %v4565, 0.0
    %v4872 = vmax.f32 %v4567, 0.0
    %v4873 = vmax.f32 %v3157, 0.0
    %v4874 = vmax.f32 %v3159, 0.0
    %v4875 = vmax.f32 %v4569, 0.0
    %v4876 = vmax.f32 %v4571, 0.0
    %v4877 = vmax.f32 %v3163, 0.0
    %v4878 = vmax.f32 %v3165, 0.0
    %v4879 = vmax.f32 %v4575, 0.0
    %v4880 = vmax.f32 %v4577, 0.0
    %v4881 = vmax.f32 %v3167, 0.0
    %v4882 = vmax.f32 %v3169, 0.0
    %v4883 = vmax.f32 %v4579, 0.0
    %v4884 = vmax.f32 %v4581, 0.0
    %v4885 = vmax.f32 %v3173, 0.0
    %v4886 = vmax.f32 %v3175, 0.0
    %v4887 = vmax.f32 %v4585, 0.0
    %v4888 = vmax.f32 %v4587, 0.0
    %v4889 = vmax.f32 %v3177, 0.0
    %v4890 = vmax.f32 %v3179, 0.0
    %v4891 = vmax.f32 %v4589, 0.0
    %v4892 = vmax.f32 %v4591, 0.0
    %v4893 = vmax.f32 %v3183, 0.0
    %v4894 = vmax.f32 %v3185, 0.0
    %v4895 = vmax.f32 %v4595, 0.0
    %v4896 = vmax.f32 %v4597, 0.0
    %v4897 = vmax.f32 %v3187, 0.0
    %v4898 = vmax.f32 %v3189, 0.0
    %v4899 = vmax.f32 %v4599, 0.0
    %v4900 = vmax.f32 %v4601, 0.0
    %v4901 = vmax.f32 %v3193, 0.0
    %v4902 = vmax.f32 %v3195, 0.0
    %v4903 = vmax.f32 %v4605, 0.0
    %v4904 = vmax.f32 %v4607, 0.0
    %v4905 = vmax.f32 %v3197, 0.0
    %v4906 = vmax.f32 %v3199, 0.0
    %v4907 = vmax.f32 %v4609, 0.0
    %v4908 = vmax.f32 %v4611, 0.0
    %v4909 = vmax.f32 %v3203, 0.0
    %v4910 = vmax.f32 %v3205, 0.0
    %v4911 = vmax.f32 %v4615, 0.0
    %v4912 = vmax.f32 %v4617, 0.0
    %v4913 = vmax.f32 %v3207, 0.0
    %v4914 = vmax.f32 %v3209, 0.0
    %v4915 = vmax.f32 %v4619, 0.0
    %v4916 = vmax.f32 %v4621, 0.0
    %v4917 = vmax.f32 %v3213, 0.0
    %v4918 = vmax.f32 %v3215, 0.0
    %v4919 = vmax.f32 %v4625, 0.0
    %v4920 = vmax.f32 %v4627, 0.0
    %v4921 = vmax.f32 %v3217, 0.0
    %v4922 = vmax.f32 %v3219, 0.0
    %v4923 = vmax.f32 %v4629, 0.0
    %v4924 = vmax.f32 %v4631, 0.0
    %v4925 = vmax.f32 %v3223, 0.0
    %v4926 = vmax.f32 %v3225, 0.0
    %v4927 = vmax.f32 %v4635, 0.0
    %v4928 = vmax.f32 %v4637, 0.0
    %v4929 = vmax.f32 %v3227, 0.0
    %v4930 = vmax.f32 %v3229, 0.0
    %v4931 = vmax.f32 %v4639, 0.0
    %v4932 = vmax.f32 %v4641, 0.0
    %v4933 = vmax.f32 %v3233, 0.0
    %v4934 = vmax.f32 %v3235, 0.0
    %v4935 = vmax.f32 %v4645, 0.0
    %v4936 = vmax.f32 %v4647, 0.0
    %v4937 = vmax.f32 %v3237, 0.0
    %v4938 = vmax.f32 %v3239, 0.0
    %v4939 = vmax.f32 %v4649, 0.0
    %v4940 = vmax.f32 %v4651, 0.0
    %v4941 = vmax.f32 %v3243, 0.0
    %v4942 = vmax.f32 %v3245, 0.0
    %v4943 = vmax.f32 %v4655, 0.0
    %v4944 = vmax.f32 %v4657, 0.0
    %v4945 = vmax.f32 %v3247, 0.0
    %v4946 = vmax.f32 %v3249, 0.0
    %v4947 = vmax.f32 %v4659, 0.0
    %v4948 = vmax.f32 %v4661, 0.0
    %v4949 = vmax.f32 %v3253, 0.0
    %v4950 = vmax.f32 %v3255, 0.0
    %v4951 = vmax.f32 %v4665, 0.0
    %v4952 = vmax.f32 %v4667, 0.0
    %v4953 = vmax.f32 %v3257, 0.0
    %v4954 = vmax.f32 %v3259, 0.0
    %v4955 = vmax.f32 %v4669, 0.0
    %v4956 = vmax.f32 %v4671, 0.0
    %v4957 = vmax.f32 %v3263, 0.0
    %v4958 = vmax.f32 %v3265, 0.0
    %v4959 = vmax.f32 %v4675, 0.0
    %v4960 = vmax.f32 %v4677, 0.0
    %v4961 = vmax.f32 %v3267, 0.0
    %v4962 = vmax.f32 %v3269, 0.0
    %v4963 = vmax.f32 %v4679, 0.0
    %v4964 = vmax.f32 %v4681, 0.0
    %v4965 = vmax.f32 %v3273, 0.0
    %v4966 = vmax.f32 %v3275, 0.0
    %v4967 = vmax.f32 %v4685, 0.0
    %v4968 = vmax.f32 %v4687, 0.0
    %v4969 = vmax.f32 %v3277, 0.0
    %v4970 = vmax.f32 %v3279, 0.0
    %v4971 = vmax.f32 %v4689, 0.0
    %v4972 = vmax.f32 %v4691, 0.0
    %v4973 = vmax.f32 %v3283, 0.0
    %v4974 = vmax.f32 %v3285, 0.0
    %v4975 = vmax.f32 %v4695, 0.0
    %v4976 = vmax.f32 %v4697, 0.0
    %v4977 = vmax.f32 %v3287, 0.0
    %v4978 = vmax.f32 %v3289, 0.0
    %v4979 = vmax.f32 %v4699, 0.0
    %v4980 = vmax.f32 %v4701, 0.0
    %v4981 = vmax.f32 %v3293, 0.0
    %v4982 = vmax.f32 %v3295, 0.0
    %v4983 = vmax.f32 %v4705, 0.0
    %v4984 = vmax.f32 %v4707, 0.0
    %v4985 = vmax.f32 %v3297, 0.0
    %v4986 = vmax.f32 %v3299, 0.0
    %v4987 = vmax.f32 %v4709, 0.0
    %v4988 = vmax.f32 %v4711, 0.0
    %v4989 = vmax.f32 %v3303, 0.0
    %v4990 = vmax.f32 %v3305, 0.0
    %v4991 = vmax.f32 %v4715, 0.0
    %v4992 = vmax.f32 %v4717, 0.0
    %v4993 = vmax.f32 %v3307, 0.0
    %v4994 = vmax.f32 %v3309, 0.0
    %v4995 = vmax.f32 %v4719, 0.0
    %v4996 = vmax.f32 %v4721, 0.0
    %v4997 = vmax.f32 %v3313, 0.0
    %v4998 = vmax.f32 %v3315, 0.0
    %v4999 = vmax.f32 %v4725, 0.0
    %v5000 = vmax.f32 %v4727, 0.0
    %v5001 = vmax.f32 %v3317, 0.0
    %v5002 = vmax.f32 %v3319, 0.0
    %v5003 = vmax.f32 %v4729, 0.0
    %v5004 = vmax.f32 %v4731, 0.0
    %v5005 = vmax.f32 %v3323, 0.0
    %v5006 = vmax.f32 %v3325, 0.0
    %v5007 = vmax.f32 %v4735, 0.0
    %v5008 = vmax.f32 %v4737, 0.0
    %v5009 = vmax.f32 %v3327, 0.0
    %v5010 = vmax.f32 %v3329, 0.0
    %v5011 = vmax.f32 %v4739, 0.0
    %v5012 = vmax.f32 %v4741, 0.0
    %v5013 = vmax.f32 %v3333, 0.0
    %v5014 = vmax.f32 %v3335, 0.0
    %v5015 = vmax.f32 %v4745, 0.0
    %v5016 = vmax.f32 %v4747, 0.0
    %v5017 = vmax.f32 %v3337, 0.0
    %v5018 = vmax.f32 %v3339, 0.0
    %v5019 = vmax.f32 %v4749, 0.0
    %v5020 = vmax.f32 %v4751, 0.0
    %v5021 = vmax.f32 %v3343, 0.0
    %v5022 = vmax.f32 %v3345, 0.0
    %v5023 = vmax.f32 %v4755, 0.0
    %v5024 = vmax.f32 %v4757, 0.0
    %v5025 = vmax.f32 %v3347, 0.0
    %v5026 = vmax.f32 %v3349, 0.0
    %v5027 = vmax.f32 %v4759, 0.0
    %v5028 = vmax.f32 %v4761, 0.0
    %v5029 = vmax.f32 %v3353, 0.0
    %v5030 = vmax.f32 %v3355, 0.0
    %v5031 = vmax.f32 %v4765, 0.0
    %v5032 = vmax.f32 %v4767, 0.0
    %v5033 = vmax.f32 %v3357, 0.0
    %v5034 = vmax.f32 %v3359, 0.0
    %v5035 = vmax.f32 %v4769, 0.0
    %v5036 = vmax.f32 %v4771, 0.0
    %v5037 = vmax.f32 %v3363, 0.0
    %v5038 = vmax.f32 %v3365, 0.0
    %v5039 = vmax.f32 %v4775, 0.0
    %v5040 = vmax.f32 %v4777, 0.0
    %v5041 = vmax.f32 %v3367, 0.0
    %v5042 = vmax.f32 %v3369, 0.0
    %v5043 = vmax.f32 %v4779, 0.0
    %v5044 = vmax.f32 %v4781, 0.0
    %v5045 = vmax.f32 %v3373, 0.0
    %v5046 = vmax.f32 %v3375, 0.0
    %v5047 = vmax.f32 %v4785, 0.0
    %v5048 = vmax.f32 %v4787, 0.0
    %v5049 = vmax.f32 %v3377, 0.0
    %v5050 = vmax.f32 %v3379, 0.0
    %v5051 = vmax.f32 %v4789, 0.0
    %v5052 = vmax.f32 %v4791, 0.0
    %v5053 = vmax.f32 %v3383, 0.0
    %v5054 = vmax.f32 %v3385, 0.0
    %v5055 = vmax.f32 %v4795, 0.0
    %v5056 = vmax.f32 %v4797, 0.0
    %v5057 = vmax.f32 %v3387, 0.0
    %v5058 = vmax.f32 %v3389, 0.0
    %v5059 = vmax.f32 %v4799, 0.0
    %v5060 = vmax.f32 %v4801, 0.0
    %v5061 = vmax.f32 %v3393, 0.0
    %v5062 = vmax.f32 %v3395, 0.0
    %v5063 = vmax.f32 %v4805, 0.0
    %v5064 = vmax.f32 %v4807, 0.0
    %v5065 = vmax.f32 %v3397, 0.0
    %v5066 = vmax.f32 %v3399, 0.0
    %v5067 = vmax.f32 %v4809, 0.0
    %v5068 = vmax.f32 %v4811, 0.0
    %v5069 = vpack.c.bf16 %v4817, %v4813
    %v5070 = vpack.c.bf16 %v4818, %v4814
    %v5071 = vpack.c.bf16 %v4819, %v4815
    %v5072 = vpack.c.bf16 %v4820, %v4816
    %v5073 = vpack.c.bf16 %v4825, %v4821
    %v5074 = vpack.c.bf16 %v4826, %v4822
    %v5075 = vpack.c.bf16 %v4827, %v4823
    %v5076 = vpack.c.bf16 %v4828, %v4824
    %v5077 = vpack.c.bf16 %v4833, %v4829
    %v5078 = vpack.c.bf16 %v4834, %v4830
    %v5079 = vpack.c.bf16 %v4835, %v4831
    %v5080 = vpack.c.bf16 %v4836, %v4832
    %v5081 = vpack.c.bf16 %v4841, %v4837
    %v5082 = vpack.c.bf16 %v4842, %v4838
    %v5083 = vpack.c.bf16 %v4843, %v4839
    %v5084 = vpack.c.bf16 %v4844, %v4840
    %v5085 = vpack.c.bf16 %v4849, %v4845
    %v5086 = vpack.c.bf16 %v4850, %v4846
    %v5087 = vpack.c.bf16 %v4851, %v4847
    %v5088 = vpack.c.bf16 %v4852, %v4848
    %v5089 = vpack.c.bf16 %v4857, %v4853
    %v5090 = vpack.c.bf16 %v4858, %v4854
    %v5091 = vpack.c.bf16 %v4859, %v4855
    %v5092 = vpack.c.bf16 %v4860, %v4856
    %v5093 = vpack.c.bf16 %v4865, %v4861
    %v5094 = vpack.c.bf16 %v4866, %v4862
    %v5095 = vpack.c.bf16 %v4867, %v4863
    %v5096 = vpack.c.bf16 %v4868, %v4864
    %v5097 = vpack.c.bf16 %v4873, %v4869
    %v5098 = vpack.c.bf16 %v4874, %v4870
    %v5099 = vpack.c.bf16 %v4875, %v4871
    %v5100 = vpack.c.bf16 %v4876, %v4872
    %v5101 = vpack.c.bf16 %v4881, %v4877
    %v5102 = vpack.c.bf16 %v4882, %v4878
    %v5103 = vpack.c.bf16 %v4883, %v4879
    %v5104 = vpack.c.bf16 %v4884, %v4880
    %v5105 = vpack.c.bf16 %v4889, %v4885
    %v5106 = vpack.c.bf16 %v4890, %v4886
    %v5107 = vpack.c.bf16 %v4891, %v4887
    %v5108 = vpack.c.bf16 %v4892, %v4888
    %v5109 = vpack.c.bf16 %v4897, %v4893
    %v5110 = vpack.c.bf16 %v4898, %v4894
    %v5111 = vpack.c.bf16 %v4899, %v4895
    %v5112 = vpack.c.bf16 %v4900, %v4896
    %v5113 = vpack.c.bf16 %v4905, %v4901
    %v5114 = vpack.c.bf16 %v4906, %v4902
    %v5115 = vpack.c.bf16 %v4907, %v4903
    %v5116 = vpack.c.bf16 %v4908, %v4904
    %v5117 = vpack.c.bf16 %v4913, %v4909
    %v5118 = vpack.c.bf16 %v4914, %v4910
    %v5119 = vpack.c.bf16 %v4915, %v4911
    %v5120 = vpack.c.bf16 %v4916, %v4912
    %v5121 = vpack.c.bf16 %v4921, %v4917
    %v5122 = vpack.c.bf16 %v4922, %v4918
    %v5123 = vpack.c.bf16 %v4923, %v4919
    %v5124 = vpack.c.bf16 %v4924, %v4920
    %v5125 = vpack.c.bf16 %v4929, %v4925
    %v5126 = vpack.c.bf16 %v4930, %v4926
    %v5127 = vpack.c.bf16 %v4931, %v4927
    %v5128 = vpack.c.bf16 %v4932, %v4928
    %v5129 = vpack.c.bf16 %v4937, %v4933
    %v5130 = vpack.c.bf16 %v4938, %v4934
    %v5131 = vpack.c.bf16 %v4939, %v4935
    %v5132 = vpack.c.bf16 %v4940, %v4936
    %v5133 = vpack.c.bf16 %v4945, %v4941
    %v5134 = vpack.c.bf16 %v4946, %v4942
    %v5135 = vpack.c.bf16 %v4947, %v4943
    %v5136 = vpack.c.bf16 %v4948, %v4944
    %v5137 = vpack.c.bf16 %v4953, %v4949
    %v5138 = vpack.c.bf16 %v4954, %v4950
    %v5139 = vpack.c.bf16 %v4955, %v4951
    %v5140 = vpack.c.bf16 %v4956, %v4952
    %v5141 = vpack.c.bf16 %v4961, %v4957
    %v5142 = vpack.c.bf16 %v4962, %v4958
    %v5143 = vpack.c.bf16 %v4963, %v4959
    %v5144 = vpack.c.bf16 %v4964, %v4960
    %v5145 = vpack.c.bf16 %v4969, %v4965
    %v5146 = vpack.c.bf16 %v4970, %v4966
    %v5147 = vpack.c.bf16 %v4971, %v4967
    %v5148 = vpack.c.bf16 %v4972, %v4968
    %v5149 = vpack.c.bf16 %v4977, %v4973
    %v5150 = vpack.c.bf16 %v4978, %v4974
    %v5151 = vpack.c.bf16 %v4979, %v4975
    %v5152 = vpack.c.bf16 %v4980, %v4976
    %v5153 = vpack.c.bf16 %v4985, %v4981
    %v5154 = vpack.c.bf16 %v4986, %v4982
    %v5155 = vpack.c.bf16 %v4987, %v4983
    %v5156 = vpack.c.bf16 %v4988, %v4984
    %v5157 = vpack.c.bf16 %v4993, %v4989
    %v5158 = vpack.c.bf16 %v4994, %v4990
    %v5159 = vpack.c.bf16 %v4995, %v4991
    %v5160 = vpack.c.bf16 %v4996, %v4992
    %v5161 = vpack.c.bf16 %v5001, %v4997
    %v5162 = vpack.c.bf16 %v5002, %v4998
    %v5163 = vpack.c.bf16 %v5003, %v4999
    %v5164 = vpack.c.bf16 %v5004, %v5000
    %v5165 = vpack.c.bf16 %v5009, %v5005
    %v5166 = vpack.c.bf16 %v5010, %v5006
    %v5167 = vpack.c.bf16 %v5011, %v5007
    %v5168 = vpack.c.bf16 %v5012, %v5008
    %v5169 = vpack.c.bf16 %v5017, %v5013
    %v5170 = vpack.c.bf16 %v5018, %v5014
    %v5171 = vpack.c.bf16 %v5019, %v5015
    %v5172 = vpack.c.bf16 %v5020, %v5016
    %v5173 = vpack.c.bf16 %v5025, %v5021
    %v5174 = vpack.c.bf16 %v5026, %v5022
    %v5175 = vpack.c.bf16 %v5027, %v5023
    %v5176 = vpack.c.bf16 %v5028, %v5024
    %v5177 = vpack.c.bf16 %v5033, %v5029
    %v5178 = vpack.c.bf16 %v5034, %v5030
    %v5179 = vpack.c.bf16 %v5035, %v5031
    %v5180 = vpack.c.bf16 %v5036, %v5032
    %v5181 = vpack.c.bf16 %v5041, %v5037
    %v5182 = vpack.c.bf16 %v5042, %v5038
    %v5183 = vpack.c.bf16 %v5043, %v5039
    %v5184 = vpack.c.bf16 %v5044, %v5040
    %v5185 = vpack.c.bf16 %v5049, %v5045
    %v5186 = vpack.c.bf16 %v5050, %v5046
    %v5187 = vpack.c.bf16 %v5051, %v5047
    %v5188 = vpack.c.bf16 %v5052, %v5048
    %v5189 = vpack.c.bf16 %v5057, %v5053
    %v5190 = vpack.c.bf16 %v5058, %v5054
    %v5191 = vpack.c.bf16 %v5059, %v5055
    %v5192 = vpack.c.bf16 %v5060, %v5056
    %v5193 = vpack.c.bf16 %v5065, %v5061
    %v5194 = vpack.c.bf16 %v5066, %v5062
    %v5195 = vpack.c.bf16 %v5067, %v5063
    %v5196 = vpack.c.bf16 %v5068, %v5064
    %v5197 = vld [vmem:[%s3] sm:$0xf]
    %v5198 = vld [vmem:[%s3 + $0x4] sm:$0xf]
    %v5199 = vld [vmem:[%s3 + $0x8] sm:$0xf]
    %v5200 = vld [vmem:[%s3 + $0xc] sm:$0xf]
    %v5201 = vld [vmem:[%s3 + $0x10] sm:$0xf]
    %v5202 = vld [vmem:[%s3 + $0x14] sm:$0xf]
    %v5203 = vld [vmem:[%s3 + $0x18] sm:$0xf]
    %v5204 = vld [vmem:[%s3 + $0x1c] sm:$0xf]
    %v5205 = vld [vmem:[%s3 + $0x20] sm:$0xf]
    %v5206 = vld [vmem:[%s3 + $0x24] sm:$0xf]
    %v5207 = vld [vmem:[%s3 + $0x28] sm:$0xf]
    %v5208 = vld [vmem:[%s3 + $0x2c] sm:$0xf]
    %v5209 = vld [vmem:[%s3 + $0x30] sm:$0xf]
    %v5210 = vld [vmem:[%s3 + $0x34] sm:$0xf]
    %v5211 = vld [vmem:[%s3 + $0x38] sm:$0xf]
    %v5212 = vld [vmem:[%s3 + $0x3c] sm:$0xf]
    %v5213 = vld [vmem:[%s3 + $0x40] sm:$0xf]
    %v5214 = vld [vmem:[%s3 + $0x44] sm:$0xf]
    %v5215 = vld [vmem:[%s3 + $0x48] sm:$0xf]
    %v5216 = vld [vmem:[%s3 + $0x4c] sm:$0xf]
    %v5217 = vld [vmem:[%s3 + $0x50] sm:$0xf]
    %v5218 = vld [vmem:[%s3 + $0x54] sm:$0xf]
    %v5219 = vld [vmem:[%s3 + $0x58] sm:$0xf]
    %v5220 = vld [vmem:[%s3 + $0x5c] sm:$0xf]
    %v5221 = vld [vmem:[%s3 + $0x60] sm:$0xf]
    %v5222 = vld [vmem:[%s3 + $0x64] sm:$0xf]
    %v5223 = vld [vmem:[%s3 + $0x68] sm:$0xf]
    %v5224 = vld [vmem:[%s3 + $0x6c] sm:$0xf]
    %v5225 = vld [vmem:[%s3 + $0x70] sm:$0xf]
    %v5226 = vld [vmem:[%s3 + $0x74] sm:$0xf]
    %v5227 = vld [vmem:[%s3 + $0x78] sm:$0xf]
    %v5228 = vld [vmem:[%s3 + $0x7c] sm:$0xf]
    %v5229 = vld [vmem:[%s3 + $0x80] sm:$0xf]
    %v5230 = vld [vmem:[%s3 + $0x84] sm:$0xf]
    %v5231 = vld [vmem:[%s3 + $0x88] sm:$0xf]
    %v5232 = vld [vmem:[%s3 + $0x8c] sm:$0xf]
    %v5233 = vld [vmem:[%s3 + $0x90] sm:$0xf]
    %v5234 = vld [vmem:[%s3 + $0x94] sm:$0xf]
    %v5235 = vld [vmem:[%s3 + $0x98] sm:$0xf]
    %v5236 = vld [vmem:[%s3 + $0x9c] sm:$0xf]
    %v5237 = vld [vmem:[%s3 + $0xa0] sm:$0xf]
    %v5238 = vld [vmem:[%s3 + $0xa4] sm:$0xf]
    %v5239 = vld [vmem:[%s3 + $0xa8] sm:$0xf]
    %v5240 = vld [vmem:[%s3 + $0xac] sm:$0xf]
    %v5241 = vld [vmem:[%s3 + $0xb0] sm:$0xf]
    %v5242 = vld [vmem:[%s3 + $0xb4] sm:$0xf]
    %v5243 = vld [vmem:[%s3 + $0xb8] sm:$0xf]
    %v5244 = vld [vmem:[%s3 + $0xbc] sm:$0xf]
    %v5245 = vld [vmem:[%s3 + $0xc0] sm:$0xf]
    %v5246 = vld [vmem:[%s3 + $0xc4] sm:$0xf]
    %v5247 = vld [vmem:[%s3 + $0xc8] sm:$0xf]
    %v5248 = vld [vmem:[%s3 + $0xcc] sm:$0xf]
    %v5249 = vld [vmem:[%s3 + $0xd0] sm:$0xf]
    %v5250 = vld [vmem:[%s3 + $0xd4] sm:$0xf]
    %v5251 = vld [vmem:[%s3 + $0xd8] sm:$0xf]
    %v5252 = vld [vmem:[%s3 + $0xdc] sm:$0xf]
    %v5253 = vld [vmem:[%s3 + $0xe0] sm:$0xf]
    %v5254 = vld [vmem:[%s3 + $0xe4] sm:$0xf]
    %v5255 = vld [vmem:[%s3 + $0xe8] sm:$0xf]
    %v5256 = vld [vmem:[%s3 + $0xec] sm:$0xf]
    %v5257 = vld [vmem:[%s3 + $0xf0] sm:$0xf]
    %v5258 = vld [vmem:[%s3 + $0xf4] sm:$0xf]
    %v5259 = vld [vmem:[%s3 + $0xf8] sm:$0xf]
    %v5260 = vld [vmem:[%s3 + $0xfc] sm:$0xf]
    %v5261 = vld [vmem:[%s4] sm:$0x1]
    %v5263 = vlaneseq
    %v5264 = vshrl.u32 %v5263, 7
    %v5265 = vsub.s32 0, %v5264
    %v5266 = vrot.slane %v5261, %v5265
    %v5332 = vunpack.c.l.b16 %v5197
    %v5333 = vunpack.c.l.b16 %v5198
    %v5334 = vunpack.c.l.b16 %v5199
    %v5335 = vunpack.c.l.b16 %v5200
    %v5336 = vunpack.c.l.b16 %v5201
    %v5337 = vunpack.c.l.b16 %v5202
    %v5338 = vunpack.c.l.b16 %v5203
    %v5339 = vunpack.c.l.b16 %v5204
    %v5340 = vunpack.c.l.b16 %v5205
    %v5341 = vunpack.c.l.b16 %v5206
    %v5342 = vunpack.c.l.b16 %v5207
    %v5343 = vunpack.c.l.b16 %v5208
    %v5344 = vunpack.c.l.b16 %v5209
    %v5345 = vunpack.c.l.b16 %v5210
    %v5346 = vunpack.c.l.b16 %v5211
    %v5347 = vunpack.c.l.b16 %v5212
    %v5348 = vunpack.c.l.b16 %v5213
    %v5349 = vunpack.c.l.b16 %v5214
    %v5350 = vunpack.c.l.b16 %v5215
    %v5351 = vunpack.c.l.b16 %v5216
    %v5352 = vunpack.c.l.b16 %v5217
    %v5353 = vunpack.c.l.b16 %v5218
    %v5354 = vunpack.c.l.b16 %v5219
    %v5355 = vunpack.c.l.b16 %v5220
    %v5356 = vunpack.c.l.b16 %v5221
    %v5357 = vunpack.c.l.b16 %v5222
    %v5358 = vunpack.c.l.b16 %v5223
    %v5359 = vunpack.c.l.b16 %v5224
    %v5360 = vunpack.c.l.b16 %v5225
    %v5361 = vunpack.c.l.b16 %v5226
    %v5362 = vunpack.c.l.b16 %v5227
    %v5363 = vunpack.c.l.b16 %v5228
    %v5364 = vunpack.c.l.b16 %v5229
    %v5365 = vunpack.c.l.b16 %v5230
    %v5366 = vunpack.c.l.b16 %v5231
    %v5367 = vunpack.c.l.b16 %v5232
    %v5368 = vunpack.c.l.b16 %v5233
    %v5369 = vunpack.c.l.b16 %v5234
    %v5370 = vunpack.c.l.b16 %v5235
    %v5371 = vunpack.c.l.b16 %v5236
    %v5372 = vunpack.c.l.b16 %v5237
    %v5373 = vunpack.c.l.b16 %v5238
    %v5374 = vunpack.c.l.b16 %v5239
    %v5375 = vunpack.c.l.b16 %v5240
    %v5376 = vunpack.c.l.b16 %v5241
    %v5377 = vunpack.c.l.b16 %v5242
    %v5378 = vunpack.c.l.b16 %v5243
    %v5379 = vunpack.c.l.b16 %v5244
    %v5380 = vunpack.c.l.b16 %v5245
    %v5381 = vunpack.c.l.b16 %v5246
    %v5382 = vunpack.c.l.b16 %v5247
    %v5383 = vunpack.c.l.b16 %v5248
    %v5384 = vunpack.c.l.b16 %v5249
    %v5385 = vunpack.c.l.b16 %v5250
    %v5386 = vunpack.c.l.b16 %v5251
    %v5387 = vunpack.c.l.b16 %v5252
    %v5388 = vunpack.c.l.b16 %v5253
    %v5389 = vunpack.c.l.b16 %v5254
    %v5390 = vunpack.c.l.b16 %v5255
    %v5391 = vunpack.c.l.b16 %v5256
    %v5392 = vunpack.c.l.b16 %v5257
    %v5393 = vunpack.c.l.b16 %v5258
    %v5394 = vunpack.c.l.b16 %v5259
    %v5395 = vunpack.c.l.b16 %v5260
    %v5396 = vpack.c.b16 %v5333, %v5332
    %v5397 = vpack.c.b16 %v5335, %v5334
    %v5398 = vpack.c.b16 %v5337, %v5336
    %v5399 = vpack.c.b16 %v5339, %v5338
    %v5400 = vpack.c.b16 %v5341, %v5340
    %v5401 = vpack.c.b16 %v5343, %v5342
    %v5402 = vpack.c.b16 %v5345, %v5344
    %v5403 = vpack.c.b16 %v5347, %v5346
    %v5404 = vpack.c.b16 %v5349, %v5348
    %v5405 = vpack.c.b16 %v5351, %v5350
    %v5406 = vpack.c.b16 %v5353, %v5352
    %v5407 = vpack.c.b16 %v5355, %v5354
    %v5408 = vpack.c.b16 %v5357, %v5356
    %v5409 = vpack.c.b16 %v5359, %v5358
    %v5410 = vpack.c.b16 %v5361, %v5360
    %v5411 = vpack.c.b16 %v5363, %v5362
    %v5412 = vpack.c.b16 %v5365, %v5364
    %v5413 = vpack.c.b16 %v5367, %v5366
    %v5414 = vpack.c.b16 %v5369, %v5368
    %v5415 = vpack.c.b16 %v5371, %v5370
    %v5416 = vpack.c.b16 %v5373, %v5372
    %v5417 = vpack.c.b16 %v5375, %v5374
    %v5418 = vpack.c.b16 %v5377, %v5376
    %v5419 = vpack.c.b16 %v5379, %v5378
    %v5420 = vpack.c.b16 %v5381, %v5380
    %v5421 = vpack.c.b16 %v5383, %v5382
    %v5422 = vpack.c.b16 %v5385, %v5384
    %v5423 = vpack.c.b16 %v5387, %v5386
    %v5424 = vpack.c.b16 %v5389, %v5388
    %v5425 = vpack.c.b16 %v5391, %v5390
    %v5426 = vpack.c.b16 %v5393, %v5392
    %v5427 = vpack.c.b16 %v5395, %v5394
    %5460 = vmatprep.subr.bf16.mxu0 0
    %5461 = vmatpush1.bf16.msra.mxu0 %v5396
    %5462 = vmatprep.subr.bf16.mxu0 0
    %5463 = vmatpush1.bf16.msra.mxu0 %v5397
    %5464 = vmatprep.subr.bf16.mxu0 0
    %5465 = vmatpush1.bf16.msra.mxu0 %v5398
    %5466 = vmatprep.subr.bf16.mxu0 0
    %5467 = vmatpush1.bf16.msra.mxu0 %v5399
    %5468 = vmatprep.subr.bf16.mxu0 0
    %5469 = vmatpush1.bf16.msra.mxu0 %v5400
    %5470 = vmatprep.subr.bf16.mxu0 0
    %5471 = vmatpush1.bf16.msra.mxu0 %v5401
    %5472 = vmatprep.subr.bf16.mxu0 0
    %5473 = vmatpush1.bf16.msra.mxu0 %v5402
    %5474 = vmatprep.subr.bf16.mxu0 0
    %5475 = vmatpush1.bf16.msra.mxu0 %v5403
    %5476 = vmatprep.subr.bf16.mxu0 0
    %5477 = vmatpush1.bf16.msra.mxu0 %v5404
    %5478 = vmatprep.subr.bf16.mxu0 0
    %5479 = vmatpush1.bf16.msra.mxu0 %v5405
    %5480 = vmatprep.subr.bf16.mxu0 0
    %5481 = vmatpush1.bf16.msra.mxu0 %v5406
    %5482 = vmatprep.subr.bf16.mxu0 0
    %5483 = vmatpush1.bf16.msra.mxu0 %v5407
    %5484 = vmatprep.subr.bf16.mxu0 0
    %5485 = vmatpush1.bf16.msra.mxu0 %v5408
    %5486 = vmatprep.subr.bf16.mxu0 0
    %5487 = vmatpush1.bf16.msra.mxu0 %v5409
    %5488 = vmatprep.subr.bf16.mxu0 0
    %5489 = vmatpush1.bf16.msra.mxu0 %v5410
    %5490 = vmatprep.subr.bf16.mxu0 0
    %5491 = vmatpush1.bf16.msra.mxu0 %v5411
    %5492 = vmatprep.mubr.bf16.mxu0 %v5070
    %5493 = vmatmul.mubr.bf16.gmra.mrb[0].mxu0 %v5069
    %v5494 = vpop.f32.mrb[0].mxu0
    %v5495 = vadd.f32 %v5266, %v5494
    %v5496 = vpop.f32.mrb[0].mxu0
    %v5497 = vpop.f32.mrb[0].mxu0
    %v5498 = vadd.f32 %v5266, %v5497
    %v5499 = vpop.f32.mrb[0].mxu0
    %5500 = vmatprep.mubr.bf16.mxu0 %v5074
    %5501 = vmatmul.mubr.bf16.gmra.mrb[0].mxu0 %v5073
    %v5502 = vpop.f32.mrb[0].mxu0
    %v5503 = vadd.f32 %v5266, %v5502
    %v5504 = vpop.f32.mrb[0].mxu0
    %v5505 = vpop.f32.mrb[0].mxu0
    %v5506 = vadd.f32 %v5266, %v5505
    %v5507 = vpop.f32.mrb[0].mxu0
    %5508 = vmatprep.mubr.bf16.mxu0 %v5078
    %5509 = vmatmul.mubr.bf16.gmra.mrb[0].mxu0 %v5077
    %v5510 = vpop.f32.mrb[0].mxu0
    %v5511 = vadd.f32 %v5266, %v5510
    %v5512 = vpop.f32.mrb[0].mxu0
    %v5513 = vpop.f32.mrb[0].mxu0
    %v5514 = vadd.f32 %v5266, %v5513
    %v5515 = vpop.f32.mrb[0].mxu0
    %5516 = vmatprep.mubr.bf16.mxu0 %v5082
    %5517 = vmatmul.mubr.bf16.gmra.mrb[0].mxu0 %v5081
    %v5518 = vpop.f32.mrb[0].mxu0
    %v5519 = vadd.f32 %v5266, %v5518
    %v5520 = vpop.f32.mrb[0].mxu0
    %v5521 = vpop.f32.mrb[0].mxu0
    %v5522 = vadd.f32 %v5266, %v5521
    %v5523 = vpop.f32.mrb[0].mxu0
    %5524 = vmatprep.mubr.bf16.mxu0 %v5086
    %5525 = vmatmul.mubr.bf16.gmra.mrb[0].mxu0 %v5085
    %v5526 = vpop.f32.mrb[0].mxu0
    %v5527 = vadd.f32 %v5266, %v5526
    %v5528 = vpop.f32.mrb[0].mxu0
    %v5529 = vpop.f32.mrb[0].mxu0
    %v5530 = vadd.f32 %v5266, %v5529
    %v5531 = vpop.f32.mrb[0].mxu0
    %5532 = vmatprep.mubr.bf16.mxu0 %v5090
    %5533 = vmatmul.mubr.bf16.gmra.mrb[0].mxu0 %v5089
    %v5534 = vpop.f32.mrb[0].mxu0
    %v5535 = vadd.f32 %v5266, %v5534
    %v5536 = vpop.f32.mrb[0].mxu0
    %v5537 = vpop.f32.mrb[0].mxu0
    %v5538 = vadd.f32 %v5266, %v5537
    %v5539 = vpop.f32.mrb[0].mxu0
    %5540 = vmatprep.mubr.bf16.mxu0 %v5094
    %5541 = vmatmul.mubr.bf16.gmra.mrb[0].mxu0 %v5093
    %v5542 = vpop.f32.mrb[0].mxu0
    %v5543 = vadd.f32 %v5266, %v5542
    %v5544 = vpop.f32.mrb[0].mxu0
    %v5545 = vpop.f32.mrb[0].mxu0
    %v5546 = vadd.f32 %v5266, %v5545
    %v5547 = vpop.f32.mrb[0].mxu0
    %5548 = vmatprep.mubr.bf16.mxu0 %v5098
    %5549 = vmatmul.mubr.bf16.gmra.mrb[0].mxu0 %v5097
    %v5550 = vpop.f32.mrb[0].mxu0
    %v5551 = vadd.f32 %v5266, %v5550
    %v5552 = vpop.f32.mrb[0].mxu0
    %v5553 = vpop.f32.mrb[0].mxu0
    %v5554 = vadd.f32 %v5266, %v5553
    %v5555 = vpop.f32.mrb[0].mxu0
    %5556 = vmatprep.mubr.bf16.mxu0 %v5102
    %5557 = vmatmul.mubr.bf16.gmra.mrb[0].mxu0 %v5101
    %v5558 = vpop.f32.mrb[0].mxu0
    %v5559 = vadd.f32 %v5266, %v5558
    %v5560 = vpop.f32.mrb[0].mxu0
    %v5561 = vpop.f32.mrb[0].mxu0
    %v5562 = vadd.f32 %v5266, %v5561
    %v5563 = vpop.f32.mrb[0].mxu0
    %5564 = vmatprep.mubr.bf16.mxu0 %v5106
    %5565 = vmatmul.mubr.bf16.gmra.mrb[0].mxu0 %v5105
    %v5566 = vpop.f32.mrb[0].mxu0
    %v5567 = vadd.f32 %v5266, %v5566
    %v5568 = vpop.f32.mrb[0].mxu0
    %v5569 = vpop.f32.mrb[0].mxu0
    %v5570 = vadd.f32 %v5266, %v5569
    %v5571 = vpop.f32.mrb[0].mxu0
    %5572 = vmatprep.mubr.bf16.mxu0 %v5110
    %5573 = vmatmul.mubr.bf16.gmra.mrb[0].mxu0 %v5109
    %v5574 = vpop.f32.mrb[0].mxu0
    %v5575 = vadd.f32 %v5266, %v5574
    %v5576 = vpop.f32.mrb[0].mxu0
    %v5577 = vpop.f32.mrb[0].mxu0
    %v5578 = vadd.f32 %v5266, %v5577
    %v5579 = vpop.f32.mrb[0].mxu0
    %5580 = vmatprep.mubr.bf16.mxu0 %v5114
    %5581 = vmatmul.mubr.bf16.gmra.mrb[0].mxu0 %v5113
    %v5582 = vpop.f32.mrb[0].mxu0
    %v5583 = vadd.f32 %v5266, %v5582
    %v5584 = vpop.f32.mrb[0].mxu0
    %v5585 = vpop.f32.mrb[0].mxu0
    %v5586 = vadd.f32 %v5266, %v5585
    %v5587 = vpop.f32.mrb[0].mxu0
    %5588 = vmatprep.mubr.bf16.mxu0 %v5118
    %5589 = vmatmul.mubr.bf16.gmra.mrb[0].mxu0 %v5117
    %v5590 = vpop.f32.mrb[0].mxu0
    %v5591 = vadd.f32 %v5266, %v5590
    %v5592 = vpop.f32.mrb[0].mxu0
    %v5593 = vpop.f32.mrb[0].mxu0
    %v5594 = vadd.f32 %v5266, %v5593
    %v5595 = vpop.f32.mrb[0].mxu0
    %5596 = vmatprep.mubr.bf16.mxu0 %v5122
    %5597 = vmatmul.mubr.bf16.gmra.mrb[0].mxu0 %v5121
    %v5598 = vpop.f32.mrb[0].mxu0
    %v5599 = vadd.f32 %v5266, %v5598
    %v5600 = vpop.f32.mrb[0].mxu0
    %v5601 = vpop.f32.mrb[0].mxu0
    %v5602 = vadd.f32 %v5266, %v5601
    %v5603 = vpop.f32.mrb[0].mxu0
    %5604 = vmatprep.mubr.bf16.mxu0 %v5126
    %5605 = vmatmul.mubr.bf16.gmra.mrb[0].mxu0 %v5125
    %v5606 = vpop.f32.mrb[0].mxu0
    %v5607 = vadd.f32 %v5266, %v5606
    %v5608 = vpop.f32.mrb[0].mxu0
    %v5609 = vpop.f32.mrb[0].mxu0
    %v5610 = vadd.f32 %v5266, %v5609
    %v5611 = vpop.f32.mrb[0].mxu0
    %5612 = vmatprep.mubr.bf16.mxu0 %v5130
    %5613 = vmatmul.mubr.bf16.gmra.mrb[0].mxu0 %v5129
    %v5614 = vpop.f32.mrb[0].mxu0
    %v5615 = vadd.f32 %v5266, %v5614
    %v5616 = vpop.f32.mrb[0].mxu0
    %v5617 = vpop.f32.mrb[0].mxu0
    %v5618 = vadd.f32 %v5266, %v5617
    %v5619 = vpop.f32.mrb[0].mxu0
    %5620 = vmatprep.mubr.bf16.mxu0 %v5134
    %5621 = vmatmul.mubr.bf16.gmra.mrb[0].mxu0 %v5133
    %v5622 = vpop.f32.mrb[0].mxu0
    %v5623 = vadd.f32 %v5266, %v5622
    %v5624 = vpop.f32.mrb[0].mxu0
    %v5625 = vpop.f32.mrb[0].mxu0
    %v5626 = vadd.f32 %v5266, %v5625
    %v5627 = vpop.f32.mrb[0].mxu0
    %5628 = vmatprep.mubr.bf16.mxu0 %v5138
    %5629 = vmatmul.mubr.bf16.gmra.mrb[0].mxu0 %v5137
    %v5630 = vpop.f32.mrb[0].mxu0
    %v5631 = vadd.f32 %v5266, %v5630
    %v5632 = vpop.f32.mrb[0].mxu0
    %v5633 = vpop.f32.mrb[0].mxu0
    %v5634 = vadd.f32 %v5266, %v5633
    %v5635 = vpop.f32.mrb[0].mxu0
    %5636 = vmatprep.mubr.bf16.mxu0 %v5142
    %5637 = vmatmul.mubr.bf16.gmra.mrb[0].mxu0 %v5141
    %v5638 = vpop.f32.mrb[0].mxu0
    %v5639 = vadd.f32 %v5266, %v5638
    %v5640 = vpop.f32.mrb[0].mxu0
    %v5641 = vpop.f32.mrb[0].mxu0
    %v5642 = vadd.f32 %v5266, %v5641
    %v5643 = vpop.f32.mrb[0].mxu0
    %5644 = vmatprep.mubr.bf16.mxu0 %v5146
    %5645 = vmatmul.mubr.bf16.gmra.mrb[0].mxu0 %v5145
    %v5646 = vpop.f32.mrb[0].mxu0
    %v5647 = vadd.f32 %v5266, %v5646
    %v5648 = vpop.f32.mrb[0].mxu0
    %v5649 = vpop.f32.mrb[0].mxu0
    %v5650 = vadd.f32 %v5266, %v5649
    %v5651 = vpop.f32.mrb[0].mxu0
    %5652 = vmatprep.mubr.bf16.mxu0 %v5150
    %5653 = vmatmul.mubr.bf16.gmra.mrb[0].mxu0 %v5149
    %v5654 = vpop.f32.mrb[0].mxu0
    %v5655 = vadd.f32 %v5266, %v5654
    %v5656 = vpop.f32.mrb[0].mxu0
    %v5657 = vpop.f32.mrb[0].mxu0
    %v5658 = vadd.f32 %v5266, %v5657
    %v5659 = vpop.f32.mrb[0].mxu0
    %5660 = vmatprep.mubr.bf16.mxu0 %v5154
    %5661 = vmatmul.mubr.bf16.gmra.mrb[0].mxu0 %v5153
    %v5662 = vpop.f32.mrb[0].mxu0
    %v5663 = vadd.f32 %v5266, %v5662
    %v5664 = vpop.f32.mrb[0].mxu0
    %v5665 = vpop.f32.mrb[0].mxu0
    %v5666 = vadd.f32 %v5266, %v5665
    %v5667 = vpop.f32.mrb[0].mxu0
    %5668 = vmatprep.mubr.bf16.mxu0 %v5158
    %5669 = vmatmul.mubr.bf16.gmra.mrb[0].mxu0 %v5157
    %v5670 = vpop.f32.mrb[0].mxu0
    %v5671 = vadd.f32 %v5266, %v5670
    %v5672 = vpop.f32.mrb[0].mxu0
    %v5673 = vpop.f32.mrb[0].mxu0
    %v5674 = vadd.f32 %v5266, %v5673
    %v5675 = vpop.f32.mrb[0].mxu0
    %5676 = vmatprep.mubr.bf16.mxu0 %v5162
    %5677 = vmatmul.mubr.bf16.gmra.mrb[0].mxu0 %v5161
    %v5678 = vpop.f32.mrb[0].mxu0
    %v5679 = vadd.f32 %v5266, %v5678
    %v5680 = vpop.f32.mrb[0].mxu0
    %v5681 = vpop.f32.mrb[0].mxu0
    %v5682 = vadd.f32 %v5266, %v5681
    %v5683 = vpop.f32.mrb[0].mxu0
    %5684 = vmatprep.mubr.bf16.mxu0 %v5166
    %5685 = vmatmul.mubr.bf16.gmra.mrb[0].mxu0 %v5165
    %v5686 = vpop.f32.mrb[0].mxu0
    %v5687 = vadd.f32 %v5266, %v5686
    %v5688 = vpop.f32.mrb[0].mxu0
    %v5689 = vpop.f32.mrb[0].mxu0
    %v5690 = vadd.f32 %v5266, %v5689
    %v5691 = vpop.f32.mrb[0].mxu0
    %5692 = vmatprep.mubr.bf16.mxu0 %v5170
    %5693 = vmatmul.mubr.bf16.gmra.mrb[0].mxu0 %v5169
    %v5694 = vpop.f32.mrb[0].mxu0
    %v5695 = vadd.f32 %v5266, %v5694
    %v5696 = vpop.f32.mrb[0].mxu0
    %v5697 = vpop.f32.mrb[0].mxu0
    %v5698 = vadd.f32 %v5266, %v5697
    %v5699 = vpop.f32.mrb[0].mxu0
    %5700 = vmatprep.mubr.bf16.mxu0 %v5174
    %5701 = vmatmul.mubr.bf16.gmra.mrb[0].mxu0 %v5173
    %v5702 = vpop.f32.mrb[0].mxu0
    %v5703 = vadd.f32 %v5266, %v5702
    %v5704 = vpop.f32.mrb[0].mxu0
    %v5705 = vpop.f32.mrb[0].mxu0
    %v5706 = vadd.f32 %v5266, %v5705
    %v5707 = vpop.f32.mrb[0].mxu0
    %5708 = vmatprep.mubr.bf16.mxu0 %v5178
    %5709 = vmatmul.mubr.bf16.gmra.mrb[0].mxu0 %v5177
    %v5710 = vpop.f32.mrb[0].mxu0
    %v5711 = vadd.f32 %v5266, %v5710
    %v5712 = vpop.f32.mrb[0].mxu0
    %v5713 = vpop.f32.mrb[0].mxu0
    %v5714 = vadd.f32 %v5266, %v5713
    %v5715 = vpop.f32.mrb[0].mxu0
    %5716 = vmatprep.mubr.bf16.mxu0 %v5182
    %5717 = vmatmul.mubr.bf16.gmra.mrb[0].mxu0 %v5181
    %v5718 = vpop.f32.mrb[0].mxu0
    %v5719 = vadd.f32 %v5266, %v5718
    %v5720 = vpop.f32.mrb[0].mxu0
    %v5721 = vpop.f32.mrb[0].mxu0
    %v5722 = vadd.f32 %v5266, %v5721
    %v5723 = vpop.f32.mrb[0].mxu0
    %5724 = vmatprep.mubr.bf16.mxu0 %v5186
    %5725 = vmatmul.mubr.bf16.gmra.mrb[0].mxu0 %v5185
    %v5726 = vpop.f32.mrb[0].mxu0
    %v5727 = vadd.f32 %v5266, %v5726
    %v5728 = vpop.f32.mrb[0].mxu0
    %v5729 = vpop.f32.mrb[0].mxu0
    %v5730 = vadd.f32 %v5266, %v5729
    %v5731 = vpop.f32.mrb[0].mxu0
    %5732 = vmatprep.mubr.bf16.mxu0 %v5190
    %5733 = vmatmul.mubr.bf16.gmra.mrb[0].mxu0 %v5189
    %v5734 = vpop.f32.mrb[0].mxu0
    %v5735 = vadd.f32 %v5266, %v5734
    %v5736 = vpop.f32.mrb[0].mxu0
    %v5737 = vpop.f32.mrb[0].mxu0
    %v5738 = vadd.f32 %v5266, %v5737
    %v5739 = vpop.f32.mrb[0].mxu0
    %5740 = vmatprep.mubr.bf16.mxu0 %v5194
    %5741 = vmatmul.mubr.bf16.gmra.mrb[0].mxu0 %v5193
    %v5742 = vpop.f32.mrb[0].mxu0
    %v5743 = vadd.f32 %v5266, %v5742
    %v5744 = vpop.f32.mrb[0].mxu0
    %v5745 = vpop.f32.mrb[0].mxu0
    %v5746 = vadd.f32 %v5266, %v5745
    %v5747 = vpop.f32.mrb[0].mxu0
    %5748 = vdwg.mxu0
    %5749 = vmatprep.subr.bf16.mxu0 0
    %5750 = vmatpush1.bf16.msra.mxu0 %v5412
    %5751 = vmatprep.subr.bf16.mxu0 0
    %5752 = vmatpush1.bf16.msra.mxu0 %v5413
    %5753 = vmatprep.subr.bf16.mxu0 0
    %5754 = vmatpush1.bf16.msra.mxu0 %v5414
    %5755 = vmatprep.subr.bf16.mxu0 0
    %5756 = vmatpush1.bf16.msra.mxu0 %v5415
    %5757 = vmatprep.subr.bf16.mxu0 0
    %5758 = vmatpush1.bf16.msra.mxu0 %v5416
    %5759 = vmatprep.subr.bf16.mxu0 0
    %5760 = vmatpush1.bf16.msra.mxu0 %v5417
    %5761 = vmatprep.subr.bf16.mxu0 0
    %5762 = vmatpush1.bf16.msra.mxu0 %v5418
    %5763 = vmatprep.subr.bf16.mxu0 0
    %5764 = vmatpush1.bf16.msra.mxu0 %v5419
    %5765 = vmatprep.subr.bf16.mxu0 0
    %5766 = vmatpush1.bf16.msra.mxu0 %v5420
    %5767 = vmatprep.subr.bf16.mxu0 0
    %5768 = vmatpush1.bf16.msra.mxu0 %v5421
    %5769 = vmatprep.subr.bf16.mxu0 0
    %5770 = vmatpush1.bf16.msra.mxu0 %v5422
    %5771 = vmatprep.subr.bf16.mxu0 0
    %5772 = vmatpush1.bf16.msra.mxu0 %v5423
    %5773 = vmatprep.subr.bf16.mxu0 0
    %5774 = vmatpush1.bf16.msra.mxu0 %v5424
    %5775 = vmatprep.subr.bf16.mxu0 0
    %5776 = vmatpush1.bf16.msra.mxu0 %v5425
    %5777 = vmatprep.subr.bf16.mxu0 0
    %5778 = vmatpush1.bf16.msra.mxu0 %v5426
    %5779 = vmatprep.subr.bf16.mxu0 0
    %5780 = vmatpush1.bf16.msra.mxu0 %v5427
    %5781 = vmatprep.mubr.bf16.mxu0 %v5072
    %5782 = vmatmul.mubr.bf16.gmra.mrb[0].mxu0 %v5071
    %v5783 = vpop.f32.mrb[0].mxu0
    %v5784 = vadd.f32 %v5495, %v5783
    %v5785 = vpop.f32.mrb[0].mxu0
    %v5786 = vpop.f32.mrb[0].mxu0
    %v5787 = vadd.f32 %v5498, %v5786
    %v5788 = vpop.f32.mrb[0].mxu0
    %5789 = vmatprep.mubr.bf16.mxu0 %v5076
    %5790 = vmatmul.mubr.bf16.gmra.mrb[0].mxu0 %v5075
    %v5791 = vpop.f32.mrb[0].mxu0
    %v5792 = vadd.f32 %v5503, %v5791
    %v5793 = vpop.f32.mrb[0].mxu0
    %v5794 = vpop.f32.mrb[0].mxu0
    %v5795 = vadd.f32 %v5506, %v5794
    %v5796 = vpop.f32.mrb[0].mxu0
    %5797 = vmatprep.mubr.bf16.mxu0 %v5080
    %5798 = vmatmul.mubr.bf16.gmra.mrb[0].mxu0 %v5079
    %v5799 = vpop.f32.mrb[0].mxu0
    %v5800 = vadd.f32 %v5511, %v5799
    %v5801 = vpop.f32.mrb[0].mxu0
    %v5802 = vpop.f32.mrb[0].mxu0
    %v5803 = vadd.f32 %v5514, %v5802
    %v5804 = vpop.f32.mrb[0].mxu0
    %5805 = vmatprep.mubr.bf16.mxu0 %v5084
    %5806 = vmatmul.mubr.bf16.gmra.mrb[0].mxu0 %v5083
    %v5807 = vpop.f32.mrb[0].mxu0
    %v5808 = vadd.f32 %v5519, %v5807
    %v5809 = vpop.f32.mrb[0].mxu0
    %v5810 = vpop.f32.mrb[0].mxu0
    %v5811 = vadd.f32 %v5522, %v5810
    %v5812 = vpop.f32.mrb[0].mxu0
    %5813 = vmatprep.mubr.bf16.mxu0 %v5088
    %5814 = vmatmul.mubr.bf16.gmra.mrb[0].mxu0 %v5087
    %v5815 = vpop.f32.mrb[0].mxu0
    %v5816 = vadd.f32 %v5527, %v5815
    %v5817 = vpop.f32.mrb[0].mxu0
    %v5818 = vpop.f32.mrb[0].mxu0
    %v5819 = vadd.f32 %v5530, %v5818
    %v5820 = vpop.f32.mrb[0].mxu0
    %5821 = vmatprep.mubr.bf16.mxu0 %v5092
    %5822 = vmatmul.mubr.bf16.gmra.mrb[0].mxu0 %v5091
    %v5823 = vpop.f32.mrb[0].mxu0
    %v5824 = vadd.f32 %v5535, %v5823
    %v5825 = vpop.f32.mrb[0].mxu0
    %v5826 = vpop.f32.mrb[0].mxu0
    %v5827 = vadd.f32 %v5538, %v5826
    %v5828 = vpop.f32.mrb[0].mxu0
    %5829 = vmatprep.mubr.bf16.mxu0 %v5096
    %5830 = vmatmul.mubr.bf16.gmra.mrb[0].mxu0 %v5095
    %v5831 = vpop.f32.mrb[0].mxu0
    %v5832 = vadd.f32 %v5543, %v5831
    %v5833 = vpop.f32.mrb[0].mxu0
    %v5834 = vpop.f32.mrb[0].mxu0
    %v5835 = vadd.f32 %v5546, %v5834
    %v5836 = vpop.f32.mrb[0].mxu0
    %5837 = vmatprep.mubr.bf16.mxu0 %v5100
    %5838 = vmatmul.mubr.bf16.gmra.mrb[0].mxu0 %v5099
    %v5839 = vpop.f32.mrb[0].mxu0
    %v5840 = vadd.f32 %v5551, %v5839
    %v5841 = vpop.f32.mrb[0].mxu0
    %v5842 = vpop.f32.mrb[0].mxu0
    %v5843 = vadd.f32 %v5554, %v5842
    %v5844 = vpop.f32.mrb[0].mxu0
    %5845 = vmatprep.mubr.bf16.mxu0 %v5104
    %5846 = vmatmul.mubr.bf16.gmra.mrb[0].mxu0 %v5103
    %v5847 = vpop.f32.mrb[0].mxu0
    %v5848 = vadd.f32 %v5559, %v5847
    %v5849 = vpop.f32.mrb[0].mxu0
    %v5850 = vpop.f32.mrb[0].mxu0
    %v5851 = vadd.f32 %v5562, %v5850
    %v5852 = vpop.f32.mrb[0].mxu0
    %5853 = vmatprep.mubr.bf16.mxu0 %v5108
    %5854 = vmatmul.mubr.bf16.gmra.mrb[0].mxu0 %v5107
    %v5855 = vpop.f32.mrb[0].mxu0
    %v5856 = vadd.f32 %v5567, %v5855
    %v5857 = vpop.f32.mrb[0].mxu0
    %v5858 = vpop.f32.mrb[0].mxu0
    %v5859 = vadd.f32 %v5570, %v5858
    %v5860 = vpop.f32.mrb[0].mxu0
    %5861 = vmatprep.mubr.bf16.mxu0 %v5112
    %5862 = vmatmul.mubr.bf16.gmra.mrb[0].mxu0 %v5111
    %v5863 = vpop.f32.mrb[0].mxu0
    %v5864 = vadd.f32 %v5575, %v5863
    %v5865 = vpop.f32.mrb[0].mxu0
    %v5866 = vpop.f32.mrb[0].mxu0
    %v5867 = vadd.f32 %v5578, %v5866
    %v5868 = vpop.f32.mrb[0].mxu0
    %5869 = vmatprep.mubr.bf16.mxu0 %v5116
    %5870 = vmatmul.mubr.bf16.gmra.mrb[0].mxu0 %v5115
    %v5871 = vpop.f32.mrb[0].mxu0
    %v5872 = vadd.f32 %v5583, %v5871
    %v5873 = vpop.f32.mrb[0].mxu0
    %v5874 = vpop.f32.mrb[0].mxu0
    %v5875 = vadd.f32 %v5586, %v5874
    %v5876 = vpop.f32.mrb[0].mxu0
    %5877 = vmatprep.mubr.bf16.mxu0 %v5120
    %5878 = vmatmul.mubr.bf16.gmra.mrb[0].mxu0 %v5119
    %v5879 = vpop.f32.mrb[0].mxu0
    %v5880 = vadd.f32 %v5591, %v5879
    %v5881 = vpop.f32.mrb[0].mxu0
    %v5882 = vpop.f32.mrb[0].mxu0
    %v5883 = vadd.f32 %v5594, %v5882
    %v5884 = vpop.f32.mrb[0].mxu0
    %5885 = vmatprep.mubr.bf16.mxu0 %v5124
    %5886 = vmatmul.mubr.bf16.gmra.mrb[0].mxu0 %v5123
    %v5887 = vpop.f32.mrb[0].mxu0
    %v5888 = vadd.f32 %v5599, %v5887
    %v5889 = vpop.f32.mrb[0].mxu0
    %v5890 = vpop.f32.mrb[0].mxu0
    %v5891 = vadd.f32 %v5602, %v5890
    %v5892 = vpop.f32.mrb[0].mxu0
    %5893 = vmatprep.mubr.bf16.mxu0 %v5128
    %5894 = vmatmul.mubr.bf16.gmra.mrb[0].mxu0 %v5127
    %v5895 = vpop.f32.mrb[0].mxu0
    %v5896 = vadd.f32 %v5607, %v5895
    %v5897 = vpop.f32.mrb[0].mxu0
    %v5898 = vpop.f32.mrb[0].mxu0
    %v5899 = vadd.f32 %v5610, %v5898
    %v5900 = vpop.f32.mrb[0].mxu0
    %5901 = vmatprep.mubr.bf16.mxu0 %v5132
    %5902 = vmatmul.mubr.bf16.gmra.mrb[0].mxu0 %v5131
    %v5903 = vpop.f32.mrb[0].mxu0
    %v5904 = vadd.f32 %v5615, %v5903
    %v5905 = vpop.f32.mrb[0].mxu0
    %v5906 = vpop.f32.mrb[0].mxu0
    %v5907 = vadd.f32 %v5618, %v5906
    %v5908 = vpop.f32.mrb[0].mxu0
    %5909 = vmatprep.mubr.bf16.mxu0 %v5136
    %5910 = vmatmul.mubr.bf16.gmra.mrb[0].mxu0 %v5135
    %v5911 = vpop.f32.mrb[0].mxu0
    %v5912 = vadd.f32 %v5623, %v5911
    %v5913 = vpop.f32.mrb[0].mxu0
    %v5914 = vpop.f32.mrb[0].mxu0
    %v5915 = vadd.f32 %v5626, %v5914
    %v5916 = vpop.f32.mrb[0].mxu0
    %5917 = vmatprep.mubr.bf16.mxu0 %v5140
    %5918 = vmatmul.mubr.bf16.gmra.mrb[0].mxu0 %v5139
    %v5919 = vpop.f32.mrb[0].mxu0
    %v5920 = vadd.f32 %v5631, %v5919
    %v5921 = vpop.f32.mrb[0].mxu0
    %v5922 = vpop.f32.mrb[0].mxu0
    %v5923 = vadd.f32 %v5634, %v5922
    %v5924 = vpop.f32.mrb[0].mxu0
    %5925 = vmatprep.mubr.bf16.mxu0 %v5144
    %5926 = vmatmul.mubr.bf16.gmra.mrb[0].mxu0 %v5143
    %v5927 = vpop.f32.mrb[0].mxu0
    %v5928 = vadd.f32 %v5639, %v5927
    %v5929 = vpop.f32.mrb[0].mxu0
    %v5930 = vpop.f32.mrb[0].mxu0
    %v5931 = vadd.f32 %v5642, %v5930
    %v5932 = vpop.f32.mrb[0].mxu0
    %5933 = vmatprep.mubr.bf16.mxu0 %v5148
    %5934 = vmatmul.mubr.bf16.gmra.mrb[0].mxu0 %v5147
    %v5935 = vpop.f32.mrb[0].mxu0
    %v5936 = vadd.f32 %v5647, %v5935
    %v5937 = vpop.f32.mrb[0].mxu0
    %v5938 = vpop.f32.mrb[0].mxu0
    %v5939 = vadd.f32 %v5650, %v5938
    %v5940 = vpop.f32.mrb[0].mxu0
    %5941 = vmatprep.mubr.bf16.mxu0 %v5152
    %5942 = vmatmul.mubr.bf16.gmra.mrb[0].mxu0 %v5151
    %v5943 = vpop.f32.mrb[0].mxu0
    %v5944 = vadd.f32 %v5655, %v5943
    %v5945 = vpop.f32.mrb[0].mxu0
    %v5946 = vpop.f32.mrb[0].mxu0
    %v5947 = vadd.f32 %v5658, %v5946
    %v5948 = vpop.f32.mrb[0].mxu0
    %5949 = vmatprep.mubr.bf16.mxu0 %v5156
    %5950 = vmatmul.mubr.bf16.gmra.mrb[0].mxu0 %v5155
    %v5951 = vpop.f32.mrb[0].mxu0
    %v5952 = vadd.f32 %v5663, %v5951
    %v5953 = vpop.f32.mrb[0].mxu0
    %v5954 = vpop.f32.mrb[0].mxu0
    %v5955 = vadd.f32 %v5666, %v5954
    %v5956 = vpop.f32.mrb[0].mxu0
    %5957 = vmatprep.mubr.bf16.mxu0 %v5160
    %5958 = vmatmul.mubr.bf16.gmra.mrb[0].mxu0 %v5159
    %v5959 = vpop.f32.mrb[0].mxu0
    %v5960 = vadd.f32 %v5671, %v5959
    %v5961 = vpop.f32.mrb[0].mxu0
    %v5962 = vpop.f32.mrb[0].mxu0
    %v5963 = vadd.f32 %v5674, %v5962
    %v5964 = vpop.f32.mrb[0].mxu0
    %5965 = vmatprep.mubr.bf16.mxu0 %v5164
    %5966 = vmatmul.mubr.bf16.gmra.mrb[0].mxu0 %v5163
    %v5967 = vpop.f32.mrb[0].mxu0
    %v5968 = vadd.f32 %v5679, %v5967
    %v5969 = vpop.f32.mrb[0].mxu0
    %v5970 = vpop.f32.mrb[0].mxu0
    %v5971 = vadd.f32 %v5682, %v5970
    %v5972 = vpop.f32.mrb[0].mxu0
    %5973 = vmatprep.mubr.bf16.mxu0 %v5168
    %5974 = vmatmul.mubr.bf16.gmra.mrb[0].mxu0 %v5167
    %v5975 = vpop.f32.mrb[0].mxu0
    %v5976 = vadd.f32 %v5687, %v5975
    %v5977 = vpop.f32.mrb[0].mxu0
    %v5978 = vpop.f32.mrb[0].mxu0
    %v5979 = vadd.f32 %v5690, %v5978
    %v5980 = vpop.f32.mrb[0].mxu0
    %5981 = vmatprep.mubr.bf16.mxu0 %v5172
    %5982 = vmatmul.mubr.bf16.gmra.mrb[0].mxu0 %v5171
    %v5983 = vpop.f32.mrb[0].mxu0
    %v5984 = vadd.f32 %v5695, %v5983
    %v5985 = vpop.f32.mrb[0].mxu0
    %v5986 = vpop.f32.mrb[0].mxu0
    %v5987 = vadd.f32 %v5698, %v5986
    %v5988 = vpop.f32.mrb[0].mxu0
    %5989 = vmatprep.mubr.bf16.mxu0 %v5176
    %5990 = vmatmul.mubr.bf16.gmra.mrb[0].mxu0 %v5175
    %v5991 = vpop.f32.mrb[0].mxu0
    %v5992 = vadd.f32 %v5703, %v5991
    %v5993 = vpop.f32.mrb[0].mxu0
    %v5994 = vpop.f32.mrb[0].mxu0
    %v5995 = vadd.f32 %v5706, %v5994
    %v5996 = vpop.f32.mrb[0].mxu0
    %5997 = vmatprep.mubr.bf16.mxu0 %v5180
    %5998 = vmatmul.mubr.bf16.gmra.mrb[0].mxu0 %v5179
    %v5999 = vpop.f32.mrb[0].mxu0
    %v6000 = vadd.f32 %v5711, %v5999
    %v6001 = vpop.f32.mrb[0].mxu0
    %v6002 = vpop.f32.mrb[0].mxu0
    %v6003 = vadd.f32 %v5714, %v6002
    %v6004 = vpop.f32.mrb[0].mxu0
    %6005 = vmatprep.mubr.bf16.mxu0 %v5184
    %6006 = vmatmul.mubr.bf16.gmra.mrb[0].mxu0 %v5183
    %v6007 = vpop.f32.mrb[0].mxu0
    %v6008 = vadd.f32 %v5719, %v6007
    %v6009 = vpop.f32.mrb[0].mxu0
    %v6010 = vpop.f32.mrb[0].mxu0
    %v6011 = vadd.f32 %v5722, %v6010
    %v6012 = vpop.f32.mrb[0].mxu0
    %6013 = vmatprep.mubr.bf16.mxu0 %v5188
    %6014 = vmatmul.mubr.bf16.gmra.mrb[0].mxu0 %v5187
    %v6015 = vpop.f32.mrb[0].mxu0
    %v6016 = vadd.f32 %v5727, %v6015
    %v6017 = vpop.f32.mrb[0].mxu0
    %v6018 = vpop.f32.mrb[0].mxu0
    %v6019 = vadd.f32 %v5730, %v6018
    %v6020 = vpop.f32.mrb[0].mxu0
    %6021 = vmatprep.mubr.bf16.mxu0 %v5192
    %6022 = vmatmul.mubr.bf16.gmra.mrb[0].mxu0 %v5191
    %v6023 = vpop.f32.mrb[0].mxu0
    %v6024 = vadd.f32 %v5735, %v6023
    %v6025 = vpop.f32.mrb[0].mxu0
    %v6026 = vpop.f32.mrb[0].mxu0
    %v6027 = vadd.f32 %v5738, %v6026
    %v6028 = vpop.f32.mrb[0].mxu0
    %6029 = vmatprep.mubr.bf16.mxu0 %v5196
    %6030 = vmatmul.mubr.bf16.gmra.mrb[0].mxu0 %v5195
    %v6031 = vpop.f32.mrb[0].mxu0
    %v6032 = vadd.f32 %v5743, %v6031
    %v6033 = vpop.f32.mrb[0].mxu0
    %v6034 = vpop.f32.mrb[0].mxu0
    %v6035 = vadd.f32 %v5746, %v6034
    %v6036 = vpop.f32.mrb[0].mxu0
    %6037 = vdwg.mxu0
    %v6038 = vpack.c.bf16 %v5787, %v5784
    %v6039 = vpack.c.bf16 %v5795, %v5792
    %v6040 = vpack.c.bf16 %v5803, %v5800
    %v6041 = vpack.c.bf16 %v5811, %v5808
    %v6042 = vpack.c.bf16 %v5819, %v5816
    %v6043 = vpack.c.bf16 %v5827, %v5824
    %v6044 = vpack.c.bf16 %v5835, %v5832
    %v6045 = vpack.c.bf16 %v5843, %v5840
    %v6046 = vpack.c.bf16 %v5851, %v5848
    %v6047 = vpack.c.bf16 %v5859, %v5856
    %v6048 = vpack.c.bf16 %v5867, %v5864
    %v6049 = vpack.c.bf16 %v5875, %v5872
    %v6050 = vpack.c.bf16 %v5883, %v5880
    %v6051 = vpack.c.bf16 %v5891, %v5888
    %v6052 = vpack.c.bf16 %v5899, %v5896
    %v6053 = vpack.c.bf16 %v5907, %v5904
    %v6054 = vpack.c.bf16 %v5915, %v5912
    %v6055 = vpack.c.bf16 %v5923, %v5920
    %v6056 = vpack.c.bf16 %v5931, %v5928
    %v6057 = vpack.c.bf16 %v5939, %v5936
    %v6058 = vpack.c.bf16 %v5947, %v5944
    %v6059 = vpack.c.bf16 %v5955, %v5952
    %v6060 = vpack.c.bf16 %v5963, %v5960
    %v6061 = vpack.c.bf16 %v5971, %v5968
    %v6062 = vpack.c.bf16 %v5979, %v5976
    %v6063 = vpack.c.bf16 %v5987, %v5984
    %v6064 = vpack.c.bf16 %v5995, %v5992
    %v6065 = vpack.c.bf16 %v6003, %v6000
    %v6066 = vpack.c.bf16 %v6011, %v6008
    %v6067 = vpack.c.bf16 %v6019, %v6016
    %v6068 = vpack.c.bf16 %v6027, %v6024
    %v6069 = vpack.c.bf16 %v6035, %v6032
    %v6102 = vunpack.c.l.b16 %v6038
    %v6103 = vunpack.c.h.b16 %v6038
    %v6104 = vunpack.c.l.b16 %v6039
    %v6105 = vunpack.c.h.b16 %v6039
    %v6106 = vunpack.c.l.b16 %v6040
    %v6107 = vunpack.c.h.b16 %v6040
    %v6108 = vunpack.c.l.b16 %v6041
    %v6109 = vunpack.c.h.b16 %v6041
    %v6110 = vunpack.c.l.b16 %v6042
    %v6111 = vunpack.c.h.b16 %v6042
    %v6112 = vunpack.c.l.b16 %v6043
    %v6113 = vunpack.c.h.b16 %v6043
    %v6114 = vunpack.c.l.b16 %v6044
    %v6115 = vunpack.c.h.b16 %v6044
    %v6116 = vunpack.c.l.b16 %v6045
    %v6117 = vunpack.c.h.b16 %v6045
    %v6118 = vunpack.c.l.b16 %v6046
    %v6119 = vunpack.c.h.b16 %v6046
    %v6120 = vunpack.c.l.b16 %v6047
    %v6121 = vunpack.c.h.b16 %v6047
    %v6122 = vunpack.c.l.b16 %v6048
    %v6123 = vunpack.c.h.b16 %v6048
    %v6124 = vunpack.c.l.b16 %v6049
    %v6125 = vunpack.c.h.b16 %v6049
    %v6126 = vunpack.c.l.b16 %v6050
    %v6127 = vunpack.c.h.b16 %v6050
    %v6128 = vunpack.c.l.b16 %v6051
    %v6129 = vunpack.c.h.b16 %v6051
    %v6130 = vunpack.c.l.b16 %v6052
    %v6131 = vunpack.c.h.b16 %v6052
    %v6132 = vunpack.c.l.b16 %v6053
    %v6133 = vunpack.c.h.b16 %v6053
    %v6134 = vunpack.c.l.b16 %v6054
    %v6135 = vunpack.c.h.b16 %v6054
    %v6136 = vunpack.c.l.b16 %v6055
    %v6137 = vunpack.c.h.b16 %v6055
    %v6138 = vunpack.c.l.b16 %v6056
    %v6139 = vunpack.c.h.b16 %v6056
    %v6140 = vunpack.c.l.b16 %v6057
    %v6141 = vunpack.c.h.b16 %v6057
    %v6142 = vunpack.c.l.b16 %v6058
    %v6143 = vunpack.c.h.b16 %v6058
    %v6144 = vunpack.c.l.b16 %v6059
    %v6145 = vunpack.c.h.b16 %v6059
    %v6146 = vunpack.c.l.b16 %v6060
    %v6147 = vunpack.c.h.b16 %v6060
    %v6148 = vunpack.c.l.b16 %v6061
    %v6149 = vunpack.c.h.b16 %v6061
    %v6150 = vunpack.c.l.b16 %v6062
    %v6151 = vunpack.c.h.b16 %v6062
    %v6152 = vunpack.c.l.b16 %v6063
    %v6153 = vunpack.c.h.b16 %v6063
    %v6154 = vunpack.c.l.b16 %v6064
    %v6155 = vunpack.c.h.b16 %v6064
    %v6156 = vunpack.c.l.b16 %v6065
    %v6157 = vunpack.c.h.b16 %v6065
    %v6158 = vunpack.c.l.b16 %v6066
    %v6159 = vunpack.c.h.b16 %v6066
    %v6160 = vunpack.c.l.b16 %v6067
    %v6161 = vunpack.c.h.b16 %v6067
    %v6162 = vunpack.c.l.b16 %v6068
    %v6163 = vunpack.c.h.b16 %v6068
    %v6164 = vunpack.c.l.b16 %v6069
    %v6165 = vunpack.c.h.b16 %v6069
    %v6166 = vpack.c.b16 %v6102, %v6102
    %v6167 = vpack.c.b16 %v6103, %v6103
    %v6168 = vpack.c.b16 %v6104, %v6104
    %v6169 = vpack.c.b16 %v6105, %v6105
    %v6170 = vpack.c.b16 %v6106, %v6106
    %v6171 = vpack.c.b16 %v6107, %v6107
    %v6172 = vpack.c.b16 %v6108, %v6108
    %v6173 = vpack.c.b16 %v6109, %v6109
    %v6174 = vpack.c.b16 %v6110, %v6110
    %v6175 = vpack.c.b16 %v6111, %v6111
    %v6176 = vpack.c.b16 %v6112, %v6112
    %v6177 = vpack.c.b16 %v6113, %v6113
    %v6178 = vpack.c.b16 %v6114, %v6114
    %v6179 = vpack.c.b16 %v6115, %v6115
    %v6180 = vpack.c.b16 %v6116, %v6116
    %v6181 = vpack.c.b16 %v6117, %v6117
    %v6182 = vpack.c.b16 %v6118, %v6118
    %v6183 = vpack.c.b16 %v6119, %v6119
    %v6184 = vpack.c.b16 %v6120, %v6120
    %v6185 = vpack.c.b16 %v6121, %v6121
    %v6186 = vpack.c.b16 %v6122, %v6122
    %v6187 = vpack.c.b16 %v6123, %v6123
    %v6188 = vpack.c.b16 %v6124, %v6124
    %v6189 = vpack.c.b16 %v6125, %v6125
    %v6190 = vpack.c.b16 %v6126, %v6126
    %v6191 = vpack.c.b16 %v6127, %v6127
    %v6192 = vpack.c.b16 %v6128, %v6128
    %v6193 = vpack.c.b16 %v6129, %v6129
    %v6194 = vpack.c.b16 %v6130, %v6130
    %v6195 = vpack.c.b16 %v6131, %v6131
    %v6196 = vpack.c.b16 %v6132, %v6132
    %v6197 = vpack.c.b16 %v6133, %v6133
    %v6198 = vpack.c.b16 %v6134, %v6134
    %v6199 = vpack.c.b16 %v6135, %v6135
    %v6200 = vpack.c.b16 %v6136, %v6136
    %v6201 = vpack.c.b16 %v6137, %v6137
    %v6202 = vpack.c.b16 %v6138, %v6138
    %v6203 = vpack.c.b16 %v6139, %v6139
    %v6204 = vpack.c.b16 %v6140, %v6140
    %v6205 = vpack.c.b16 %v6141, %v6141
    %v6206 = vpack.c.b16 %v6142, %v6142
    %v6207 = vpack.c.b16 %v6143, %v6143
    %v6208 = vpack.c.b16 %v6144, %v6144
    %v6209 = vpack.c.b16 %v6145, %v6145
    %v6210 = vpack.c.b16 %v6146, %v6146
    %v6211 = vpack.c.b16 %v6147, %v6147
    %v6212 = vpack.c.b16 %v6148, %v6148
    %v6213 = vpack.c.b16 %v6149, %v6149
    %v6214 = vpack.c.b16 %v6150, %v6150
    %v6215 = vpack.c.b16 %v6151, %v6151
    %v6216 = vpack.c.b16 %v6152, %v6152
    %v6217 = vpack.c.b16 %v6153, %v6153
    %v6218 = vpack.c.b16 %v6154, %v6154
    %v6219 = vpack.c.b16 %v6155, %v6155
    %v6220 = vpack.c.b16 %v6156, %v6156
    %v6221 = vpack.c.b16 %v6157, %v6157
    %v6222 = vpack.c.b16 %v6158, %v6158
    %v6223 = vpack.c.b16 %v6159, %v6159
    %v6224 = vpack.c.b16 %v6160, %v6160
    %v6225 = vpack.c.b16 %v6161, %v6161
    %v6226 = vpack.c.b16 %v6162, %v6162
    %v6227 = vpack.c.b16 %v6163, %v6163
    %v6228 = vpack.c.b16 %v6164, %v6164
    %v6229 = vpack.c.b16 %v6165, %v6165
    %6294 = vst [vmem:[#allocation2] sm:$0xf] %v6166
    %6295 = vst [vmem:[#allocation2 + $0x4] sm:$0xf] %v6167
    %6296 = vst [vmem:[#allocation2 + $0x8] sm:$0xf] %v6168
    %6297 = vst [vmem:[#allocation2 + $0xc] sm:$0xf] %v6169
    %6298 = vst [vmem:[#allocation2 + $0x10] sm:$0xf] %v6170
    %6299 = vst [vmem:[#allocation2 + $0x14] sm:$0xf] %v6171
    %6300 = vst [vmem:[#allocation2 + $0x18] sm:$0xf] %v6172
    %6301 = vst [vmem:[#allocation2 + $0x1c] sm:$0xf] %v6173
    %6302 = vst [vmem:[#allocation2 + $0x20] sm:$0xf] %v6174
    %6303 = vst [vmem:[#allocation2 + $0x24] sm:$0xf] %v6175
    %6304 = vst [vmem:[#allocation2 + $0x28] sm:$0xf] %v6176
    %6305 = vst [vmem:[#allocation2 + $0x2c] sm:$0xf] %v6177
    %6306 = vst [vmem:[#allocation2 + $0x30] sm:$0xf] %v6178
    %6307 = vst [vmem:[#allocation2 + $0x34] sm:$0xf] %v6179
    %6308 = vst [vmem:[#allocation2 + $0x38] sm:$0xf] %v6180
    %6309 = vst [vmem:[#allocation2 + $0x3c] sm:$0xf] %v6181
    %6310 = vst [vmem:[#allocation2 + $0x40] sm:$0xf] %v6182
    %6311 = vst [vmem:[#allocation2 + $0x44] sm:$0xf] %v6183
    %6312 = vst [vmem:[#allocation2 + $0x48] sm:$0xf] %v6184
    %6313 = vst [vmem:[#allocation2 + $0x4c] sm:$0xf] %v6185
    %6314 = vst [vmem:[#allocation2 + $0x50] sm:$0xf] %v6186
    %6315 = vst [vmem:[#allocation2 + $0x54] sm:$0xf] %v6187
    %6316 = vst [vmem:[#allocation2 + $0x58] sm:$0xf] %v6188
    %6317 = vst [vmem:[#allocation2 + $0x5c] sm:$0xf] %v6189
    %6318 = vst [vmem:[#allocation2 + $0x60] sm:$0xf] %v6190
    %6319 = vst [vmem:[#allocation2 + $0x64] sm:$0xf] %v6191
    %6320 = vst [vmem:[#allocation2 + $0x68] sm:$0xf] %v6192
    %6321 = vst [vmem:[#allocation2 + $0x6c] sm:$0xf] %v6193
    %6322 = vst [vmem:[#allocation2 + $0x70] sm:$0xf] %v6194
    %6323 = vst [vmem:[#allocation2 + $0x74] sm:$0xf] %v6195
    %6324 = vst [vmem:[#allocation2 + $0x78] sm:$0xf] %v6196
    %6325 = vst [vmem:[#allocation2 + $0x7c] sm:$0xf] %v6197
    %6326 = vst [vmem:[#allocation2 + $0x80] sm:$0xf] %v6198
    %6327 = vst [vmem:[#allocation2 + $0x84] sm:$0xf] %v6199
    %6328 = vst [vmem:[#allocation2 + $0x88] sm:$0xf] %v6200
    %6329 = vst [vmem:[#allocation2 + $0x8c] sm:$0xf] %v6201
    %6330 = vst [vmem:[#allocation2 + $0x90] sm:$0xf] %v6202
    %6331 = vst [vmem:[#allocation2 + $0x94] sm:$0xf] %v6203
    %6332 = vst [vmem:[#allocation2 + $0x98] sm:$0xf] %v6204
    %6333 = vst [vmem:[#allocation2 + $0x9c] sm:$0xf] %v6205
    %6334 = vst [vmem:[#allocation2 + $0xa0] sm:$0xf] %v6206
    %6335 = vst [vmem:[#allocation2 + $0xa4] sm:$0xf] %v6207
    %6336 = vst [vmem:[#allocation2 + $0xa8] sm:$0xf] %v6208
    %6337 = vst [vmem:[#allocation2 + $0xac] sm:$0xf] %v6209
    %6338 = vst [vmem:[#allocation2 + $0xb0] sm:$0xf] %v6210
    %6339 = vst [vmem:[#allocation2 + $0xb4] sm:$0xf] %v6211
    %6340 = vst [vmem:[#allocation2 + $0xb8] sm:$0xf] %v6212
    %6341 = vst [vmem:[#allocation2 + $0xbc] sm:$0xf] %v6213
    %6342 = vst [vmem:[#allocation2 + $0xc0] sm:$0xf] %v6214
    %6343 = vst [vmem:[#allocation2 + $0xc4] sm:$0xf] %v6215
    %6344 = vst [vmem:[#allocation2 + $0xc8] sm:$0xf] %v6216
    %6345 = vst [vmem:[#allocation2 + $0xcc] sm:$0xf] %v6217
    %6346 = vst [vmem:[#allocation2 + $0xd0] sm:$0xf] %v6218
    %6347 = vst [vmem:[#allocation2 + $0xd4] sm:$0xf] %v6219
    %6348 = vst [vmem:[#allocation2 + $0xd8] sm:$0xf] %v6220
    %6349 = vst [vmem:[#allocation2 + $0xdc] sm:$0xf] %v6221
    %6350 = vst [vmem:[#allocation2 + $0xe0] sm:$0xf] %v6222
    %6351 = vst [vmem:[#allocation2 + $0xe4] sm:$0xf] %v6223
    %6352 = vst [vmem:[#allocation2 + $0xe8] sm:$0xf] %v6224
    %6353 = vst [vmem:[#allocation2 + $0xec] sm:$0xf] %v6225
    %6354 = vst [vmem:[#allocation2 + $0xf0] sm:$0xf] %v6226
    %6355 = vst [vmem:[#allocation2 + $0xf4] sm:$0xf] %v6227
    %6356 = vst [vmem:[#allocation2 + $0xf8] sm:$0xf] %v6228
    %6357 = vst [vmem:[#allocation2 + $0xfc] sm:$0xf] %v6229
    // Predicated region
    $region22: #{tpu_custom_call.1} parent=1 // pred_check
      _
    $region23: #{tpu_custom_call.1} parent=1 // pred_check_branch
      %6359 = sbr.rel (0) target = $region25
    $region24: #{tpu_custom_call.1} parent=1 // pred_region
      %s6361 = ssub.s32 4096, 4096
      %6362 = vsyncadd [#allocation3], %s6361
      %s6363 = sshll.u32 [#allocation2], 4
      %s6364 = int_to_ptr.vmem [resolvable:$true] %s6363
      %6369 = dma.vmem_to_hbm [thread:$0]  %s6364, 4096, %s5, [#allocation3], 64, 64, 4
    $region25: #{tpu_custom_call.1} parent=1 // pred_fallthru
      _
    // Predicated region
    $region26: #{tpu_custom_call.1} parent=1 // pred_check
      _
    $region27: #{tpu_custom_call.1} parent=1 // pred_check_branch
      %6371 = sbr.rel (0) target = $region29
    $region28: #{tpu_custom_call.1} parent=1 // pred_region
      %6372 = dma.done [#allocation3], 4096
    $region29: #{tpu_custom_call.1} parent=1 // pred_fallthru
      _
    %6373 = vsyncpa [#allocation3], 1

</llo_original>
